<compile_context>
chip_gen: v7x
topology: tpu7x:2x2x1
jax: 0.10.0
libtpu: 0.0.40
codegen_flags: <defaults>
</compile_context>

<pallas_src>
import functools

import jax
import jax.numpy as jnp
from jax.experimental import pallas as pl
from jax.experimental.pallas import tpu as pltpu

BN_EPS = 1e-5
EXPANSION = 4
LANE = 128                      # channel dims padded to multiples of the lane width
TM_MAX = 512                    # row-tile size (multiple of 8)
VMEM_LIMIT = 48 * 1024 * 1024   # explicit scoped-VMEM cap (safe on v5e/v6e/v7x)


def _round_up(x, m):
    return (x + m - 1) // m * m


def _choose_tm(m):
    return min(TM_MAX, _round_up(m, 8))


def _choose_tn(c):
    if c % 256 == 0:
        return min(256, c)      # 256-wide output tiles for v6e/v7x MXU
    if c % 128 == 0:
        return min(128, c)      # lane-aligned tiles for v5e
    return c


def _choose_tk(k):
    if k <= 1024:
        return k                # keep K whole when small (no K streaming needed)
    if k % 256 == 0:
        return 256
    if k % 128 == 0:
        return 128
    return k


# ---------------------------------------------------------------------------
# Pass 1: tiled matmul (bf16 -> f32 acc) + per-tile BN partial statistics.
# Optionally fuses an affine (scale/shift) + ReLU on the LHS K-tiles, i.e. the
# previous stage's BatchNorm apply, so that stage's elementwise pass over HBM
# disappears entirely.
# ---------------------------------------------------------------------------
def _mm_stats_kernel(*refs, fuse_lhs, m_valid, tm):
    if fuse_lhs:
        x_ref, ls_ref, lt_ref, w_ref, y_ref, st_ref, acc_ref = refs
    else:
        x_ref, w_ref, y_ref, st_ref, acc_ref = refs

    k = pl.program_id(2)

    @pl.when(k == 0)
    def _init():
        acc_ref[...] = jnp.zeros_like(acc_ref)

    x = x_ref[...]
    if fuse_lhs:
        xf = x.astype(jnp.float32) * ls_ref[...] + lt_ref[...]
        xf = jnp.maximum(xf, 0.0)
        if m_valid is not None:
            # Zero rows past the true row count so this stage's BN statistics
            # (divided by the true count outside) remain exact even when the
            # affine shift would make zero-padded rows nonzero.
            rows = pl.program_id(0) * tm + jax.lax.broadcasted_iota(
                jnp.int32, xf.shape, 0)
            xf = jnp.where(rows < m_valid, xf, 0.0)
        x = xf.astype(x_ref.dtype)

    acc_ref[...] += jnp.dot(x, w_ref[...], preferred_element_type=jnp.float32)

    @pl.when(k == pl.num_programs(2) - 1)
    def _finalize():
        y = acc_ref[...]
        y_ref[...] = y.astype(y_ref.dtype)              # bf16 store (half HBM bytes)
        s = jnp.sum(y, axis=0, keepdims=True)           # per-column partial sum
        sq = jnp.sum(y * y, axis=0, keepdims=True)      # per-column partial sumsq
        pad = jnp.zeros((st_ref.shape[0] - 2, y.shape[1]), jnp.float32)
        st_ref[...] = jnp.concatenate([s, sq, pad], axis=0)


def matmul_with_stats(x2d, w2d, *, lhs_scale=None, lhs_shift=None,
                      lhs_valid_rows=None, out_dtype=jnp.bfloat16):
    """y = act(x*lhs_scale + lhs_shift) @ w  (bf16 operands, f32 accumulation),
    plus per-column sum / sum-of-squares of y for two-pass BatchNorm.

    Rows are zero-padded to a multiple of the row tile; padded rows contribute 0
    to both sums (masked when the fused LHS affine would make them nonzero), so
    dividing by the true row count outside stays exact.
    Returns (y_padded, col_sum, col_sumsq).
    """
    m, k = x2d.shape
    kw, cp = w2d.shape
    assert k == kw
    tm = _choose_tm(m)
    tn = _choose_tn(cp)
    tk = _choose_tk(k)
    mp = _round_up(m, tm)

    x = x2d.astype(jnp.bfloat16)
    if mp != m:
        x = jnp.pad(x, ((0, mp - m), (0, 0)))
    w = w2d.astype(jnp.bfloat16)

    mt, nt, kt = mp // tm, cp // tn, k // tk

    fuse_lhs = lhs_scale is not None
    m_valid = None
    if fuse_lhs and lhs_valid_rows is not None and mp > int(lhs_valid_rows):
        m_valid = int(lhs_valid_rows)

    x_spec = pl.BlockSpec((tm, tk), lambda i, j, kk: (i, kk))
    w_spec = pl.BlockSpec((tk, tn), lambda i, j, kk: (kk, j))
    row_k_spec = pl.BlockSpec((1, tk), lambda i, j, kk: (0, kk))

    operands = [x]
    in_specs = [x_spec]
    if fuse_lhs:
        operands += [lhs_scale, lhs_shift]
        in_specs += [row_k_spec, row_k_spec]
    operands.append(w)
    in_specs.append(w_spec)

    kernel = functools.partial(_mm_stats_kernel, fuse_lhs=fuse_lhs,
                               m_valid=m_valid, tm=tm)

    y, st = pl.pallas_call(
        kernel,
        out_shape=(jax.ShapeDtypeStruct((mp, cp), out_dtype),
                   jax.ShapeDtypeStruct((mt * 8, cp), jnp.float32)),
        grid_spec=pltpu.PrefetchScalarGridSpec(
            num_scalar_prefetch=0,
            grid=(mt, nt, kt),
            in_specs=in_specs,
            out_specs=[pl.BlockSpec((tm, tn), lambda i, j, kk: (i, j)),
                       pl.BlockSpec((8, tn), lambda i, j, kk: (i, j))],
            scratch_shapes=[pltpu.VMEM((tm, tn), jnp.float32)]),
        compiler_params=pltpu.CompilerParams(
            dimension_semantics=("parallel", "parallel", "arbitrary"),
            vmem_limit_bytes=VMEM_LIMIT),
    )(*operands)

    st = st.reshape(mt, 8, cp)
    return y, jnp.sum(st[:, 0, :], axis=0), jnp.sum(st[:, 1, :], axis=0)


def _fold_bn(col_sum, col_sumsq, count, gamma, beta):
    """Fold batch statistics into y*scale + shift (biased var, PyTorch training BN)."""
    cnt = jnp.float32(count)
    mean = col_sum / cnt
    var = jnp.maximum(col_sumsq / cnt - mean * mean, 0.0)
    scale = gamma * jax.lax.rsqrt(var + BN_EPS)
    shift = beta - mean * scale
    return scale.reshape(1, -1), shift.reshape(1, -1)


# ---------------------------------------------------------------------------
# Pass 2: tiled BN apply [+ residual (optionally with its own folded BN)] [+ ReLU]
# ---------------------------------------------------------------------------
def _bn_apply_kernel(*refs, relu, res_mode):
    if res_mode == "affine":
        y_ref, s_ref, t_ref, r_ref, rs_ref, rt_ref, o_ref = refs
    elif res_mode == "plain":
        y_ref, s_ref, t_ref, r_ref, o_ref = refs
    else:
        y_ref, s_ref, t_ref, o_ref = refs

    out = y_ref[...].astype(jnp.float32) * s_ref[...] + t_ref[...]
    if res_mode == "affine":      # downsample branch: its BN folded in here
        out = out + (r_ref[...].astype(jnp.float32) * rs_ref[...] + rt_ref[...])
    elif res_mode == "plain":     # identity shortcut
        out = out + r_ref[...].astype(jnp.float32)
    if relu:
        out = jnp.maximum(out, 0.0)
    o_ref[...] = out.astype(o_ref.dtype)


def bn_apply(y, scale, shift, *, residual=None, res_scale=None, res_shift=None,
             relu=True, out_dtype=jnp.bfloat16):
    mp, cp = y.shape
    tm = min(TM_MAX, mp)
    tn = _choose_tn(cp)
    mt, nt = mp // tm, cp // tn

    tile_spec = pl.BlockSpec((tm, tn), lambda i, j: (i, j))
    row_spec = pl.BlockSpec((1, tn), lambda i, j: (0, j))

    if residual is None:
        res_mode, extra, extra_specs = "none", [], []
    elif res_scale is None:
        res_mode, extra, extra_specs = "plain", [residual], [tile_spec]
    else:
        res_mode = "affine"
        extra = [residual, res_scale, res_shift]
        extra_specs = [tile_spec, row_spec, row_spec]

    kernel = functools.partial(_bn_apply_kernel, relu=relu, res_mode=res_mode)
    return pl.pallas_call(
        kernel,
        out_shape=jax.ShapeDtypeStruct((mp, cp), out_dtype),
        grid_spec=pltpu.PrefetchScalarGridSpec(
            num_scalar_prefetch=0,
            grid=(mt, nt),
            in_specs=[tile_spec, row_spec, row_spec] + extra_specs,
            out_specs=tile_spec),
        compiler_params=pltpu.CompilerParams(
            dimension_semantics=("parallel", "parallel"),
            vmem_limit_bytes=VMEM_LIMIT),
    )(y, scale, shift, *extra)


# ---------------------------------------------------------------------------
# Glue: im2col for the 3x3 conv (padding=1, given stride)
# ---------------------------------------------------------------------------
def im2col_3x3(x_nhwc, stride):
    # TODO(synk): replace HBM im2col with in-kernel accumulation over the 9 taps
    # (grid axis over (kh, kw) with shifted-window index_maps) to cut stage-2 HBM
    # read traffic ~9x.  For now the cols tensor is bf16 and K is streamed in the
    # matmul kernel (tk = 128/256), so it is never block-loaded whole.
    n, h, w, c = x_nhwc.shape
    xp = jnp.pad(x_nhwc, ((0, 0), (1, 1), (1, 1), (0, 0)))
    ho = (h + 2 - 3) // stride + 1
    wo = (w + 2 - 3) // stride + 1
    cols = []
    for dh in range(3):
        for dw in range(3):
            cols.append(xp[:, dh:dh + stride * (ho - 1) + 1:stride,
                              dw:dw + stride * (wo - 1) + 1:stride, :])
    cols = jnp.concatenate(cols, axis=-1)        # (N, Ho, Wo, 9*C), (kh, kw, c) order
    return cols.reshape(n * ho * wo, 9 * c), ho, wo


# ---------------------------------------------------------------------------
# Parameters (PyTorch OIHW layout) + one-time matmul-layout / lane-pad prep
# ---------------------------------------------------------------------------
def init_bottleneck_params(key, in_planes, planes, stride):
    out_planes = EXPANSION * planes
    k1, k2, k3, k4 = jax.random.split(key, 4)
    p = {
        "w1_oihw": 0.1 * jax.random.normal(k1, (planes, in_planes, 1, 1), jnp.float32),
        "w2_oihw": 0.1 * jax.random.normal(k2, (planes, planes, 3, 3), jnp.float32),
        "w3_oihw": 0.1 * jax.random.normal(k3, (out_planes, planes, 1, 1), jnp.float32),
        "g1": jnp.ones((planes,), jnp.float32), "b1": jnp.zeros((planes,), jnp.float32),
        "g2": jnp.ones((planes,), jnp.float32), "b2": jnp.zeros((planes,), jnp.float32),
        "g3": jnp.ones((out_planes,), jnp.float32), "b3": jnp.zeros((out_planes,), jnp.float32),
    }
    if stride != 1 or in_planes != out_planes:
        p["ws_oihw"] = 0.1 * jax.random.normal(k4, (out_planes, in_planes, 1, 1), jnp.float32)
        p["gs"] = jnp.ones((out_planes,), jnp.float32)
        p["bs"] = jnp.zeros((out_planes,), jnp.float32)
    return p


def prepare_params(params, in_planes, planes):
    """One-time weight transpose to matmul layout + lane padding (outside the hot path)."""
    out_planes = EXPANSION * planes
    cinp = _round_up(in_planes, LANE)
    cp1 = _round_up(planes, LANE)
    cp3 = _round_up(out_planes, LANE)

    def pad_vec(v, n):
        return jnp.pad(v.astype(jnp.float32), (0, n - v.shape[0]))

    w1 = jnp.transpose(params["w1_oihw"][:, :, 0, 0], (1, 0))            # (Cin, planes)
    w1 = jnp.pad(w1, ((0, cinp - in_planes), (0, cp1 - planes)))
    w2 = jnp.transpose(params["w2_oihw"], (2, 3, 1, 0))                  # (kh, kw, Cin, Cout)
    w2 = jnp.pad(w2, ((0, 0), (0, 0), (0, cp1 - planes), (0, cp1 - planes)))
    w2 = w2.reshape(9 * cp1, cp1)
    w3 = jnp.transpose(params["w3_oihw"][:, :, 0, 0], (1, 0))
    w3 = jnp.pad(w3, ((0, cp1 - planes), (0, cp3 - out_planes)))

    prep = {
        "w1": w1.astype(jnp.bfloat16),
        "w2": w2.astype(jnp.bfloat16),
        "w3": w3.astype(jnp.bfloat16),
        "g1": pad_vec(params["g1"], cp1), "b1": pad_vec(params["b1"], cp1),
        "g2": pad_vec(params["g2"], cp1), "b2": pad_vec(params["b2"], cp1),
        "g3": pad_vec(params["g3"], cp3), "b3": pad_vec(params["b3"], cp3),
    }
    if "ws_oihw" in params:
        ws = jnp.transpose(params["ws_oihw"][:, :, 0, 0], (1, 0))
        ws = jnp.pad(ws, ((0, cinp - in_planes), (0, cp3 - out_planes)))
        prep["ws"] = ws.astype(jnp.bfloat16)
        prep["gs"] = pad_vec(params["gs"], cp3)
        prep["bs"] = pad_vec(params["bs"], cp3)
    return prep


# ---------------------------------------------------------------------------
# Bottleneck forward (Pallas)
# ---------------------------------------------------------------------------
@functools.partial(jax.jit, static_argnames=("in_planes", "planes", "stride"))
def bottleneck_forward(x_nchw, prep, *, in_planes, planes, stride):
    out_planes = EXPANSION * planes
    cinp = _round_up(in_planes, LANE)
    cp3 = _round_up(out_planes, LANE)

    x = jnp.transpose(x_nchw, (0, 2, 3, 1))                  # NCHW -> NHWC
    n, h, w, cin = x.shape
    x = jnp.pad(x, ((0, 0), (0, 0), (0, 0), (0, cinp - cin)))
    m1 = n * h * w

    # stage 1: 1x1 conv -> BN -> ReLU
    y1, s1, q1 = matmul_with_stats(x.reshape(m1, cinp), prep["w1"])
    sc1, sh1 = _fold_bn(s1, q1, m1, prep["g1"], prep["b1"])
    out1 = bn_apply(y1, sc1, sh1, relu=True, out_dtype=jnp.bfloat16)
    out1 = out1[:m1].reshape(n, h, w, -1)

    # stage 2: 3x3 conv (stride, pad=1); its BN stats are folded and the BN+ReLU
    # apply is fused into stage-3's matmul LHS (no out2 round trip through HBM).
    cols, ho, wo = im2col_3x3(out1, stride)
    m2 = n * ho * wo
    y2, s2, q2 = matmul_with_stats(cols, prep["w2"])
    sc2, sh2 = _fold_bn(s2, q2, m2, prep["g2"], prep["b2"])

    # stage 3: (BN2+ReLU fused on LHS) 1x1 conv -> BN ; shortcut ; add ; ReLU
    y3, s3, q3 = matmul_with_stats(y2, prep["w3"], lhs_scale=sc2, lhs_shift=sh2,
                                   lhs_valid_rows=m2)
    sc3, sh3 = _fold_bn(s3, q3, m2, prep["g3"], prep["b3"])

    if "ws" in prep:
        # downsample branch: strided 1x1 conv + BN, folded into the stage-3 apply kernel
        xs = x[:, ::stride, ::stride, :].reshape(m2, cinp)
        ys, ss, qs = matmul_with_stats(xs, prep["ws"])
        scs, shs = _fold_bn(ss, qs, m2, prep["gs"], prep["bs"])
        out3 = bn_apply(y3, sc3, sh3, residual=ys, res_scale=scs, res_shift=shs,
                        relu=True, out_dtype=jnp.float32)
    else:
        # identity shortcut (stride == 1, in_planes == 4*planes  =>  cinp == cp3)
        res = x.reshape(m2, cinp).astype(jnp.bfloat16)
        res = jnp.pad(res, ((0, y3.shape[0] - m2), (0, cp3 - cinp)))
        out3 = bn_apply(y3, sc3, sh3, residual=res, relu=True, out_dtype=jnp.float32)

    out3 = out3[:m2, :out_planes].reshape(n, ho, wo, out_planes)
    return jnp.transpose(out3, (0, 3, 1, 2))                 # NHWC -> NCHW


# ---------------------------------------------------------------------------
# Pure-JAX f32 reference (exact module semantics) for correctness check
# ---------------------------------------------------------------------------
def _bn_train_ref(x_nchw, gamma, beta):
    mean = jnp.mean(x_nchw, axis=(0, 2, 3), keepdims=True)
    var = jnp.mean((x_nchw - mean) ** 2, axis=(0, 2, 3), keepdims=True)
    xhat = (x_nchw - mean) * jax.lax.rsqrt(var + BN_EPS)
    return xhat * gamma.reshape(1, -1, 1, 1) + beta.reshape(1, -1, 1, 1)


def _conv_ref(x, w_oihw, stride, padding):
    return jax.lax.conv_general_dilated(
        x, w_oihw, (stride, stride), padding,
        dimension_numbers=("NCHW", "OIHW", "NCHW"))


def bottleneck_ref(x, p, stride):
    out = jax.nn.relu(_bn_train_ref(_conv_ref(x, p["w1_oihw"], 1, "VALID"), p["g1"], p["b1"]))
    out = jax.nn.relu(_bn_train_ref(_conv_ref(out, p["w2_oihw"], stride, [(1, 1), (1, 1)]),
                                    p["g2"], p["b2"]))
    out = _bn_train_ref(_conv_ref(out, p["w3_oihw"], 1, "VALID"), p["g3"], p["b3"])
    if "ws_oihw" in p:
        sc = _bn_train_ref(_conv_ref(x, p["ws_oihw"], stride, "VALID"), p["gs"], p["bs"])
    else:
        sc = x
    return jax.nn.relu(out + sc)


# ---------------------------------------------------------------------------
if __name__ == "__main__":
    key = jax.random.PRNGKey(0)
    kx, kp, kx2, kp2 = jax.random.split(key, 4)

    # config 1: downsample shortcut (stride=2, channel expansion)
    in_planes, planes, stride = 4, 4, 2
    x = jax.random.normal(kx, (2, in_planes, 16, 16), jnp.float32)   # NCHW like PyTorch
    params = init_bottleneck_params(kp, in_planes, planes, stride)
    prep = prepare_params(params, in_planes, planes)

    out = jax.block_until_ready(
        bottleneck_forward(x, prep, in_planes=in_planes, planes=planes, stride=stride))
    ref = jax.block_until_ready(bottleneck_ref(x, params, stride))
    assert out.shape == (2, EXPANSION * planes, 8, 8), out.shape
    err = float(jnp.max(jnp.abs(out - ref)))
    # bf16 MXU operands + bf16 intermediates vs an f32 reference -> loose tolerance
    assert jnp.allclose(out, ref, atol=6e-2, rtol=6e-2), err

    # config 2: identity shortcut (stride=1, in_planes == 4*planes)
    in_planes2, planes2, stride2 = 16, 4, 1
    x2 = jax.random.normal(kx2, (2, in_planes2, 16, 16), jnp.float32)
    params2 = init_bottleneck_params(kp2, in_planes2, planes2, stride2)
    prep2 = prepare_params(params2, in_planes2, planes2)

    out2 = jax.block_until_ready(
        bottleneck_forward(x2, prep2, in_planes=in_planes2, planes=planes2, stride=stride2))
    ref2 = jax.block_until_ready(bottleneck_ref(x2, params2, stride2))
    assert out2.shape == (2, EXPANSION * planes2, 16, 16), out2.shape
    err2 = float(jnp.max(jnp.abs(out2 - ref2)))
    assert jnp.allclose(out2, ref2, atol=6e-2, rtol=6e-2), err2

    print("KERNEL_OK")
</pallas_src>

<mosaic_0001>
module attributes {stable_mosaic.version = 11 : i64} {
  func.func @_mm_stats_kernel(%arg0: i32, %arg1: i32, %arg2: i32, %arg3: memref<512x128xbf16, #tpu.memory_space<vmem>>, %arg4: memref<128x128xbf16, #tpu.memory_space<vmem>>, %arg5: memref<512x128xbf16, #tpu.memory_space<vmem>>, %arg6: memref<8x128xf32, #tpu.memory_space<vmem>>, %arg7: memref<512x128xf32, #tpu.memory_space<vmem>>) attributes {dimension_semantics = [#tpu.dimension_semantics<parallel>, #tpu.dimension_semantics<parallel>, #tpu.dimension_semantics<arbitrary>], iteration_bounds = array<i64: 1, 1, 1>, scalar_prefetch = 0 : i64, scratch_operands = 1 : i64, tpu.core_type = #tpu.core_type<tc>, window_params = [{transform_indices = @transform_0, window_bounds = array<i64: 512, 128>}, {transform_indices = @transform_1, window_bounds = array<i64: 128, 128>}, {transform_indices = @transform_2, window_bounds = array<i64: 512, 128>}, {transform_indices = @transform_3, window_bounds = array<i64: 8, 128>}]} {
    %c0_i32 = arith.constant 0 : i32
    %0 = arith.cmpi eq, %arg2, %c0_i32 : i32
    %1 = arith.extui %0 : i1 to i32
    %c0_i32_0 = arith.constant 0 : i32
    %2 = arith.cmpi ne, %1, %c0_i32_0 : i32
    scf.if %2 {
      %cst_10 = arith.constant 0.000000e+00 : f32
      %12 = vector.broadcast %cst_10 : f32 to vector<512x128xf32>
      %c0_11 = arith.constant 0 : index
      %c0_12 = arith.constant 0 : index
      %13 = vector.load %arg7[%c0_11, %c0_12] : memref<512x128xf32, #tpu.memory_space<vmem>>, vector<512x128xf32>
      tpu.vector_store %arg7[%c0_11, %c0_12], %12 {strides = array<i32>} : memref<512x128xf32, #tpu.memory_space<vmem>>, vector<512x128xf32>,
    } else {
    }
    %c0 = arith.constant 0 : index
    %c0_1 = arith.constant 0 : index
    %3 = vector.load %arg3[%c0, %c0_1] : memref<512x128xbf16, #tpu.memory_space<vmem>>, vector<512x128xbf16>
    %c0_2 = arith.constant 0 : index
    %c0_3 = arith.constant 0 : index
    %4 = vector.load %arg7[%c0_2, %c0_3] : memref<512x128xf32, #tpu.memory_space<vmem>>, vector<512x128xf32>
    %c0_4 = arith.constant 0 : index
    %c0_5 = arith.constant 0 : index
    %5 = vector.load %arg4[%c0_4, %c0_5] : memref<128x128xbf16, #tpu.memory_space<vmem>>, vector<128x128xbf16>
    %cst = arith.constant dense<0.000000e+00> : vector<512x128xf32>
    %6 = tpu.matmul %3, %5, %cst {dimension_numbers = #tpu.dot_dimension_numbers<[1], [0], [0], [1], [0, 0, 1, 1], [], []>} : vector<512x128xbf16>, vector<128x128xbf16>, vector<512x128xf32> -> vector<512x128xf32>
    %7 = arith.addf %4, %6 : vector<512x128xf32>
    %c0_6 = arith.constant 0 : index
    %c0_7 = arith.constant 0 : index
    %8 = vector.load %arg7[%c0_6, %c0_7] : memref<512x128xf32, #tpu.memory_space<vmem>>, vector<512x128xf32>
    tpu.vector_store %arg7[%c0_6, %c0_7], %7 {strides = array<i32>} : memref<512x128xf32, #tpu.memory_space<vmem>>, vector<512x128xf32>,
    %c0_i32_8 = arith.constant 0 : i32
    %9 = arith.cmpi eq, %arg2, %c0_i32_8 : i32
    %10 = arith.extui %9 : i1 to i32
    %c0_i32_9 = arith.constant 0 : i32
    %11 = arith.cmpi ne, %10, %c0_i32_9 : i32
    scf.if %11 {
      %c0_10 = arith.constant 0 : index
      %c0_11 = arith.constant 0 : index
      %12 = vector.load %arg7[%c0_10, %c0_11] : memref<512x128xf32, #tpu.memory_space<vmem>>, vector<512x128xf32>
      %13 = arith.truncf %12 : vector<512x128xf32> to vector<512x128xbf16>
      %c0_12 = arith.constant 0 : index
      %c0_13 = arith.constant 0 : index
      %14 = vector.load %arg5[%c0_12, %c0_13] : memref<512x128xbf16, #tpu.memory_space<vmem>>, vector<512x128xbf16>
      tpu.vector_store %arg5[%c0_12, %c0_13], %13 {strides = array<i32>} : memref<512x128xbf16, #tpu.memory_space<vmem>>, vector<512x128xbf16>,
      %cst_14 = arith.constant dense<0.000000e+00> : vector<128xf32>
      %15 = vector.multi_reduction <add>, %12, %cst_14 [0] : vector<512x128xf32> to vector<128xf32>
      %16 = vector.shape_cast %15 : vector<128xf32> to vector<1x128xf32>
      %17 = arith.mulf %12, %12 : vector<512x128xf32>
      %cst_15 = arith.constant dense<0.000000e+00> : vector<128xf32>
      %18 = vector.multi_reduction <add>, %17, %cst_15 [0] : vector<512x128xf32> to vector<128xf32>
      %19 = vector.shape_cast %18 : vector<128xf32> to vector<1x128xf32>
      %cst_16 = arith.constant 0.000000e+00 : f32
      %20 = vector.broadcast %cst_16 : f32 to vector<6x128xf32>
      %21 = tpu.concatenate %16, %19, %20 in 0 : vector<1x128xf32>, vector<1x128xf32>, vector<6x128xf32> -> vector<8x128xf32>
      %c0_17 = arith.constant 0 : index
      %c0_18 = arith.constant 0 : index
      %22 = vector.load %arg6[%c0_17, %c0_18] : memref<8x128xf32, #tpu.memory_space<vmem>>, vector<8x128xf32>
      tpu.vector_store %arg6[%c0_17, %c0_18], %21 {strides = array<i32>} : memref<8x128xf32, #tpu.memory_space<vmem>>, vector<8x128xf32>,
    } else {
    }
    return
  }
  func.func @transform_0(%arg0: i32, %arg1: i32, %arg2: i32) -> (i32, i32) {
    %c0_i32 = arith.constant 0 : i32
    return %arg0, %arg2 : i32, i32
  }
  func.func @transform_1(%arg0: i32, %arg1: i32, %arg2: i32) -> (i32, i32) {
    %c0_i32 = arith.constant 0 : i32
    return %arg2, %arg1 : i32, i32
  }
  func.func @transform_2(%arg0: i32, %arg1: i32, %arg2: i32) -> (i32, i32) {
    %c0_i32 = arith.constant 0 : i32
    return %arg0, %arg1 : i32, i32
  }
  func.func @transform_3(%arg0: i32, %arg1: i32, %arg2: i32) -> (i32, i32) {
    %c0_i32 = arith.constant 0 : i32
    return %arg0, %arg1 : i32, i32
  }
}

module attributes {stable_mosaic.version = 11 : i64} {
  func.func @_bn_apply_kernel(%arg0: i32, %arg1: i32, %arg2: memref<512x128xbf16, #tpu.memory_space<vmem>>, %arg3: memref<1x128xf32, #tpu.memory_space<vmem>>, %arg4: memref<1x128xf32, #tpu.memory_space<vmem>>, %arg5: memref<512x128xbf16, #tpu.memory_space<vmem>>) attributes {dimension_semantics = [#tpu.dimension_semantics<parallel>, #tpu.dimension_semantics<parallel>], iteration_bounds = array<i64: 1, 1>, scalar_prefetch = 0 : i64, scratch_operands = 0 : i64, tpu.core_type = #tpu.core_type<tc>, window_params = [{transform_indices = @transform_0, window_bounds = array<i64: 512, 128>}, {transform_indices = @transform_1, window_bounds = array<i64: 1, 128>}, {transform_indices = @transform_2, window_bounds = array<i64: 1, 128>}, {transform_indices = @transform_3, window_bounds = array<i64: 512, 128>}]} {
    %c0 = arith.constant 0 : index
    %c0_0 = arith.constant 0 : index
    %0 = vector.load %arg2[%c0, %c0_0] : memref<512x128xbf16, #tpu.memory_space<vmem>>, vector<512x128xbf16>
    %1 = arith.extf %0 : vector<512x128xbf16> to vector<512x128xf32>
    %c0_1 = arith.constant 0 : index
    %c0_2 = arith.constant 0 : index
    %2 = vector.load %arg3[%c0_1, %c0_2] : memref<1x128xf32, #tpu.memory_space<vmem>>, vector<1x128xf32>
    %3 = vector.broadcast %2 : vector<1x128xf32> to vector<512x128xf32>
    %4 = arith.mulf %1, %3 : vector<512x128xf32>
    %c0_3 = arith.constant 0 : index
    %c0_4 = arith.constant 0 : index
    %5 = vector.load %arg4[%c0_3, %c0_4] : memref<1x128xf32, #tpu.memory_space<vmem>>, vector<1x128xf32>
    %6 = vector.broadcast %5 : vector<1x128xf32> to vector<512x128xf32>
    %7 = arith.addf %4, %6 : vector<512x128xf32>
    %cst = arith.constant 0.000000e+00 : f32
    %8 = vector.broadcast %cst : f32 to vector<512x128xf32>
    %9 = arith.maximumf %7, %8 : vector<512x128xf32>
    %10 = arith.truncf %9 : vector<512x128xf32> to vector<512x128xbf16>
    %c0_5 = arith.constant 0 : index
    %c0_6 = arith.constant 0 : index
    %11 = vector.load %arg5[%c0_5, %c0_6] : memref<512x128xbf16, #tpu.memory_space<vmem>>, vector<512x128xbf16>
    tpu.vector_store %arg5[%c0_5, %c0_6], %10 {strides = array<i32>} : memref<512x128xbf16, #tpu.memory_space<vmem>>, vector<512x128xbf16>,
    return
  }
  func.func @transform_0(%arg0: i32, %arg1: i32) -> (i32, i32) {
    %c0_i32 = arith.constant 0 : i32
    return %arg0, %arg1 : i32, i32
  }
  func.func @transform_1(%arg0: i32, %arg1: i32) -> (i32, i32) {
    %c0_i32 = arith.constant 0 : i32
    %c0_i32_0 = arith.constant 0 : i32
    return %c0_i32, %arg1 : i32, i32
  }
  func.func @transform_2(%arg0: i32, %arg1: i32) -> (i32, i32) {
    %c0_i32 = arith.constant 0 : i32
    %c0_i32_0 = arith.constant 0 : i32
    return %c0_i32, %arg1 : i32, i32
  }
  func.func @transform_3(%arg0: i32, %arg1: i32) -> (i32, i32) {
    %c0_i32 = arith.constant 0 : i32
    return %arg0, %arg1 : i32, i32
  }
}

module attributes {stable_mosaic.version = 11 : i64} {
  func.func @_mm_stats_kernel(%arg0: i32, %arg1: i32, %arg2: i32, %arg3: memref<128x128xbf16, #tpu.memory_space<vmem>>, %arg4: memref<128x128xbf16, #tpu.memory_space<vmem>>, %arg5: memref<128x128xbf16, #tpu.memory_space<vmem>>, %arg6: memref<8x128xf32, #tpu.memory_space<vmem>>, %arg7: memref<128x128xf32, #tpu.memory_space<vmem>>) attributes {dimension_semantics = [#tpu.dimension_semantics<parallel>, #tpu.dimension_semantics<parallel>, #tpu.dimension_semantics<arbitrary>], iteration_bounds = array<i64: 1, 1, 1>, scalar_prefetch = 0 : i64, scratch_operands = 1 : i64, tpu.core_type = #tpu.core_type<tc>, window_params = [{transform_indices = @transform_0, window_bounds = array<i64: 128, 128>}, {transform_indices = @transform_1, window_bounds = array<i64: 128, 128>}, {transform_indices = @transform_2, window_bounds = array<i64: 128, 128>}, {transform_indices = @transform_3, window_bounds = array<i64: 8, 128>}]} {
    %c0_i32 = arith.constant 0 : i32
    %0 = arith.cmpi eq, %arg2, %c0_i32 : i32
    %1 = arith.extui %0 : i1 to i32
    %c0_i32_0 = arith.constant 0 : i32
    %2 = arith.cmpi ne, %1, %c0_i32_0 : i32
    scf.if %2 {
      %cst_10 = arith.constant 0.000000e+00 : f32
      %12 = vector.broadcast %cst_10 : f32 to vector<128x128xf32>
      %c0_11 = arith.constant 0 : index
      %c0_12 = arith.constant 0 : index
      %13 = vector.load %arg7[%c0_11, %c0_12] : memref<128x128xf32, #tpu.memory_space<vmem>>, vector<128x128xf32>
      tpu.vector_store %arg7[%c0_11, %c0_12], %12 {strides = array<i32>} : memref<128x128xf32, #tpu.memory_space<vmem>>, vector<128x128xf32>,
    } else {
    }
    %c0 = arith.constant 0 : index
    %c0_1 = arith.constant 0 : index
    %3 = vector.load %arg3[%c0, %c0_1] : memref<128x128xbf16, #tpu.memory_space<vmem>>, vector<128x128xbf16>
    %c0_2 = arith.constant 0 : index
    %c0_3 = arith.constant 0 : index
    %4 = vector.load %arg7[%c0_2, %c0_3] : memref<128x128xf32, #tpu.memory_space<vmem>>, vector<128x128xf32>
    %c0_4 = arith.constant 0 : index
    %c0_5 = arith.constant 0 : index
    %5 = vector.load %arg4[%c0_4, %c0_5] : memref<128x128xbf16, #tpu.memory_space<vmem>>, vector<128x128xbf16>
    %cst = arith.constant dense<0.000000e+00> : vector<128x128xf32>
    %6 = tpu.matmul %3, %5, %cst {dimension_numbers = #tpu.dot_dimension_numbers<[1], [0], [0], [1], [0, 0, 1, 1], [], []>} : vector<128x128xbf16>, vector<128x128xbf16>, vector<128x128xf32> -> vector<128x128xf32>
    %7 = arith.addf %4, %6 : vector<128x128xf32>
    %c0_6 = arith.constant 0 : index
    %c0_7 = arith.constant 0 : index
    %8 = vector.load %arg7[%c0_6, %c0_7] : memref<128x128xf32, #tpu.memory_space<vmem>>, vector<128x128xf32>
    tpu.vector_store %arg7[%c0_6, %c0_7], %7 {strides = array<i32>} : memref<128x128xf32, #tpu.memory_space<vmem>>, vector<128x128xf32>,
    %c0_i32_8 = arith.constant 0 : i32
    %9 = arith.cmpi eq, %arg2, %c0_i32_8 : i32
    %10 = arith.extui %9 : i1 to i32
    %c0_i32_9 = arith.constant 0 : i32
    %11 = arith.cmpi ne, %10, %c0_i32_9 : i32
    scf.if %11 {
      %c0_10 = arith.constant 0 : index
      %c0_11 = arith.constant 0 : index
      %12 = vector.load %arg7[%c0_10, %c0_11] : memref<128x128xf32, #tpu.memory_space<vmem>>, vector<128x128xf32>
      %13 = arith.truncf %12 : vector<128x128xf32> to vector<128x128xbf16>
      %c0_12 = arith.constant 0 : index
      %c0_13 = arith.constant 0 : index
      %14 = vector.load %arg5[%c0_12, %c0_13] : memref<128x128xbf16, #tpu.memory_space<vmem>>, vector<128x128xbf16>
      tpu.vector_store %arg5[%c0_12, %c0_13], %13 {strides = array<i32>} : memref<128x128xbf16, #tpu.memory_space<vmem>>, vector<128x128xbf16>,
      %cst_14 = arith.constant dense<0.000000e+00> : vector<128xf32>
      %15 = vector.multi_reduction <add>, %12, %cst_14 [0] : vector<128x128xf32> to vector<128xf32>
      %16 = vector.shape_cast %15 : vector<128xf32> to vector<1x128xf32>
      %17 = arith.mulf %12, %12 : vector<128x128xf32>
      %cst_15 = arith.constant dense<0.000000e+00> : vector<128xf32>
      %18 = vector.multi_reduction <add>, %17, %cst_15 [0] : vector<128x128xf32> to vector<128xf32>
      %19 = vector.shape_cast %18 : vector<128xf32> to vector<1x128xf32>
      %cst_16 = arith.constant 0.000000e+00 : f32
      %20 = vector.broadcast %cst_16 : f32 to vector<6x128xf32>
      %21 = tpu.concatenate %16, %19, %20 in 0 : vector<1x128xf32>, vector<1x128xf32>, vector<6x128xf32> -> vector<8x128xf32>
      %c0_17 = arith.constant 0 : index
      %c0_18 = arith.constant 0 : index
      %22 = vector.load %arg6[%c0_17, %c0_18] : memref<8x128xf32, #tpu.memory_space<vmem>>, vector<8x128xf32>
      tpu.vector_store %arg6[%c0_17, %c0_18], %21 {strides = array<i32>} : memref<8x128xf32, #tpu.memory_space<vmem>>, vector<8x128xf32>,
    } else {
    }
    return
  }
  func.func @transform_0(%arg0: i32, %arg1: i32, %arg2: i32) -> (i32, i32) {
    %c0_i32 = arith.constant 0 : i32
    return %arg0, %arg2 : i32, i32
  }
  func.func @transform_1(%arg0: i32, %arg1: i32, %arg2: i32) -> (i32, i32) {
    %c0_i32 = arith.constant 0 : i32
    return %arg2, %arg1 : i32, i32
  }
  func.func @transform_2(%arg0: i32, %arg1: i32, %arg2: i32) -> (i32, i32) {
    %c0_i32 = arith.constant 0 : i32
    return %arg0, %arg1 : i32, i32
  }
  func.func @transform_3(%arg0: i32, %arg1: i32, %arg2: i32) -> (i32, i32) {
    %c0_i32 = arith.constant 0 : i32
    return %arg0, %arg1 : i32, i32
  }
}

module attributes {stable_mosaic.version = 11 : i64} {
  func.func @_mm_stats_kernel(%arg0: i32, %arg1: i32, %arg2: i32, %arg3: memref<128x128xbf16, #tpu.memory_space<vmem>>, %arg4: memref<128x128xbf16, #tpu.memory_space<vmem>>, %arg5: memref<128x128xbf16, #tpu.memory_space<vmem>>, %arg6: memref<8x128xf32, #tpu.memory_space<vmem>>, %arg7: memref<128x128xf32, #tpu.memory_space<vmem>>) attributes {dimension_semantics = [#tpu.dimension_semantics<parallel>, #tpu.dimension_semantics<parallel>, #tpu.dimension_semantics<arbitrary>], iteration_bounds = array<i64: 1, 1, 9>, scalar_prefetch = 0 : i64, scratch_operands = 1 : i64, tpu.core_type = #tpu.core_type<tc>, window_params = [{transform_indices = @transform_0, window_bounds = array<i64: 128, 128>}, {transform_indices = @transform_1, window_bounds = array<i64: 128, 128>}, {transform_indices = @transform_2, window_bounds = array<i64: 128, 128>}, {transform_indices = @transform_3, window_bounds = array<i64: 8, 128>}]} {
    %c0_i32 = arith.constant 0 : i32
    %0 = arith.cmpi eq, %arg2, %c0_i32 : i32
    %1 = arith.extui %0 : i1 to i32
    %c0_i32_0 = arith.constant 0 : i32
    %2 = arith.cmpi ne, %1, %c0_i32_0 : i32
    scf.if %2 {
      %cst_9 = arith.constant 0.000000e+00 : f32
      %12 = vector.broadcast %cst_9 : f32 to vector<128x128xf32>
      %c0_10 = arith.constant 0 : index
      %c0_11 = arith.constant 0 : index
      %13 = vector.load %arg7[%c0_10, %c0_11] : memref<128x128xf32, #tpu.memory_space<vmem>>, vector<128x128xf32>
      tpu.vector_store %arg7[%c0_10, %c0_11], %12 {strides = array<i32>} : memref<128x128xf32, #tpu.memory_space<vmem>>, vector<128x128xf32>,
    } else {
    }
    %c0 = arith.constant 0 : index
    %c0_1 = arith.constant 0 : index
    %3 = vector.load %arg3[%c0, %c0_1] : memref<128x128xbf16, #tpu.memory_space<vmem>>, vector<128x128xbf16>
    %c0_2 = arith.constant 0 : index
    %c0_3 = arith.constant 0 : index
    %4 = vector.load %arg7[%c0_2, %c0_3] : memref<128x128xf32, #tpu.memory_space<vmem>>, vector<128x128xf32>
    %c0_4 = arith.constant 0 : index
    %c0_5 = arith.constant 0 : index
    %5 = vector.load %arg4[%c0_4, %c0_5] : memref<128x128xbf16, #tpu.memory_space<vmem>>, vector<128x128xbf16>
    %cst = arith.constant dense<0.000000e+00> : vector<128x128xf32>
    %6 = tpu.matmul %3, %5, %cst {dimension_numbers = #tpu.dot_dimension_numbers<[1], [0], [0], [1], [0, 0, 1, 1], [], []>} : vector<128x128xbf16>, vector<128x128xbf16>, vector<128x128xf32> -> vector<128x128xf32>
    %7 = arith.addf %4, %6 : vector<128x128xf32>
    %c0_6 = arith.constant 0 : index
    %c0_7 = arith.constant 0 : index
    %8 = vector.load %arg7[%c0_6, %c0_7] : memref<128x128xf32, #tpu.memory_space<vmem>>, vector<128x128xf32>
    tpu.vector_store %arg7[%c0_6, %c0_7], %7 {strides = array<i32>} : memref<128x128xf32, #tpu.memory_space<vmem>>, vector<128x128xf32>,
    %c8_i32 = arith.constant 8 : i32
    %9 = arith.cmpi eq, %arg2, %c8_i32 : i32
    %10 = arith.extui %9 : i1 to i32
    %c0_i32_8 = arith.constant 0 : i32
    %11 = arith.cmpi ne, %10, %c0_i32_8 : i32
    scf.if %11 {
      %c0_9 = arith.constant 0 : index
      %c0_10 = arith.constant 0 : index
      %12 = vector.load %arg7[%c0_9, %c0_10] : memref<128x128xf32, #tpu.memory_space<vmem>>, vector<128x128xf32>
      %13 = arith.truncf %12 : vector<128x128xf32> to vector<128x128xbf16>
      %c0_11 = arith.constant 0 : index
      %c0_12 = arith.constant 0 : index
      %14 = vector.load %arg5[%c0_11, %c0_12] : memref<128x128xbf16, #tpu.memory_space<vmem>>, vector<128x128xbf16>
      tpu.vector_store %arg5[%c0_11, %c0_12], %13 {strides = array<i32>} : memref<128x128xbf16, #tpu.memory_space<vmem>>, vector<128x128xbf16>,
      %cst_13 = arith.constant dense<0.000000e+00> : vector<128xf32>
      %15 = vector.multi_reduction <add>, %12, %cst_13 [0] : vector<128x128xf32> to vector<128xf32>
      %16 = vector.shape_cast %15 : vector<128xf32> to vector<1x128xf32>
      %17 = arith.mulf %12, %12 : vector<128x128xf32>
      %cst_14 = arith.constant dense<0.000000e+00> : vector<128xf32>
      %18 = vector.multi_reduction <add>, %17, %cst_14 [0] : vector<128x128xf32> to vector<128xf32>
      %19 = vector.shape_cast %18 : vector<128xf32> to vector<1x128xf32>
      %cst_15 = arith.constant 0.000000e+00 : f32
      %20 = vector.broadcast %cst_15 : f32 to vector<6x128xf32>
      %21 = tpu.concatenate %16, %19, %20 in 0 : vector<1x128xf32>, vector<1x128xf32>, vector<6x128xf32> -> vector<8x128xf32>
      %c0_16 = arith.constant 0 : index
      %c0_17 = arith.constant 0 : index
      %22 = vector.load %arg6[%c0_16, %c0_17] : memref<8x128xf32, #tpu.memory_space<vmem>>, vector<8x128xf32>
      tpu.vector_store %arg6[%c0_16, %c0_17], %21 {strides = array<i32>} : memref<8x128xf32, #tpu.memory_space<vmem>>, vector<8x128xf32>,
    } else {
    }
    return
  }
  func.func @transform_0(%arg0: i32, %arg1: i32, %arg2: i32) -> (i32, i32) {
    %c0_i32 = arith.constant 0 : i32
    return %arg0, %arg2 : i32, i32
  }
  func.func @transform_1(%arg0: i32, %arg1: i32, %arg2: i32) -> (i32, i32) {
    %c0_i32 = arith.constant 0 : i32
    return %arg2, %arg1 : i32, i32
  }
  func.func @transform_2(%arg0: i32, %arg1: i32, %arg2: i32) -> (i32, i32) {
    %c0_i32 = arith.constant 0 : i32
    return %arg0, %arg1 : i32, i32
  }
  func.func @transform_3(%arg0: i32, %arg1: i32, %arg2: i32) -> (i32, i32) {
    %c0_i32 = arith.constant 0 : i32
    return %arg0, %arg1 : i32, i32
  }
}

module attributes {stable_mosaic.version = 11 : i64} {
  func.func @_mm_stats_kernel(%arg0: i32, %arg1: i32, %arg2: i32, %arg3: memref<128x128xbf16, #tpu.memory_space<vmem>>, %arg4: memref<1x128xf32, #tpu.memory_space<vmem>>, %arg5: memref<1x128xf32, #tpu.memory_space<vmem>>, %arg6: memref<128x128xbf16, #tpu.memory_space<vmem>>, %arg7: memref<128x128xbf16, #tpu.memory_space<vmem>>, %arg8: memref<8x128xf32, #tpu.memory_space<vmem>>, %arg9: memref<128x128xf32, #tpu.memory_space<vmem>>) attributes {dimension_semantics = [#tpu.dimension_semantics<parallel>, #tpu.dimension_semantics<parallel>, #tpu.dimension_semantics<arbitrary>], iteration_bounds = array<i64: 1, 1, 1>, scalar_prefetch = 0 : i64, scratch_operands = 1 : i64, tpu.core_type = #tpu.core_type<tc>, window_params = [{transform_indices = @transform_0, window_bounds = array<i64: 128, 128>}, {transform_indices = @transform_1, window_bounds = array<i64: 1, 128>}, {transform_indices = @transform_2, window_bounds = array<i64: 1, 128>}, {transform_indices = @transform_3, window_bounds = array<i64: 128, 128>}, {transform_indices = @transform_4, window_bounds = array<i64: 128, 128>}, {transform_indices = @transform_5, window_bounds = array<i64: 8, 128>}]} {
    %c0_i32 = arith.constant 0 : i32
    %0 = arith.cmpi eq, %arg2, %c0_i32 : i32
    %1 = arith.extui %0 : i1 to i32
    %c0_i32_0 = arith.constant 0 : i32
    %2 = arith.cmpi ne, %1, %c0_i32_0 : i32
    scf.if %2 {
      %cst_15 = arith.constant 0.000000e+00 : f32
      %22 = vector.broadcast %cst_15 : f32 to vector<128x128xf32>
      %c0_16 = arith.constant 0 : index
      %c0_17 = arith.constant 0 : index
      %23 = vector.load %arg9[%c0_16, %c0_17] : memref<128x128xf32, #tpu.memory_space<vmem>>, vector<128x128xf32>
      tpu.vector_store %arg9[%c0_16, %c0_17], %22 {strides = array<i32>} : memref<128x128xf32, #tpu.memory_space<vmem>>, vector<128x128xf32>,
    } else {
    }
    %c0 = arith.constant 0 : index
    %c0_1 = arith.constant 0 : index
    %3 = vector.load %arg3[%c0, %c0_1] : memref<128x128xbf16, #tpu.memory_space<vmem>>, vector<128x128xbf16>
    %4 = arith.extf %3 : vector<128x128xbf16> to vector<128x128xf32>
    %c0_2 = arith.constant 0 : index
    %c0_3 = arith.constant 0 : index
    %5 = vector.load %arg4[%c0_2, %c0_3] : memref<1x128xf32, #tpu.memory_space<vmem>>, vector<1x128xf32>
    %6 = vector.broadcast %5 : vector<1x128xf32> to vector<128x128xf32>
    %7 = arith.mulf %4, %6 : vector<128x128xf32>
    %c0_4 = arith.constant 0 : index
    %c0_5 = arith.constant 0 : index
    %8 = vector.load %arg5[%c0_4, %c0_5] : memref<1x128xf32, #tpu.memory_space<vmem>>, vector<1x128xf32>
    %9 = vector.broadcast %8 : vector<1x128xf32> to vector<128x128xf32>
    %10 = arith.addf %7, %9 : vector<128x128xf32>
    %cst = arith.constant 0.000000e+00 : f32
    %11 = vector.broadcast %cst : f32 to vector<128x128xf32>
    %12 = arith.maximumf %10, %11 : vector<128x128xf32>
    %13 = arith.truncf %12 : vector<128x128xf32> to vector<128x128xbf16>
    %c0_6 = arith.constant 0 : index
    %c0_7 = arith.constant 0 : index
    %14 = vector.load %arg9[%c0_6, %c0_7] : memref<128x128xf32, #tpu.memory_space<vmem>>, vector<128x128xf32>
    %c0_8 = arith.constant 0 : index
    %c0_9 = arith.constant 0 : index
    %15 = vector.load %arg6[%c0_8, %c0_9] : memref<128x128xbf16, #tpu.memory_space<vmem>>, vector<128x128xbf16>
    %cst_10 = arith.constant dense<0.000000e+00> : vector<128x128xf32>
    %16 = tpu.matmul %13, %15, %cst_10 {dimension_numbers = #tpu.dot_dimension_numbers<[1], [0], [0], [1], [0, 0, 1, 1], [], []>} : vector<128x128xbf16>, vector<128x128xbf16>, vector<128x128xf32> -> vector<128x128xf32>
    %17 = arith.addf %14, %16 : vector<128x128xf32>
    %c0_11 = arith.constant 0 : index
    %c0_12 = arith.constant 0 : index
    %18 = vector.load %arg9[%c0_11, %c0_12] : memref<128x128xf32, #tpu.memory_space<vmem>>, vector<128x128xf32>
    tpu.vector_store %arg9[%c0_11, %c0_12], %17 {strides = array<i32>} : memref<128x128xf32, #tpu.memory_space<vmem>>, vector<128x128xf32>,
    %c0_i32_13 = arith.constant 0 : i32
    %19 = arith.cmpi eq, %arg2, %c0_i32_13 : i32
    %20 = arith.extui %19 : i1 to i32
    %c0_i32_14 = arith.constant 0 : i32
    %21 = arith.cmpi ne, %20, %c0_i32_14 : i32
    scf.if %21 {
      %c0_15 = arith.constant 0 : index
      %c0_16 = arith.constant 0 : index
      %22 = vector.load %arg9[%c0_15, %c0_16] : memref<128x128xf32, #tpu.memory_space<vmem>>, vector<128x128xf32>
      %23 = arith.truncf %22 : vector<128x128xf32> to vector<128x128xbf16>
      %c0_17 = arith.constant 0 : index
      %c0_18 = arith.constant 0 : index
      %24 = vector.load %arg7[%c0_17, %c0_18] : memref<128x128xbf16, #tpu.memory_space<vmem>>, vector<128x128xbf16>
      tpu.vector_store %arg7[%c0_17, %c0_18], %23 {strides = array<i32>} : memref<128x128xbf16, #tpu.memory_space<vmem>>, vector<128x128xbf16>,
      %cst_19 = arith.constant dense<0.000000e+00> : vector<128xf32>
      %25 = vector.multi_reduction <add>, %22, %cst_19 [0] : vector<128x128xf32> to vector<128xf32>
      %26 = vector.shape_cast %25 : vector<128xf32> to vector<1x128xf32>
      %27 = arith.mulf %22, %22 : vector<128x128xf32>
      %cst_20 = arith.constant dense<0.000000e+00> : vector<128xf32>
      %28 = vector.multi_reduction <add>, %27, %cst_20 [0] : vector<128x128xf32> to vector<128xf32>
      %29 = vector.shape_cast %28 : vector<128xf32> to vector<1x128xf32>
      %cst_21 = arith.constant 0.000000e+00 : f32
      %30 = vector.broadcast %cst_21 : f32 to vector<6x128xf32>
      %31 = tpu.concatenate %26, %29, %30 in 0 : vector<1x128xf32>, vector<1x128xf32>, vector<6x128xf32> -> vector<8x128xf32>
      %c0_22 = arith.constant 0 : index
      %c0_23 = arith.constant 0 : index
      %32 = vector.load %arg8[%c0_22, %c0_23] : memref<8x128xf32, #tpu.memory_space<vmem>>, vector<8x128xf32>
      tpu.vector_store %arg8[%c0_22, %c0_23], %31 {strides = array<i32>} : memref<8x128xf32, #tpu.memory_space<vmem>>, vector<8x128xf32>,
    } else {
    }
    return
  }
  func.func @transform_0(%arg0: i32, %arg1: i32, %arg2: i32) -> (i32, i32) {
    %c0_i32 = arith.constant 0 : i32
    return %arg0, %arg2 : i32, i32
  }
  func.func @transform_1(%arg0: i32, %arg1: i32, %arg2: i32) -> (i32, i32) {
    %c0_i32 = arith.constant 0 : i32
    %c0_i32_0 = arith.constant 0 : i32
    return %c0_i32, %arg2 : i32, i32
  }
  func.func @transform_2(%arg0: i32, %arg1: i32, %arg2: i32) -> (i32, i32) {
    %c0_i32 = arith.constant 0 : i32
    %c0_i32_0 = arith.constant 0 : i32
    return %c0_i32, %arg2 : i32, i32
  }
  func.func @transform_3(%arg0: i32, %arg1: i32, %arg2: i32) -> (i32, i32) {
    %c0_i32 = arith.constant 0 : i32
    return %arg2, %arg1 : i32, i32
  }
  func.func @transform_4(%arg0: i32, %arg1: i32, %arg2: i32) -> (i32, i32) {
    %c0_i32 = arith.constant 0 : i32
    return %arg0, %arg1 : i32, i32
  }
  func.func @transform_5(%arg0: i32, %arg1: i32, %arg2: i32) -> (i32, i32) {
    %c0_i32 = arith.constant 0 : i32
    return %arg0, %arg1 : i32, i32
  }
}

module attributes {stable_mosaic.version = 11 : i64} {
  func.func @_bn_apply_kernel(%arg0: i32, %arg1: i32, %arg2: memref<128x128xbf16, #tpu.memory_space<vmem>>, %arg3: memref<1x128xf32, #tpu.memory_space<vmem>>, %arg4: memref<1x128xf32, #tpu.memory_space<vmem>>, %arg5: memref<128x128xbf16, #tpu.memory_space<vmem>>, %arg6: memref<1x128xf32, #tpu.memory_space<vmem>>, %arg7: memref<1x128xf32, #tpu.memory_space<vmem>>, %arg8: memref<128x128xf32, #tpu.memory_space<vmem>>) attributes {dimension_semantics = [#tpu.dimension_semantics<parallel>, #tpu.dimension_semantics<parallel>], iteration_bounds = array<i64: 1, 1>, scalar_prefetch = 0 : i64, scratch_operands = 0 : i64, tpu.core_type = #tpu.core_type<tc>, window_params = [{transform_indices = @transform_0, window_bounds = array<i64: 128, 128>}, {transform_indices = @transform_1, window_bounds = array<i64: 1, 128>}, {transform_indices = @transform_2, window_bounds = array<i64: 1, 128>}, {transform_indices = @transform_3, window_bounds = array<i64: 128, 128>}, {transform_indices = @transform_4, window_bounds = array<i64: 1, 128>}, {transform_indices = @transform_5, window_bounds = array<i64: 1, 128>}, {transform_indices = @transform_6, window_bounds = array<i64: 128, 128>}]} {
    %c0 = arith.constant 0 : index
    %c0_0 = arith.constant 0 : index
    %0 = vector.load %arg2[%c0, %c0_0] : memref<128x128xbf16, #tpu.memory_space<vmem>>, vector<128x128xbf16>
    %1 = arith.extf %0 : vector<128x128xbf16> to vector<128x128xf32>
    %c0_1 = arith.constant 0 : index
    %c0_2 = arith.constant 0 : index
    %2 = vector.load %arg3[%c0_1, %c0_2] : memref<1x128xf32, #tpu.memory_space<vmem>>, vector<1x128xf32>
    %3 = vector.broadcast %2 : vector<1x128xf32> to vector<128x128xf32>
    %4 = arith.mulf %1, %3 : vector<128x128xf32>
    %c0_3 = arith.constant 0 : index
    %c0_4 = arith.constant 0 : index
    %5 = vector.load %arg4[%c0_3, %c0_4] : memref<1x128xf32, #tpu.memory_space<vmem>>, vector<1x128xf32>
    %6 = vector.broadcast %5 : vector<1x128xf32> to vector<128x128xf32>
    %7 = arith.addf %4, %6 : vector<128x128xf32>
    %c0_5 = arith.constant 0 : index
    %c0_6 = arith.constant 0 : index
    %8 = vector.load %arg5[%c0_5, %c0_6] : memref<128x128xbf16, #tpu.memory_space<vmem>>, vector<128x128xbf16>
    %9 = arith.extf %8 : vector<128x128xbf16> to vector<128x128xf32>
    %c0_7 = arith.constant 0 : index
    %c0_8 = arith.constant 0 : index
    %10 = vector.load %arg6[%c0_7, %c0_8] : memref<1x128xf32, #tpu.memory_space<vmem>>, vector<1x128xf32>
    %11 = vector.broadcast %10 : vector<1x128xf32> to vector<128x128xf32>
    %12 = arith.mulf %9, %11 : vector<128x128xf32>
    %c0_9 = arith.constant 0 : index
    %c0_10 = arith.constant 0 : index
    %13 = vector.load %arg7[%c0_9, %c0_10] : memref<1x128xf32, #tpu.memory_space<vmem>>, vector<1x128xf32>
    %14 = vector.broadcast %13 : vector<1x128xf32> to vector<128x128xf32>
    %15 = arith.addf %12, %14 : vector<128x128xf32>
    %16 = arith.addf %7, %15 : vector<128x128xf32>
    %cst = arith.constant 0.000000e+00 : f32
    %17 = vector.broadcast %cst : f32 to vector<128x128xf32>
    %18 = arith.maximumf %16, %17 : vector<128x128xf32>
    %c0_11 = arith.constant 0 : index
    %c0_12 = arith.constant 0 : index
    %19 = vector.load %arg8[%c0_11, %c0_12] : memref<128x128xf32, #tpu.memory_space<vmem>>, vector<128x128xf32>
    tpu.vector_store %arg8[%c0_11, %c0_12], %18 {strides = array<i32>} : memref<128x128xf32, #tpu.memory_space<vmem>>, vector<128x128xf32>,
    return
  }
  func.func @transform_0(%arg0: i32, %arg1: i32) -> (i32, i32) {
    %c0_i32 = arith.constant 0 : i32
    return %arg0, %arg1 : i32, i32
  }
  func.func @transform_1(%arg0: i32, %arg1: i32) -> (i32, i32) {
    %c0_i32 = arith.constant 0 : i32
    %c0_i32_0 = arith.constant 0 : i32
    return %c0_i32, %arg1 : i32, i32
  }
  func.func @transform_2(%arg0: i32, %arg1: i32) -> (i32, i32) {
    %c0_i32 = arith.constant 0 : i32
    %c0_i32_0 = arith.constant 0 : i32
    return %c0_i32, %arg1 : i32, i32
  }
  func.func @transform_3(%arg0: i32, %arg1: i32) -> (i32, i32) {
    %c0_i32 = arith.constant 0 : i32
    return %arg0, %arg1 : i32, i32
  }
  func.func @transform_4(%arg0: i32, %arg1: i32) -> (i32, i32) {
    %c0_i32 = arith.constant 0 : i32
    %c0_i32_0 = arith.constant 0 : i32
    return %c0_i32, %arg1 : i32, i32
  }
  func.func @transform_5(%arg0: i32, %arg1: i32) -> (i32, i32) {
    %c0_i32 = arith.constant 0 : i32
    %c0_i32_0 = arith.constant 0 : i32
    return %c0_i32, %arg1 : i32, i32
  }
  func.func @transform_6(%arg0: i32, %arg1: i32) -> (i32, i32) {
    %c0_i32 = arith.constant 0 : i32
    return %arg0, %arg1 : i32, i32
  }
}

</mosaic_0001>

<llo_original>
// kernel: bottleneck_forward.7
$region0: #{bottleneck_forward.7}
  #allocation0 [shape = 'u32[]', space=smem, size = 0x4, offset = 0x4, fixed_abs, tag = 'smem constant byte address 0x4 - core index']
  #allocation1 [shape = 'u32[144,128]{1,0:T(1,128)}', space=vmem, size = 0x12000, scoped, tag = 'internal scratch']
  %s0 = inlined_call_operand.vmem [shape: bf16[512,128], index: 0, kind: input, shape index: {}]
  %s1 = inlined_call_operand.vmem [shape: f32[1,128], index: 1, kind: input, shape index: {}]
  %s2 = inlined_call_operand.vmem [shape: f32[1,128], index: 2, kind: input, shape index: {}]
  %s3 = inlined_call_operand.vmem [shape: bf16[512,128], index: 3, kind: output, shape index: {}]
  %s4 = sld [smem:[#allocation0]]
  $region22: #{bottleneck_forward.7} parent=0
    _
  %s6 = ssub.s32 1, %s4
  %s7 = scalar_select 0, %s6, %s4
  // Predicated region
  $region2: #{bottleneck_forward.7} parent=0 // pred_check
    _
  $region3: #{bottleneck_forward.7} parent=0 // pred_check_branch
    %9 = sbr.rel (0) target = $region5
  $region4: #{bottleneck_forward.7} parent=0 // pred_region
    _
  $region5: #{bottleneck_forward.7} parent=0 // pred_fallthru
    _
  // Predicated region
  $region6: #{bottleneck_forward.7} parent=0 // pred_check
    _
  $region7: #{bottleneck_forward.7} parent=0 // pred_check_branch
    %11 = sbr.rel (0) target = $region9
  $region8: #{bottleneck_forward.7} parent=0 // pred_region
    _
  $region9: #{bottleneck_forward.7} parent=0 // pred_fallthru
    _
  // Predicated region
  $region10: #{bottleneck_forward.7} parent=0 // pred_check
    _
  $region11: #{bottleneck_forward.7} parent=0 // pred_check_branch
    %13 = sbr.rel (0) target = $region13
  $region12: #{bottleneck_forward.7} parent=0 // pred_region
    _
  $region13: #{bottleneck_forward.7} parent=0 // pred_fallthru
    _
  %v14 = vld [vmem:[%s0] sm:$0xf]
  %v15 = vld [vmem:[%s0 + $0x4] sm:$0xf]
  %v16 = vld [vmem:[%s0 + $0x8] sm:$0xf]
  %v17 = vld [vmem:[%s0 + $0xc] sm:$0xf]
  %v18 = vld [vmem:[%s0 + $0x10] sm:$0xf]
  %v19 = vld [vmem:[%s0 + $0x14] sm:$0xf]
  %v20 = vld [vmem:[%s0 + $0x18] sm:$0xf]
  %v21 = vld [vmem:[%s0 + $0x1c] sm:$0xf]
  %v22 = vld [vmem:[%s0 + $0x20] sm:$0xf]
  %v23 = vld [vmem:[%s0 + $0x24] sm:$0xf]
  %v24 = vld [vmem:[%s0 + $0x28] sm:$0xf]
  %v25 = vld [vmem:[%s0 + $0x2c] sm:$0xf]
  %v26 = vld [vmem:[%s0 + $0x30] sm:$0xf]
  %v27 = vld [vmem:[%s0 + $0x34] sm:$0xf]
  %v28 = vld [vmem:[%s0 + $0x38] sm:$0xf]
  %v29 = vld [vmem:[%s0 + $0x3c] sm:$0xf]
  %v30 = vld [vmem:[%s0 + $0x40] sm:$0xf]
  %v31 = vld [vmem:[%s0 + $0x44] sm:$0xf]
  %v32 = vld [vmem:[%s0 + $0x48] sm:$0xf]
  %v33 = vld [vmem:[%s0 + $0x4c] sm:$0xf]
  %v34 = vld [vmem:[%s0 + $0x50] sm:$0xf]
  %v35 = vld [vmem:[%s0 + $0x54] sm:$0xf]
  %v36 = vld [vmem:[%s0 + $0x58] sm:$0xf]
  %v37 = vld [vmem:[%s0 + $0x5c] sm:$0xf]
  %v38 = vld [vmem:[%s0 + $0x60] sm:$0xf]
  %v39 = vld [vmem:[%s0 + $0x64] sm:$0xf]
  %v40 = vld [vmem:[%s0 + $0x68] sm:$0xf]
  %v41 = vld [vmem:[%s0 + $0x6c] sm:$0xf]
  %v42 = vld [vmem:[%s0 + $0x70] sm:$0xf]
  %v43 = vld [vmem:[%s0 + $0x74] sm:$0xf]
  %v44 = vld [vmem:[%s0 + $0x78] sm:$0xf]
  %v45 = vld [vmem:[%s0 + $0x7c] sm:$0xf]
  %v46 = vld [vmem:[%s0 + $0x80] sm:$0xf]
  %v47 = vld [vmem:[%s0 + $0x84] sm:$0xf]
  %v48 = vld [vmem:[%s0 + $0x88] sm:$0xf]
  %v49 = vld [vmem:[%s0 + $0x8c] sm:$0xf]
  %v50 = vld [vmem:[%s0 + $0x90] sm:$0xf]
  %v51 = vld [vmem:[%s0 + $0x94] sm:$0xf]
  %v52 = vld [vmem:[%s0 + $0x98] sm:$0xf]
  %v53 = vld [vmem:[%s0 + $0x9c] sm:$0xf]
  %v54 = vld [vmem:[%s0 + $0xa0] sm:$0xf]
  %v55 = vld [vmem:[%s0 + $0xa4] sm:$0xf]
  %v56 = vld [vmem:[%s0 + $0xa8] sm:$0xf]
  %v57 = vld [vmem:[%s0 + $0xac] sm:$0xf]
  %v58 = vld [vmem:[%s0 + $0xb0] sm:$0xf]
  %v59 = vld [vmem:[%s0 + $0xb4] sm:$0xf]
  %v60 = vld [vmem:[%s0 + $0xb8] sm:$0xf]
  %v61 = vld [vmem:[%s0 + $0xbc] sm:$0xf]
  %v62 = vld [vmem:[%s0 + $0xc0] sm:$0xf]
  %v63 = vld [vmem:[%s0 + $0xc4] sm:$0xf]
  %v64 = vld [vmem:[%s0 + $0xc8] sm:$0xf]
  %v65 = vld [vmem:[%s0 + $0xcc] sm:$0xf]
  %v66 = vld [vmem:[%s0 + $0xd0] sm:$0xf]
  %v67 = vld [vmem:[%s0 + $0xd4] sm:$0xf]
  %v68 = vld [vmem:[%s0 + $0xd8] sm:$0xf]
  %v69 = vld [vmem:[%s0 + $0xdc] sm:$0xf]
  %v70 = vld [vmem:[%s0 + $0xe0] sm:$0xf]
  %v71 = vld [vmem:[%s0 + $0xe4] sm:$0xf]
  %v72 = vld [vmem:[%s0 + $0xe8] sm:$0xf]
  %v73 = vld [vmem:[%s0 + $0xec] sm:$0xf]
  %v74 = vld [vmem:[%s0 + $0xf0] sm:$0xf]
  %v75 = vld [vmem:[%s0 + $0xf4] sm:$0xf]
  %v76 = vld [vmem:[%s0 + $0xf8] sm:$0xf]
  %v77 = vld [vmem:[%s0 + $0xfc] sm:$0xf]
  %v78 = vunpack.c.l.bf16 %v14
  %v79 = vunpack.c.l.bf16 %v15
  %v80 = vunpack.c.l.bf16 %v16
  %v81 = vunpack.c.l.bf16 %v17
  %v82 = vunpack.c.l.bf16 %v18
  %v83 = vunpack.c.l.bf16 %v19
  %v84 = vunpack.c.l.bf16 %v20
  %v85 = vunpack.c.l.bf16 %v21
  %v86 = vunpack.c.l.bf16 %v22
  %v87 = vunpack.c.l.bf16 %v23
  %v88 = vunpack.c.l.bf16 %v24
  %v89 = vunpack.c.l.bf16 %v25
  %v90 = vunpack.c.l.bf16 %v26
  %v91 = vunpack.c.l.bf16 %v27
  %v92 = vunpack.c.l.bf16 %v28
  %v93 = vunpack.c.l.bf16 %v29
  %v94 = vunpack.c.l.bf16 %v30
  %v95 = vunpack.c.l.bf16 %v31
  %v96 = vunpack.c.l.bf16 %v32
  %v97 = vunpack.c.l.bf16 %v33
  %v98 = vunpack.c.l.bf16 %v34
  %v99 = vunpack.c.l.bf16 %v35
  %v100 = vunpack.c.l.bf16 %v36
  %v101 = vunpack.c.l.bf16 %v37
  %v102 = vunpack.c.l.bf16 %v38
  %v103 = vunpack.c.l.bf16 %v39
  %v104 = vunpack.c.l.bf16 %v40
  %v105 = vunpack.c.l.bf16 %v41
  %v106 = vunpack.c.l.bf16 %v42
  %v107 = vunpack.c.l.bf16 %v43
  %v108 = vunpack.c.l.bf16 %v44
  %v109 = vunpack.c.l.bf16 %v45
  %v110 = vunpack.c.l.bf16 %v46
  %v111 = vunpack.c.l.bf16 %v47
  %v112 = vunpack.c.l.bf16 %v48
  %v113 = vunpack.c.l.bf16 %v49
  %v114 = vunpack.c.l.bf16 %v50
  %v115 = vunpack.c.l.bf16 %v51
  %v116 = vunpack.c.l.bf16 %v52
  %v117 = vunpack.c.l.bf16 %v53
  %v118 = vunpack.c.l.bf16 %v54
  %v119 = vunpack.c.l.bf16 %v55
  %v120 = vunpack.c.l.bf16 %v56
  %v121 = vunpack.c.l.bf16 %v57
  %v122 = vunpack.c.l.bf16 %v58
  %v123 = vunpack.c.l.bf16 %v59
  %v124 = vunpack.c.l.bf16 %v60
  %v125 = vunpack.c.l.bf16 %v61
  %v126 = vunpack.c.l.bf16 %v62
  %v127 = vunpack.c.l.bf16 %v63
  %v128 = vunpack.c.l.bf16 %v64
  %v129 = vunpack.c.l.bf16 %v65
  %v130 = vunpack.c.l.bf16 %v66
  %v131 = vunpack.c.l.bf16 %v67
  %v132 = vunpack.c.l.bf16 %v68
  %v133 = vunpack.c.l.bf16 %v69
  %v134 = vunpack.c.l.bf16 %v70
  %v135 = vunpack.c.l.bf16 %v71
  %v136 = vunpack.c.l.bf16 %v72
  %v137 = vunpack.c.l.bf16 %v73
  %v138 = vunpack.c.l.bf16 %v74
  %v139 = vunpack.c.l.bf16 %v75
  %v140 = vunpack.c.l.bf16 %v76
  %v141 = vunpack.c.l.bf16 %v77
  %v142 = vld [vmem:[%s1] sm:$0x1]
  %v144 = vlaneseq
  %v145 = vshrl.u32 %v144, 7
  %v146 = vsub.s32 0, %v145
  %v147 = vrot.slane %v142, %v146
  %v149 = vmul.f32 %v78, %v147
  %v150 = vmul.f32 %v79, %v147
  %v151 = vmul.f32 %v80, %v147
  %v152 = vmul.f32 %v81, %v147
  %v153 = vmul.f32 %v82, %v147
  %v154 = vmul.f32 %v83, %v147
  %v155 = vmul.f32 %v84, %v147
  %v156 = vmul.f32 %v85, %v147
  %v157 = vmul.f32 %v86, %v147
  %v158 = vmul.f32 %v87, %v147
  %v159 = vmul.f32 %v88, %v147
  %v160 = vmul.f32 %v89, %v147
  %v161 = vmul.f32 %v90, %v147
  %v162 = vmul.f32 %v91, %v147
  %v163 = vmul.f32 %v92, %v147
  %v164 = vmul.f32 %v93, %v147
  %v165 = vmul.f32 %v94, %v147
  %v166 = vmul.f32 %v95, %v147
  %v167 = vmul.f32 %v96, %v147
  %v168 = vmul.f32 %v97, %v147
  %v169 = vmul.f32 %v98, %v147
  %v170 = vmul.f32 %v99, %v147
  %v171 = vmul.f32 %v100, %v147
  %v172 = vmul.f32 %v101, %v147
  %v173 = vmul.f32 %v102, %v147
  %v174 = vmul.f32 %v103, %v147
  %v175 = vmul.f32 %v104, %v147
  %v176 = vmul.f32 %v105, %v147
  %v177 = vmul.f32 %v106, %v147
  %v178 = vmul.f32 %v107, %v147
  %v179 = vmul.f32 %v108, %v147
  %v180 = vmul.f32 %v109, %v147
  %v181 = vmul.f32 %v110, %v147
  %v182 = vmul.f32 %v111, %v147
  %v183 = vmul.f32 %v112, %v147
  %v184 = vmul.f32 %v113, %v147
  %v185 = vmul.f32 %v114, %v147
  %v186 = vmul.f32 %v115, %v147
  %v187 = vmul.f32 %v116, %v147
  %v188 = vmul.f32 %v117, %v147
  %v189 = vmul.f32 %v118, %v147
  %v190 = vmul.f32 %v119, %v147
  %v191 = vmul.f32 %v120, %v147
  %v192 = vmul.f32 %v121, %v147
  %v193 = vmul.f32 %v122, %v147
  %v194 = vmul.f32 %v123, %v147
  %v195 = vmul.f32 %v124, %v147
  %v196 = vmul.f32 %v125, %v147
  %v197 = vmul.f32 %v126, %v147
  %v198 = vmul.f32 %v127, %v147
  %v199 = vmul.f32 %v128, %v147
  %v200 = vmul.f32 %v129, %v147
  %v201 = vmul.f32 %v130, %v147
  %v202 = vmul.f32 %v131, %v147
  %v203 = vmul.f32 %v132, %v147
  %v204 = vmul.f32 %v133, %v147
  %v205 = vmul.f32 %v134, %v147
  %v206 = vmul.f32 %v135, %v147
  %v207 = vmul.f32 %v136, %v147
  %v208 = vmul.f32 %v137, %v147
  %v209 = vmul.f32 %v138, %v147
  %v210 = vmul.f32 %v139, %v147
  %v211 = vmul.f32 %v140, %v147
  %v212 = vmul.f32 %v141, %v147
  %v213 = vld [vmem:[%s2] sm:$0x1]
  %v215 = vlaneseq
  %v216 = vshrl.u32 %v215, 7
  %v217 = vsub.s32 0, %v216
  %v218 = vrot.slane %v213, %v217
  %v220 = vadd.f32 %v149, %v218
  %v221 = vadd.f32 %v150, %v218
  %v222 = vadd.f32 %v151, %v218
  %v223 = vadd.f32 %v152, %v218
  %v224 = vadd.f32 %v153, %v218
  %v225 = vadd.f32 %v154, %v218
  %v226 = vadd.f32 %v155, %v218
  %v227 = vadd.f32 %v156, %v218
  %v228 = vadd.f32 %v157, %v218
  %v229 = vadd.f32 %v158, %v218
  %v230 = vadd.f32 %v159, %v218
  %v231 = vadd.f32 %v160, %v218
  %v232 = vadd.f32 %v161, %v218
  %v233 = vadd.f32 %v162, %v218
  %v234 = vadd.f32 %v163, %v218
  %v235 = vadd.f32 %v164, %v218
  %v236 = vadd.f32 %v165, %v218
  %v237 = vadd.f32 %v166, %v218
  %v238 = vadd.f32 %v167, %v218
  %v239 = vadd.f32 %v168, %v218
  %v240 = vadd.f32 %v169, %v218
  %v241 = vadd.f32 %v170, %v218
  %v242 = vadd.f32 %v171, %v218
  %v243 = vadd.f32 %v172, %v218
  %v244 = vadd.f32 %v173, %v218
  %v245 = vadd.f32 %v174, %v218
  %v246 = vadd.f32 %v175, %v218
  %v247 = vadd.f32 %v176, %v218
  %v248 = vadd.f32 %v177, %v218
  %v249 = vadd.f32 %v178, %v218
  %v250 = vadd.f32 %v179, %v218
  %v251 = vadd.f32 %v180, %v218
  %v252 = vadd.f32 %v181, %v218
  %v253 = vadd.f32 %v182, %v218
  %v254 = vadd.f32 %v183, %v218
  %v255 = vadd.f32 %v184, %v218
  %v256 = vadd.f32 %v185, %v218
  %v257 = vadd.f32 %v186, %v218
  %v258 = vadd.f32 %v187, %v218
  %v259 = vadd.f32 %v188, %v218
  %v260 = vadd.f32 %v189, %v218
  %v261 = vadd.f32 %v190, %v218
  %v262 = vadd.f32 %v191, %v218
  %v263 = vadd.f32 %v192, %v218
  %v264 = vadd.f32 %v193, %v218
  %v265 = vadd.f32 %v194, %v218
  %v266 = vadd.f32 %v195, %v218
  %v267 = vadd.f32 %v196, %v218
  %v268 = vadd.f32 %v197, %v218
  %v269 = vadd.f32 %v198, %v218
  %v270 = vadd.f32 %v199, %v218
  %v271 = vadd.f32 %v200, %v218
  %v272 = vadd.f32 %v201, %v218
  %v273 = vadd.f32 %v202, %v218
  %v274 = vadd.f32 %v203, %v218
  %v275 = vadd.f32 %v204, %v218
  %v276 = vadd.f32 %v205, %v218
  %v277 = vadd.f32 %v206, %v218
  %v278 = vadd.f32 %v207, %v218
  %v279 = vadd.f32 %v208, %v218
  %v280 = vadd.f32 %v209, %v218
  %v281 = vadd.f32 %v210, %v218
  %v282 = vadd.f32 %v211, %v218
  %v283 = vadd.f32 %v212, %v218
  %v284 = vmax.f32 %v220, 0.0
  %v285 = vmax.f32 %v221, 0.0
  %v286 = vmax.f32 %v222, 0.0
  %v287 = vmax.f32 %v223, 0.0
  %v288 = vmax.f32 %v224, 0.0
  %v289 = vmax.f32 %v225, 0.0
  %v290 = vmax.f32 %v226, 0.0
  %v291 = vmax.f32 %v227, 0.0
  %v292 = vmax.f32 %v228, 0.0
  %v293 = vmax.f32 %v229, 0.0
  %v294 = vmax.f32 %v230, 0.0
  %v295 = vmax.f32 %v231, 0.0
  %v296 = vmax.f32 %v232, 0.0
  %v297 = vmax.f32 %v233, 0.0
  %v298 = vmax.f32 %v234, 0.0
  %v299 = vmax.f32 %v235, 0.0
  %v300 = vmax.f32 %v236, 0.0
  %v301 = vmax.f32 %v237, 0.0
  %v302 = vmax.f32 %v238, 0.0
  %v303 = vmax.f32 %v239, 0.0
  %v304 = vmax.f32 %v240, 0.0
  %v305 = vmax.f32 %v241, 0.0
  %v306 = vmax.f32 %v242, 0.0
  %v307 = vmax.f32 %v243, 0.0
  %v308 = vmax.f32 %v244, 0.0
  %v309 = vmax.f32 %v245, 0.0
  %v310 = vmax.f32 %v246, 0.0
  %v311 = vmax.f32 %v247, 0.0
  %v312 = vmax.f32 %v248, 0.0
  %v313 = vmax.f32 %v249, 0.0
  %v314 = vmax.f32 %v250, 0.0
  %v315 = vmax.f32 %v251, 0.0
  %v316 = vmax.f32 %v252, 0.0
  %v317 = vmax.f32 %v253, 0.0
  %v318 = vmax.f32 %v254, 0.0
  %v319 = vmax.f32 %v255, 0.0
  %v320 = vmax.f32 %v256, 0.0
  %v321 = vmax.f32 %v257, 0.0
  %v322 = vmax.f32 %v258, 0.0
  %v323 = vmax.f32 %v259, 0.0
  %v324 = vmax.f32 %v260, 0.0
  %v325 = vmax.f32 %v261, 0.0
  %v326 = vmax.f32 %v262, 0.0
  %v327 = vmax.f32 %v263, 0.0
  %v328 = vmax.f32 %v264, 0.0
  %v329 = vmax.f32 %v265, 0.0
  %v330 = vmax.f32 %v266, 0.0
  %v331 = vmax.f32 %v267, 0.0
  %v332 = vmax.f32 %v268, 0.0
  %v333 = vmax.f32 %v269, 0.0
  %v334 = vmax.f32 %v270, 0.0
  %v335 = vmax.f32 %v271, 0.0
  %v336 = vmax.f32 %v272, 0.0
  %v337 = vmax.f32 %v273, 0.0
  %v338 = vmax.f32 %v274, 0.0
  %v339 = vmax.f32 %v275, 0.0
  %v340 = vmax.f32 %v276, 0.0
  %v341 = vmax.f32 %v277, 0.0
  %v342 = vmax.f32 %v278, 0.0
  %v343 = vmax.f32 %v279, 0.0
  %v344 = vmax.f32 %v280, 0.0
  %v345 = vmax.f32 %v281, 0.0
  %v346 = vmax.f32 %v282, 0.0
  %v347 = vmax.f32 %v283, 0.0
  %v348 = vpack.c.bf16 %v285, %v284
  %v349 = vpack.c.bf16 %v287, %v286
  %v350 = vpack.c.bf16 %v289, %v288
  %v351 = vpack.c.bf16 %v291, %v290
  %v352 = vpack.c.bf16 %v293, %v292
  %v353 = vpack.c.bf16 %v295, %v294
  %v354 = vpack.c.bf16 %v297, %v296
  %v355 = vpack.c.bf16 %v299, %v298
  %v356 = vpack.c.bf16 %v301, %v300
  %v357 = vpack.c.bf16 %v303, %v302
  %v358 = vpack.c.bf16 %v305, %v304
  %v359 = vpack.c.bf16 %v307, %v306
  %v360 = vpack.c.bf16 %v309, %v308
  %v361 = vpack.c.bf16 %v311, %v310
  %v362 = vpack.c.bf16 %v313, %v312
  %v363 = vpack.c.bf16 %v315, %v314
  %v364 = vpack.c.bf16 %v317, %v316
  %v365 = vpack.c.bf16 %v319, %v318
  %v366 = vpack.c.bf16 %v321, %v320
  %v367 = vpack.c.bf16 %v323, %v322
  %v368 = vpack.c.bf16 %v325, %v324
  %v369 = vpack.c.bf16 %v327, %v326
  %v370 = vpack.c.bf16 %v329, %v328
  %v371 = vpack.c.bf16 %v331, %v330
  %v372 = vpack.c.bf16 %v333, %v332
  %v373 = vpack.c.bf16 %v335, %v334
  %v374 = vpack.c.bf16 %v337, %v336
  %v375 = vpack.c.bf16 %v339, %v338
  %v376 = vpack.c.bf16 %v341, %v340
  %v377 = vpack.c.bf16 %v343, %v342
  %v378 = vpack.c.bf16 %v345, %v344
  %v379 = vpack.c.bf16 %v347, %v346
  %v412 = vunpack.c.l.b16 %v348
  %v413 = vunpack.c.h.b16 %v348
  %v414 = vunpack.c.l.b16 %v349
  %v415 = vunpack.c.h.b16 %v349
  %v416 = vunpack.c.l.b16 %v350
  %v417 = vunpack.c.h.b16 %v350
  %v418 = vunpack.c.l.b16 %v351
  %v419 = vunpack.c.h.b16 %v351
  %v420 = vunpack.c.l.b16 %v352
  %v421 = vunpack.c.h.b16 %v352
  %v422 = vunpack.c.l.b16 %v353
  %v423 = vunpack.c.h.b16 %v353
  %v424 = vunpack.c.l.b16 %v354
  %v425 = vunpack.c.h.b16 %v354
  %v426 = vunpack.c.l.b16 %v355
  %v427 = vunpack.c.h.b16 %v355
  %v428 = vunpack.c.l.b16 %v356
  %v429 = vunpack.c.h.b16 %v356
  %v430 = vunpack.c.l.b16 %v357
  %v431 = vunpack.c.h.b16 %v357
  %v432 = vunpack.c.l.b16 %v358
  %v433 = vunpack.c.h.b16 %v358
  %v434 = vunpack.c.l.b16 %v359
  %v435 = vunpack.c.h.b16 %v359
  %v436 = vunpack.c.l.b16 %v360
  %v437 = vunpack.c.h.b16 %v360
  %v438 = vunpack.c.l.b16 %v361
  %v439 = vunpack.c.h.b16 %v361
  %v440 = vunpack.c.l.b16 %v362
  %v441 = vunpack.c.h.b16 %v362
  %v442 = vunpack.c.l.b16 %v363
  %v443 = vunpack.c.h.b16 %v363
  %v444 = vunpack.c.l.b16 %v364
  %v445 = vunpack.c.h.b16 %v364
  %v446 = vunpack.c.l.b16 %v365
  %v447 = vunpack.c.h.b16 %v365
  %v448 = vunpack.c.l.b16 %v366
  %v449 = vunpack.c.h.b16 %v366
  %v450 = vunpack.c.l.b16 %v367
  %v451 = vunpack.c.h.b16 %v367
  %v452 = vunpack.c.l.b16 %v368
  %v453 = vunpack.c.h.b16 %v368
  %v454 = vunpack.c.l.b16 %v369
  %v455 = vunpack.c.h.b16 %v369
  %v456 = vunpack.c.l.b16 %v370
  %v457 = vunpack.c.h.b16 %v370
  %v458 = vunpack.c.l.b16 %v371
  %v459 = vunpack.c.h.b16 %v371
  %v460 = vunpack.c.l.b16 %v372
  %v461 = vunpack.c.h.b16 %v372
  %v462 = vunpack.c.l.b16 %v373
  %v463 = vunpack.c.h.b16 %v373
  %v464 = vunpack.c.l.b16 %v374
  %v465 = vunpack.c.h.b16 %v374
  %v466 = vunpack.c.l.b16 %v375
  %v467 = vunpack.c.h.b16 %v375
  %v468 = vunpack.c.l.b16 %v376
  %v469 = vunpack.c.h.b16 %v376
  %v470 = vunpack.c.l.b16 %v377
  %v471 = vunpack.c.h.b16 %v377
  %v472 = vunpack.c.l.b16 %v378
  %v473 = vunpack.c.h.b16 %v378
  %v474 = vunpack.c.l.b16 %v379
  %v475 = vunpack.c.h.b16 %v379
  %v476 = vpack.c.b16 %v412, %v412
  %v477 = vpack.c.b16 %v413, %v413
  %v478 = vpack.c.b16 %v414, %v414
  %v479 = vpack.c.b16 %v415, %v415
  %v480 = vpack.c.b16 %v416, %v416
  %v481 = vpack.c.b16 %v417, %v417
  %v482 = vpack.c.b16 %v418, %v418
  %v483 = vpack.c.b16 %v419, %v419
  %v484 = vpack.c.b16 %v420, %v420
  %v485 = vpack.c.b16 %v421, %v421
  %v486 = vpack.c.b16 %v422, %v422
  %v487 = vpack.c.b16 %v423, %v423
  %v488 = vpack.c.b16 %v424, %v424
  %v489 = vpack.c.b16 %v425, %v425
  %v490 = vpack.c.b16 %v426, %v426
  %v491 = vpack.c.b16 %v427, %v427
  %v492 = vpack.c.b16 %v428, %v428
  %v493 = vpack.c.b16 %v429, %v429
  %v494 = vpack.c.b16 %v430, %v430
  %v495 = vpack.c.b16 %v431, %v431
  %v496 = vpack.c.b16 %v432, %v432
  %v497 = vpack.c.b16 %v433, %v433
  %v498 = vpack.c.b16 %v434, %v434
  %v499 = vpack.c.b16 %v435, %v435
  %v500 = vpack.c.b16 %v436, %v436
  %v501 = vpack.c.b16 %v437, %v437
  %v502 = vpack.c.b16 %v438, %v438
  %v503 = vpack.c.b16 %v439, %v439
  %v504 = vpack.c.b16 %v440, %v440
  %v505 = vpack.c.b16 %v441, %v441
  %v506 = vpack.c.b16 %v442, %v442
  %v507 = vpack.c.b16 %v443, %v443
  %v508 = vpack.c.b16 %v444, %v444
  %v509 = vpack.c.b16 %v445, %v445
  %v510 = vpack.c.b16 %v446, %v446
  %v511 = vpack.c.b16 %v447, %v447
  %v512 = vpack.c.b16 %v448, %v448
  %v513 = vpack.c.b16 %v449, %v449
  %v514 = vpack.c.b16 %v450, %v450
  %v515 = vpack.c.b16 %v451, %v451
  %v516 = vpack.c.b16 %v452, %v452
  %v517 = vpack.c.b16 %v453, %v453
  %v518 = vpack.c.b16 %v454, %v454
  %v519 = vpack.c.b16 %v455, %v455
  %v520 = vpack.c.b16 %v456, %v456
  %v521 = vpack.c.b16 %v457, %v457
  %v522 = vpack.c.b16 %v458, %v458
  %v523 = vpack.c.b16 %v459, %v459
  %v524 = vpack.c.b16 %v460, %v460
  %v525 = vpack.c.b16 %v461, %v461
  %v526 = vpack.c.b16 %v462, %v462
  %v527 = vpack.c.b16 %v463, %v463
  %v528 = vpack.c.b16 %v464, %v464
  %v529 = vpack.c.b16 %v465, %v465
  %v530 = vpack.c.b16 %v466, %v466
  %v531 = vpack.c.b16 %v467, %v467
  %v532 = vpack.c.b16 %v468, %v468
  %v533 = vpack.c.b16 %v469, %v469
  %v534 = vpack.c.b16 %v470, %v470
  %v535 = vpack.c.b16 %v471, %v471
  %v536 = vpack.c.b16 %v472, %v472
  %v537 = vpack.c.b16 %v473, %v473
  %v538 = vpack.c.b16 %v474, %v474
  %v539 = vpack.c.b16 %v475, %v475
  %604 = vst [vmem:[%s3] sm:$0xf] %v476
  %605 = vst [vmem:[%s3 + $0x4] sm:$0xf] %v477
  %606 = vst [vmem:[%s3 + $0x8] sm:$0xf] %v478
  %607 = vst [vmem:[%s3 + $0xc] sm:$0xf] %v479
  %608 = vst [vmem:[%s3 + $0x10] sm:$0xf] %v480
  %609 = vst [vmem:[%s3 + $0x14] sm:$0xf] %v481
  %610 = vst [vmem:[%s3 + $0x18] sm:$0xf] %v482
  %611 = vst [vmem:[%s3 + $0x1c] sm:$0xf] %v483
  %612 = vst [vmem:[%s3 + $0x20] sm:$0xf] %v484
  %613 = vst [vmem:[%s3 + $0x24] sm:$0xf] %v485
  %614 = vst [vmem:[%s3 + $0x28] sm:$0xf] %v486
  %615 = vst [vmem:[%s3 + $0x2c] sm:$0xf] %v487
  %616 = vst [vmem:[%s3 + $0x30] sm:$0xf] %v488
  %617 = vst [vmem:[%s3 + $0x34] sm:$0xf] %v489
  %618 = vst [vmem:[%s3 + $0x38] sm:$0xf] %v490
  %619 = vst [vmem:[%s3 + $0x3c] sm:$0xf] %v491
  %620 = vst [vmem:[%s3 + $0x40] sm:$0xf] %v492
  %621 = vst [vmem:[%s3 + $0x44] sm:$0xf] %v493
  %622 = vst [vmem:[%s3 + $0x48] sm:$0xf] %v494
  %623 = vst [vmem:[%s3 + $0x4c] sm:$0xf] %v495
  %624 = vst [vmem:[%s3 + $0x50] sm:$0xf] %v496
  %625 = vst [vmem:[%s3 + $0x54] sm:$0xf] %v497
  %626 = vst [vmem:[%s3 + $0x58] sm:$0xf] %v498
  %627 = vst [vmem:[%s3 + $0x5c] sm:$0xf] %v499
  %628 = vst [vmem:[%s3 + $0x60] sm:$0xf] %v500
  %629 = vst [vmem:[%s3 + $0x64] sm:$0xf] %v501
  %630 = vst [vmem:[%s3 + $0x68] sm:$0xf] %v502
  %631 = vst [vmem:[%s3 + $0x6c] sm:$0xf] %v503
  %632 = vst [vmem:[%s3 + $0x70] sm:$0xf] %v504
  %633 = vst [vmem:[%s3 + $0x74] sm:$0xf] %v505
  %634 = vst [vmem:[%s3 + $0x78] sm:$0xf] %v506
  %635 = vst [vmem:[%s3 + $0x7c] sm:$0xf] %v507
  %636 = vst [vmem:[%s3 + $0x80] sm:$0xf] %v508
  %637 = vst [vmem:[%s3 + $0x84] sm:$0xf] %v509
  %638 = vst [vmem:[%s3 + $0x88] sm:$0xf] %v510
  %639 = vst [vmem:[%s3 + $0x8c] sm:$0xf] %v511
  %640 = vst [vmem:[%s3 + $0x90] sm:$0xf] %v512
  %641 = vst [vmem:[%s3 + $0x94] sm:$0xf] %v513
  %642 = vst [vmem:[%s3 + $0x98] sm:$0xf] %v514
  %643 = vst [vmem:[%s3 + $0x9c] sm:$0xf] %v515
  %644 = vst [vmem:[%s3 + $0xa0] sm:$0xf] %v516
  %645 = vst [vmem:[%s3 + $0xa4] sm:$0xf] %v517
  %646 = vst [vmem:[%s3 + $0xa8] sm:$0xf] %v518
  %647 = vst [vmem:[%s3 + $0xac] sm:$0xf] %v519
  %648 = vst [vmem:[%s3 + $0xb0] sm:$0xf] %v520
  %649 = vst [vmem:[%s3 + $0xb4] sm:$0xf] %v521
  %650 = vst [vmem:[%s3 + $0xb8] sm:$0xf] %v522
  %651 = vst [vmem:[%s3 + $0xbc] sm:$0xf] %v523
  %652 = vst [vmem:[%s3 + $0xc0] sm:$0xf] %v524
  %653 = vst [vmem:[%s3 + $0xc4] sm:$0xf] %v525
  %654 = vst [vmem:[%s3 + $0xc8] sm:$0xf] %v526
  %655 = vst [vmem:[%s3 + $0xcc] sm:$0xf] %v527
  %656 = vst [vmem:[%s3 + $0xd0] sm:$0xf] %v528
  %657 = vst [vmem:[%s3 + $0xd4] sm:$0xf] %v529
  %658 = vst [vmem:[%s3 + $0xd8] sm:$0xf] %v530
  %659 = vst [vmem:[%s3 + $0xdc] sm:$0xf] %v531
  %660 = vst [vmem:[%s3 + $0xe0] sm:$0xf] %v532
  %661 = vst [vmem:[%s3 + $0xe4] sm:$0xf] %v533
  %662 = vst [vmem:[%s3 + $0xe8] sm:$0xf] %v534
  %663 = vst [vmem:[%s3 + $0xec] sm:$0xf] %v535
  %664 = vst [vmem:[%s3 + $0xf0] sm:$0xf] %v536
  %665 = vst [vmem:[%s3 + $0xf4] sm:$0xf] %v537
  %666 = vst [vmem:[%s3 + $0xf8] sm:$0xf] %v538
  %667 = vst [vmem:[%s3 + $0xfc] sm:$0xf] %v539
  // Predicated region
  $region14: #{bottleneck_forward.7} parent=0 // pred_check
    _
  $region15: #{bottleneck_forward.7} parent=0 // pred_check_branch
    %669 = sbr.rel (0) target = $region17
  $region16: #{bottleneck_forward.7} parent=0 // pred_region
    _
  $region17: #{bottleneck_forward.7} parent=0 // pred_fallthru
    _
  // Predicated region
  $region18: #{bottleneck_forward.7} parent=0 // pred_check
    _
  $region19: #{bottleneck_forward.7} parent=0 // pred_check_branch
    %671 = sbr.rel (0) target = $region21
  $region20: #{bottleneck_forward.7} parent=0 // pred_region
    _
  $region21: #{bottleneck_forward.7} parent=0 // pred_fallthru
    _

// kernel: bottleneck_forward.6
$region0: #{bottleneck_forward.6}
  #allocation0 [shape = 'u32[]', space=smem, size = 0x4, offset = 0x4, fixed_abs, tag = 'smem constant byte address 0x4 - core index']
  #allocation1 [shape = 'u32[144,128]{1,0:T(1,128)}', space=vmem, size = 0x12000, scoped, tag = 'internal scratch']
  #allocation2 [shape = 'f32[512,128]{1,0:T(8,128)}', space=vmem, size = 0x40000, scoped, tag = 'scratch operand']
  %s0 = inlined_call_operand.vmem [shape: bf16[512,128], index: 0, kind: input, shape index: {}]
  %s1 = inlined_call_operand.vmem [shape: bf16[128,128], index: 1, kind: input, shape index: {}]
  %s2 = inlined_call_operand.vmem [shape: bf16[512,128], index: 2, kind: output, shape index: {0}]
  %s3 = inlined_call_operand.vmem [shape: f32[8,128], index: 3, kind: output, shape index: {1}]
  %4 = xla_tuple %s2, %s3
  %s5 = sld [smem:[#allocation0]]
  $region34: #{bottleneck_forward.6} parent=0
    _
  %s7 = ssub.s32 1, %s5
  %s8 = scalar_select 0, %s7, %s5
  // Predicated region
  $region2: #{bottleneck_forward.6} parent=0 // pred_check
    _
  $region3: #{bottleneck_forward.6} parent=0 // pred_check_branch
    %10 = sbr.rel (0) target = $region5
  $region4: #{bottleneck_forward.6} parent=0 // pred_region
    _
  $region5: #{bottleneck_forward.6} parent=0 // pred_fallthru
    _
  // Predicated region
  $region6: #{bottleneck_forward.6} parent=0 // pred_check
    _
  $region7: #{bottleneck_forward.6} parent=0 // pred_check_branch
    %12 = sbr.rel (0) target = $region9
  $region8: #{bottleneck_forward.6} parent=0 // pred_region
    _
  $region9: #{bottleneck_forward.6} parent=0 // pred_fallthru
    _
  %p14 = scmp.eq.s32.totalorder 0, 0
  // Predicated region
  $region10: #{bottleneck_forward.6} parent=0 // pred_check
    %p15 = pneg %p14
  $region11: #{bottleneck_forward.6} parent=0 // pred_check_branch
    %17 = sbr.rel (%p15) target = $region13
  $region12: #{bottleneck_forward.6} parent=0 // pred_region
    %18 = vst [vmem:[#allocation2] sm:$0xff] 0.0
    %19 = vst [vmem:[#allocation2 + $0x8] sm:$0xff] 0.0
    %20 = vst [vmem:[#allocation2 + $0x10] sm:$0xff] 0.0
    %21 = vst [vmem:[#allocation2 + $0x18] sm:$0xff] 0.0
    %22 = vst [vmem:[#allocation2 + $0x20] sm:$0xff] 0.0
    %23 = vst [vmem:[#allocation2 + $0x28] sm:$0xff] 0.0
    %24 = vst [vmem:[#allocation2 + $0x30] sm:$0xff] 0.0
    %25 = vst [vmem:[#allocation2 + $0x38] sm:$0xff] 0.0
    %26 = vst [vmem:[#allocation2 + $0x40] sm:$0xff] 0.0
    %27 = vst [vmem:[#allocation2 + $0x48] sm:$0xff] 0.0
    %28 = vst [vmem:[#allocation2 + $0x50] sm:$0xff] 0.0
    %29 = vst [vmem:[#allocation2 + $0x58] sm:$0xff] 0.0
    %30 = vst [vmem:[#allocation2 + $0x60] sm:$0xff] 0.0
    %31 = vst [vmem:[#allocation2 + $0x68] sm:$0xff] 0.0
    %32 = vst [vmem:[#allocation2 + $0x70] sm:$0xff] 0.0
    %33 = vst [vmem:[#allocation2 + $0x78] sm:$0xff] 0.0
    %34 = vst [vmem:[#allocation2 + $0x80] sm:$0xff] 0.0
    %35 = vst [vmem:[#allocation2 + $0x88] sm:$0xff] 0.0
    %36 = vst [vmem:[#allocation2 + $0x90] sm:$0xff] 0.0
    %37 = vst [vmem:[#allocation2 + $0x98] sm:$0xff] 0.0
    %38 = vst [vmem:[#allocation2 + $0xa0] sm:$0xff] 0.0
    %39 = vst [vmem:[#allocation2 + $0xa8] sm:$0xff] 0.0
    %40 = vst [vmem:[#allocation2 + $0xb0] sm:$0xff] 0.0
    %41 = vst [vmem:[#allocation2 + $0xb8] sm:$0xff] 0.0
    %42 = vst [vmem:[#allocation2 + $0xc0] sm:$0xff] 0.0
    %43 = vst [vmem:[#allocation2 + $0xc8] sm:$0xff] 0.0
    %44 = vst [vmem:[#allocation2 + $0xd0] sm:$0xff] 0.0
    %45 = vst [vmem:[#allocation2 + $0xd8] sm:$0xff] 0.0
    %46 = vst [vmem:[#allocation2 + $0xe0] sm:$0xff] 0.0
    %47 = vst [vmem:[#allocation2 + $0xe8] sm:$0xff] 0.0
    %48 = vst [vmem:[#allocation2 + $0xf0] sm:$0xff] 0.0
    %49 = vst [vmem:[#allocation2 + $0xf8] sm:$0xff] 0.0
    %50 = vst [vmem:[#allocation2 + $0x100] sm:$0xff] 0.0
    %51 = vst [vmem:[#allocation2 + $0x108] sm:$0xff] 0.0
    %52 = vst [vmem:[#allocation2 + $0x110] sm:$0xff] 0.0
    %53 = vst [vmem:[#allocation2 + $0x118] sm:$0xff] 0.0
    %54 = vst [vmem:[#allocation2 + $0x120] sm:$0xff] 0.0
    %55 = vst [vmem:[#allocation2 + $0x128] sm:$0xff] 0.0
    %56 = vst [vmem:[#allocation2 + $0x130] sm:$0xff] 0.0
    %57 = vst [vmem:[#allocation2 + $0x138] sm:$0xff] 0.0
    %58 = vst [vmem:[#allocation2 + $0x140] sm:$0xff] 0.0
    %59 = vst [vmem:[#allocation2 + $0x148] sm:$0xff] 0.0
    %60 = vst [vmem:[#allocation2 + $0x150] sm:$0xff] 0.0
    %61 = vst [vmem:[#allocation2 + $0x158] sm:$0xff] 0.0
    %62 = vst [vmem:[#allocation2 + $0x160] sm:$0xff] 0.0
    %63 = vst [vmem:[#allocation2 + $0x168] sm:$0xff] 0.0
    %64 = vst [vmem:[#allocation2 + $0x170] sm:$0xff] 0.0
    %65 = vst [vmem:[#allocation2 + $0x178] sm:$0xff] 0.0
    %66 = vst [vmem:[#allocation2 + $0x180] sm:$0xff] 0.0
    %67 = vst [vmem:[#allocation2 + $0x188] sm:$0xff] 0.0
    %68 = vst [vmem:[#allocation2 + $0x190] sm:$0xff] 0.0
    %69 = vst [vmem:[#allocation2 + $0x198] sm:$0xff] 0.0
    %70 = vst [vmem:[#allocation2 + $0x1a0] sm:$0xff] 0.0
    %71 = vst [vmem:[#allocation2 + $0x1a8] sm:$0xff] 0.0
    %72 = vst [vmem:[#allocation2 + $0x1b0] sm:$0xff] 0.0
    %73 = vst [vmem:[#allocation2 + $0x1b8] sm:$0xff] 0.0
    %74 = vst [vmem:[#allocation2 + $0x1c0] sm:$0xff] 0.0
    %75 = vst [vmem:[#allocation2 + $0x1c8] sm:$0xff] 0.0
    %76 = vst [vmem:[#allocation2 + $0x1d0] sm:$0xff] 0.0
    %77 = vst [vmem:[#allocation2 + $0x1d8] sm:$0xff] 0.0
    %78 = vst [vmem:[#allocation2 + $0x1e0] sm:$0xff] 0.0
    %79 = vst [vmem:[#allocation2 + $0x1e8] sm:$0xff] 0.0
    %80 = vst [vmem:[#allocation2 + $0x1f0] sm:$0xff] 0.0
    %81 = vst [vmem:[#allocation2 + $0x1f8] sm:$0xff] 0.0
  $region13: #{bottleneck_forward.6} parent=0 // pred_fallthru
    _
  %v82 = vld [vmem:[%s0] sm:$0xf]
  %v83 = vld [vmem:[%s0 + $0x4] sm:$0xf]
  %v84 = vld [vmem:[%s0 + $0x8] sm:$0xf]
  %v85 = vld [vmem:[%s0 + $0xc] sm:$0xf]
  %v86 = vld [vmem:[%s0 + $0x10] sm:$0xf]
  %v87 = vld [vmem:[%s0 + $0x14] sm:$0xf]
  %v88 = vld [vmem:[%s0 + $0x18] sm:$0xf]
  %v89 = vld [vmem:[%s0 + $0x1c] sm:$0xf]
  %v90 = vld [vmem:[%s0 + $0x20] sm:$0xf]
  %v91 = vld [vmem:[%s0 + $0x24] sm:$0xf]
  %v92 = vld [vmem:[%s0 + $0x28] sm:$0xf]
  %v93 = vld [vmem:[%s0 + $0x2c] sm:$0xf]
  %v94 = vld [vmem:[%s0 + $0x30] sm:$0xf]
  %v95 = vld [vmem:[%s0 + $0x34] sm:$0xf]
  %v96 = vld [vmem:[%s0 + $0x38] sm:$0xf]
  %v97 = vld [vmem:[%s0 + $0x3c] sm:$0xf]
  %v98 = vld [vmem:[%s0 + $0x40] sm:$0xf]
  %v99 = vld [vmem:[%s0 + $0x44] sm:$0xf]
  %v100 = vld [vmem:[%s0 + $0x48] sm:$0xf]
  %v101 = vld [vmem:[%s0 + $0x4c] sm:$0xf]
  %v102 = vld [vmem:[%s0 + $0x50] sm:$0xf]
  %v103 = vld [vmem:[%s0 + $0x54] sm:$0xf]
  %v104 = vld [vmem:[%s0 + $0x58] sm:$0xf]
  %v105 = vld [vmem:[%s0 + $0x5c] sm:$0xf]
  %v106 = vld [vmem:[%s0 + $0x60] sm:$0xf]
  %v107 = vld [vmem:[%s0 + $0x64] sm:$0xf]
  %v108 = vld [vmem:[%s0 + $0x68] sm:$0xf]
  %v109 = vld [vmem:[%s0 + $0x6c] sm:$0xf]
  %v110 = vld [vmem:[%s0 + $0x70] sm:$0xf]
  %v111 = vld [vmem:[%s0 + $0x74] sm:$0xf]
  %v112 = vld [vmem:[%s0 + $0x78] sm:$0xf]
  %v113 = vld [vmem:[%s0 + $0x7c] sm:$0xf]
  %v114 = vld [vmem:[%s0 + $0x80] sm:$0xf]
  %v115 = vld [vmem:[%s0 + $0x84] sm:$0xf]
  %v116 = vld [vmem:[%s0 + $0x88] sm:$0xf]
  %v117 = vld [vmem:[%s0 + $0x8c] sm:$0xf]
  %v118 = vld [vmem:[%s0 + $0x90] sm:$0xf]
  %v119 = vld [vmem:[%s0 + $0x94] sm:$0xf]
  %v120 = vld [vmem:[%s0 + $0x98] sm:$0xf]
  %v121 = vld [vmem:[%s0 + $0x9c] sm:$0xf]
  %v122 = vld [vmem:[%s0 + $0xa0] sm:$0xf]
  %v123 = vld [vmem:[%s0 + $0xa4] sm:$0xf]
  %v124 = vld [vmem:[%s0 + $0xa8] sm:$0xf]
  %v125 = vld [vmem:[%s0 + $0xac] sm:$0xf]
  %v126 = vld [vmem:[%s0 + $0xb0] sm:$0xf]
  %v127 = vld [vmem:[%s0 + $0xb4] sm:$0xf]
  %v128 = vld [vmem:[%s0 + $0xb8] sm:$0xf]
  %v129 = vld [vmem:[%s0 + $0xbc] sm:$0xf]
  %v130 = vld [vmem:[%s0 + $0xc0] sm:$0xf]
  %v131 = vld [vmem:[%s0 + $0xc4] sm:$0xf]
  %v132 = vld [vmem:[%s0 + $0xc8] sm:$0xf]
  %v133 = vld [vmem:[%s0 + $0xcc] sm:$0xf]
  %v134 = vld [vmem:[%s0 + $0xd0] sm:$0xf]
  %v135 = vld [vmem:[%s0 + $0xd4] sm:$0xf]
  %v136 = vld [vmem:[%s0 + $0xd8] sm:$0xf]
  %v137 = vld [vmem:[%s0 + $0xdc] sm:$0xf]
  %v138 = vld [vmem:[%s0 + $0xe0] sm:$0xf]
  %v139 = vld [vmem:[%s0 + $0xe4] sm:$0xf]
  %v140 = vld [vmem:[%s0 + $0xe8] sm:$0xf]
  %v141 = vld [vmem:[%s0 + $0xec] sm:$0xf]
  %v142 = vld [vmem:[%s0 + $0xf0] sm:$0xf]
  %v143 = vld [vmem:[%s0 + $0xf4] sm:$0xf]
  %v144 = vld [vmem:[%s0 + $0xf8] sm:$0xf]
  %v145 = vld [vmem:[%s0 + $0xfc] sm:$0xf]
  %v146 = vld [vmem:[#allocation2] sm:$0xff]
  %v147 = vld [vmem:[#allocation2 + $0x8] sm:$0xff]
  %v148 = vld [vmem:[#allocation2 + $0x10] sm:$0xff]
  %v149 = vld [vmem:[#allocation2 + $0x18] sm:$0xff]
  %v150 = vld [vmem:[#allocation2 + $0x20] sm:$0xff]
  %v151 = vld [vmem:[#allocation2 + $0x28] sm:$0xff]
  %v152 = vld [vmem:[#allocation2 + $0x30] sm:$0xff]
  %v153 = vld [vmem:[#allocation2 + $0x38] sm:$0xff]
  %v154 = vld [vmem:[#allocation2 + $0x40] sm:$0xff]
  %v155 = vld [vmem:[#allocation2 + $0x48] sm:$0xff]
  %v156 = vld [vmem:[#allocation2 + $0x50] sm:$0xff]
  %v157 = vld [vmem:[#allocation2 + $0x58] sm:$0xff]
  %v158 = vld [vmem:[#allocation2 + $0x60] sm:$0xff]
  %v159 = vld [vmem:[#allocation2 + $0x68] sm:$0xff]
  %v160 = vld [vmem:[#allocation2 + $0x70] sm:$0xff]
  %v161 = vld [vmem:[#allocation2 + $0x78] sm:$0xff]
  %v162 = vld [vmem:[#allocation2 + $0x80] sm:$0xff]
  %v163 = vld [vmem:[#allocation2 + $0x88] sm:$0xff]
  %v164 = vld [vmem:[#allocation2 + $0x90] sm:$0xff]
  %v165 = vld [vmem:[#allocation2 + $0x98] sm:$0xff]
  %v166 = vld [vmem:[#allocation2 + $0xa0] sm:$0xff]
  %v167 = vld [vmem:[#allocation2 + $0xa8] sm:$0xff]
  %v168 = vld [vmem:[#allocation2 + $0xb0] sm:$0xff]
  %v169 = vld [vmem:[#allocation2 + $0xb8] sm:$0xff]
  %v170 = vld [vmem:[#allocation2 + $0xc0] sm:$0xff]
  %v171 = vld [vmem:[#allocation2 + $0xc8] sm:$0xff]
  %v172 = vld [vmem:[#allocation2 + $0xd0] sm:$0xff]
  %v173 = vld [vmem:[#allocation2 + $0xd8] sm:$0xff]
  %v174 = vld [vmem:[#allocation2 + $0xe0] sm:$0xff]
  %v175 = vld [vmem:[#allocation2 + $0xe8] sm:$0xff]
  %v176 = vld [vmem:[#allocation2 + $0xf0] sm:$0xff]
  %v177 = vld [vmem:[#allocation2 + $0xf8] sm:$0xff]
  %v178 = vld [vmem:[#allocation2 + $0x100] sm:$0xff]
  %v179 = vld [vmem:[#allocation2 + $0x108] sm:$0xff]
  %v180 = vld [vmem:[#allocation2 + $0x110] sm:$0xff]
  %v181 = vld [vmem:[#allocation2 + $0x118] sm:$0xff]
  %v182 = vld [vmem:[#allocation2 + $0x120] sm:$0xff]
  %v183 = vld [vmem:[#allocation2 + $0x128] sm:$0xff]
  %v184 = vld [vmem:[#allocation2 + $0x130] sm:$0xff]
  %v185 = vld [vmem:[#allocation2 + $0x138] sm:$0xff]
  %v186 = vld [vmem:[#allocation2 + $0x140] sm:$0xff]
  %v187 = vld [vmem:[#allocation2 + $0x148] sm:$0xff]
  %v188 = vld [vmem:[#allocation2 + $0x150] sm:$0xff]
  %v189 = vld [vmem:[#allocation2 + $0x158] sm:$0xff]
  %v190 = vld [vmem:[#allocation2 + $0x160] sm:$0xff]
  %v191 = vld [vmem:[#allocation2 + $0x168] sm:$0xff]
  %v192 = vld [vmem:[#allocation2 + $0x170] sm:$0xff]
  %v193 = vld [vmem:[#allocation2 + $0x178] sm:$0xff]
  %v194 = vld [vmem:[#allocation2 + $0x180] sm:$0xff]
  %v195 = vld [vmem:[#allocation2 + $0x188] sm:$0xff]
  %v196 = vld [vmem:[#allocation2 + $0x190] sm:$0xff]
  %v197 = vld [vmem:[#allocation2 + $0x198] sm:$0xff]
  %v198 = vld [vmem:[#allocation2 + $0x1a0] sm:$0xff]
  %v199 = vld [vmem:[#allocation2 + $0x1a8] sm:$0xff]
  %v200 = vld [vmem:[#allocation2 + $0x1b0] sm:$0xff]
  %v201 = vld [vmem:[#allocation2 + $0x1b8] sm:$0xff]
  %v202 = vld [vmem:[#allocation2 + $0x1c0] sm:$0xff]
  %v203 = vld [vmem:[#allocation2 + $0x1c8] sm:$0xff]
  %v204 = vld [vmem:[#allocation2 + $0x1d0] sm:$0xff]
  %v205 = vld [vmem:[#allocation2 + $0x1d8] sm:$0xff]
  %v206 = vld [vmem:[#allocation2 + $0x1e0] sm:$0xff]
  %v207 = vld [vmem:[#allocation2 + $0x1e8] sm:$0xff]
  %v208 = vld [vmem:[#allocation2 + $0x1f0] sm:$0xff]
  %v209 = vld [vmem:[#allocation2 + $0x1f8] sm:$0xff]
  %v210 = vld [vmem:[%s1] sm:$0xf]
  %v211 = vld [vmem:[%s1 + $0x4] sm:$0xf]
  %v212 = vld [vmem:[%s1 + $0x8] sm:$0xf]
  %v213 = vld [vmem:[%s1 + $0xc] sm:$0xf]
  %v214 = vld [vmem:[%s1 + $0x10] sm:$0xf]
  %v215 = vld [vmem:[%s1 + $0x14] sm:$0xf]
  %v216 = vld [vmem:[%s1 + $0x18] sm:$0xf]
  %v217 = vld [vmem:[%s1 + $0x1c] sm:$0xf]
  %v218 = vld [vmem:[%s1 + $0x20] sm:$0xf]
  %v219 = vld [vmem:[%s1 + $0x24] sm:$0xf]
  %v220 = vld [vmem:[%s1 + $0x28] sm:$0xf]
  %v221 = vld [vmem:[%s1 + $0x2c] sm:$0xf]
  %v222 = vld [vmem:[%s1 + $0x30] sm:$0xf]
  %v223 = vld [vmem:[%s1 + $0x34] sm:$0xf]
  %v224 = vld [vmem:[%s1 + $0x38] sm:$0xf]
  %v225 = vld [vmem:[%s1 + $0x3c] sm:$0xf]
  %v290 = vunpack.c.l.b16 %v82
  %v291 = vunpack.c.l.b16 %v83
  %v292 = vunpack.c.l.b16 %v84
  %v293 = vunpack.c.l.b16 %v85
  %v294 = vunpack.c.l.b16 %v86
  %v295 = vunpack.c.l.b16 %v87
  %v296 = vunpack.c.l.b16 %v88
  %v297 = vunpack.c.l.b16 %v89
  %v298 = vunpack.c.l.b16 %v90
  %v299 = vunpack.c.l.b16 %v91
  %v300 = vunpack.c.l.b16 %v92
  %v301 = vunpack.c.l.b16 %v93
  %v302 = vunpack.c.l.b16 %v94
  %v303 = vunpack.c.l.b16 %v95
  %v304 = vunpack.c.l.b16 %v96
  %v305 = vunpack.c.l.b16 %v97
  %v306 = vunpack.c.l.b16 %v98
  %v307 = vunpack.c.l.b16 %v99
  %v308 = vunpack.c.l.b16 %v100
  %v309 = vunpack.c.l.b16 %v101
  %v310 = vunpack.c.l.b16 %v102
  %v311 = vunpack.c.l.b16 %v103
  %v312 = vunpack.c.l.b16 %v104
  %v313 = vunpack.c.l.b16 %v105
  %v314 = vunpack.c.l.b16 %v106
  %v315 = vunpack.c.l.b16 %v107
  %v316 = vunpack.c.l.b16 %v108
  %v317 = vunpack.c.l.b16 %v109
  %v318 = vunpack.c.l.b16 %v110
  %v319 = vunpack.c.l.b16 %v111
  %v320 = vunpack.c.l.b16 %v112
  %v321 = vunpack.c.l.b16 %v113
  %v322 = vunpack.c.l.b16 %v114
  %v323 = vunpack.c.l.b16 %v115
  %v324 = vunpack.c.l.b16 %v116
  %v325 = vunpack.c.l.b16 %v117
  %v326 = vunpack.c.l.b16 %v118
  %v327 = vunpack.c.l.b16 %v119
  %v328 = vunpack.c.l.b16 %v120
  %v329 = vunpack.c.l.b16 %v121
  %v330 = vunpack.c.l.b16 %v122
  %v331 = vunpack.c.l.b16 %v123
  %v332 = vunpack.c.l.b16 %v124
  %v333 = vunpack.c.l.b16 %v125
  %v334 = vunpack.c.l.b16 %v126
  %v335 = vunpack.c.l.b16 %v127
  %v336 = vunpack.c.l.b16 %v128
  %v337 = vunpack.c.l.b16 %v129
  %v338 = vunpack.c.l.b16 %v130
  %v339 = vunpack.c.l.b16 %v131
  %v340 = vunpack.c.l.b16 %v132
  %v341 = vunpack.c.l.b16 %v133
  %v342 = vunpack.c.l.b16 %v134
  %v343 = vunpack.c.l.b16 %v135
  %v344 = vunpack.c.l.b16 %v136
  %v345 = vunpack.c.l.b16 %v137
  %v346 = vunpack.c.l.b16 %v138
  %v347 = vunpack.c.l.b16 %v139
  %v348 = vunpack.c.l.b16 %v140
  %v349 = vunpack.c.l.b16 %v141
  %v350 = vunpack.c.l.b16 %v142
  %v351 = vunpack.c.l.b16 %v143
  %v352 = vunpack.c.l.b16 %v144
  %v353 = vunpack.c.l.b16 %v145
  %v354 = vpack.c.b16 %v291, %v290
  %v355 = vpack.c.b16 %v293, %v292
  %v356 = vpack.c.b16 %v295, %v294
  %v357 = vpack.c.b16 %v297, %v296
  %v358 = vpack.c.b16 %v299, %v298
  %v359 = vpack.c.b16 %v301, %v300
  %v360 = vpack.c.b16 %v303, %v302
  %v361 = vpack.c.b16 %v305, %v304
  %v362 = vpack.c.b16 %v307, %v306
  %v363 = vpack.c.b16 %v309, %v308
  %v364 = vpack.c.b16 %v311, %v310
  %v365 = vpack.c.b16 %v313, %v312
  %v366 = vpack.c.b16 %v315, %v314
  %v367 = vpack.c.b16 %v317, %v316
  %v368 = vpack.c.b16 %v319, %v318
  %v369 = vpack.c.b16 %v321, %v320
  %v370 = vpack.c.b16 %v323, %v322
  %v371 = vpack.c.b16 %v325, %v324
  %v372 = vpack.c.b16 %v327, %v326
  %v373 = vpack.c.b16 %v329, %v328
  %v374 = vpack.c.b16 %v331, %v330
  %v375 = vpack.c.b16 %v333, %v332
  %v376 = vpack.c.b16 %v335, %v334
  %v377 = vpack.c.b16 %v337, %v336
  %v378 = vpack.c.b16 %v339, %v338
  %v379 = vpack.c.b16 %v341, %v340
  %v380 = vpack.c.b16 %v343, %v342
  %v381 = vpack.c.b16 %v345, %v344
  %v382 = vpack.c.b16 %v347, %v346
  %v383 = vpack.c.b16 %v349, %v348
  %v384 = vpack.c.b16 %v351, %v350
  %v385 = vpack.c.b16 %v353, %v352
  %v434 = vunpack.c.l.b16 %v210
  %v435 = vunpack.c.l.b16 %v211
  %v436 = vunpack.c.l.b16 %v212
  %v437 = vunpack.c.l.b16 %v213
  %v438 = vunpack.c.l.b16 %v214
  %v439 = vunpack.c.l.b16 %v215
  %v440 = vunpack.c.l.b16 %v216
  %v441 = vunpack.c.l.b16 %v217
  %v442 = vunpack.c.l.b16 %v218
  %v443 = vunpack.c.l.b16 %v219
  %v444 = vunpack.c.l.b16 %v220
  %v445 = vunpack.c.l.b16 %v221
  %v446 = vunpack.c.l.b16 %v222
  %v447 = vunpack.c.l.b16 %v223
  %v448 = vunpack.c.l.b16 %v224
  %v449 = vunpack.c.l.b16 %v225
  %v450 = vpack.c.b16 %v435, %v434
  %v451 = vpack.c.b16 %v437, %v436
  %v452 = vpack.c.b16 %v439, %v438
  %v453 = vpack.c.b16 %v441, %v440
  %v454 = vpack.c.b16 %v443, %v442
  %v455 = vpack.c.b16 %v445, %v444
  %v456 = vpack.c.b16 %v447, %v446
  %v457 = vpack.c.b16 %v449, %v448
  %466 = vmatprep.subr.bf16.mxu0 0
  %467 = vmatpush1.bf16.msra.mxu0 %v450
  %468 = vmatprep.subr.bf16.mxu0 0
  %469 = vmatpush1.bf16.msra.mxu0 %v451
  %470 = vmatprep.subr.bf16.mxu0 0
  %471 = vmatpush1.bf16.msra.mxu0 %v452
  %472 = vmatprep.subr.bf16.mxu0 0
  %473 = vmatpush1.bf16.msra.mxu0 %v453
  %474 = vmatprep.subr.bf16.mxu0 0
  %475 = vmatpush1.bf16.msra.mxu0 %v454
  %476 = vmatprep.subr.bf16.mxu0 0
  %477 = vmatpush1.bf16.msra.mxu0 %v455
  %478 = vmatprep.subr.bf16.mxu0 0
  %479 = vmatpush1.bf16.msra.mxu0 %v456
  %480 = vmatprep.subr.bf16.mxu0 0
  %481 = vmatpush1.bf16.msra.mxu0 %v457
  %482 = vmatprep.subr.bf16.mxu0 0
  %483 = vmatpush1.bf16.msra.mxu0 0
  %484 = vmatprep.subr.bf16.mxu0 0
  %485 = vmatpush1.bf16.msra.mxu0 0
  %486 = vmatprep.subr.bf16.mxu0 0
  %487 = vmatpush1.bf16.msra.mxu0 0
  %488 = vmatprep.subr.bf16.mxu0 0
  %489 = vmatpush1.bf16.msra.mxu0 0
  %490 = vmatprep.subr.bf16.mxu0 0
  %491 = vmatpush1.bf16.msra.mxu0 0
  %492 = vmatprep.subr.bf16.mxu0 0
  %493 = vmatpush1.bf16.msra.mxu0 0
  %494 = vmatprep.subr.bf16.mxu0 0
  %495 = vmatpush1.bf16.msra.mxu0 0
  %496 = vmatprep.subr.bf16.mxu0 0
  %497 = vmatpush1.bf16.msra.mxu0 0
  %498 = vmatprep.mubr.bf16.mxu0 0
  %499 = vmatmul.mubr.bf16.gmra.mrb[0].mxu0 %v354
  %v500 = vpop.f32.mrb[0].mxu0
  %v501 = vadd.f32 0.0, %v500
  %v502 = vpop.f32.mrb[0].mxu0
  %v503 = vpop.f32.mrb[0].mxu0
  %v504 = vadd.f32 0.0, %v503
  %v505 = vpop.f32.mrb[0].mxu0
  %506 = vmatprep.mubr.bf16.mxu0 0
  %507 = vmatmul.mubr.bf16.gmra.mrb[0].mxu0 %v355
  %v508 = vpop.f32.mrb[0].mxu0
  %v509 = vadd.f32 0.0, %v508
  %v510 = vpop.f32.mrb[0].mxu0
  %v511 = vpop.f32.mrb[0].mxu0
  %v512 = vadd.f32 0.0, %v511
  %v513 = vpop.f32.mrb[0].mxu0
  %514 = vmatprep.mubr.bf16.mxu0 0
  %515 = vmatmul.mubr.bf16.gmra.mrb[0].mxu0 %v356
  %v516 = vpop.f32.mrb[0].mxu0
  %v517 = vadd.f32 0.0, %v516
  %v518 = vpop.f32.mrb[0].mxu0
  %v519 = vpop.f32.mrb[0].mxu0
  %v520 = vadd.f32 0.0, %v519
  %v521 = vpop.f32.mrb[0].mxu0
  %522 = vmatprep.mubr.bf16.mxu0 0
  %523 = vmatmul.mubr.bf16.gmra.mrb[0].mxu0 %v357
  %v524 = vpop.f32.mrb[0].mxu0
  %v525 = vadd.f32 0.0, %v524
  %v526 = vpop.f32.mrb[0].mxu0
  %v527 = vpop.f32.mrb[0].mxu0
  %v528 = vadd.f32 0.0, %v527
  %v529 = vpop.f32.mrb[0].mxu0
  %530 = vmatprep.mubr.bf16.mxu0 0
  %531 = vmatmul.mubr.bf16.gmra.mrb[0].mxu0 %v358
  %v532 = vpop.f32.mrb[0].mxu0
  %v533 = vadd.f32 0.0, %v532
  %v534 = vpop.f32.mrb[0].mxu0
  %v535 = vpop.f32.mrb[0].mxu0
  %v536 = vadd.f32 0.0, %v535
  %v537 = vpop.f32.mrb[0].mxu0
  %538 = vmatprep.mubr.bf16.mxu0 0
  %539 = vmatmul.mubr.bf16.gmra.mrb[0].mxu0 %v359
  %v540 = vpop.f32.mrb[0].mxu0
  %v541 = vadd.f32 0.0, %v540
  %v542 = vpop.f32.mrb[0].mxu0
  %v543 = vpop.f32.mrb[0].mxu0
  %v544 = vadd.f32 0.0, %v543
  %v545 = vpop.f32.mrb[0].mxu0
  %546 = vmatprep.mubr.bf16.mxu0 0
  %547 = vmatmul.mubr.bf16.gmra.mrb[0].mxu0 %v360
  %v548 = vpop.f32.mrb[0].mxu0
  %v549 = vadd.f32 0.0, %v548
  %v550 = vpop.f32.mrb[0].mxu0
  %v551 = vpop.f32.mrb[0].mxu0
  %v552 = vadd.f32 0.0, %v551
  %v553 = vpop.f32.mrb[0].mxu0
  %554 = vmatprep.mubr.bf16.mxu0 0
  %555 = vmatmul.mubr.bf16.gmra.mrb[0].mxu0 %v361
  %v556 = vpop.f32.mrb[0].mxu0
  %v557 = vadd.f32 0.0, %v556
  %v558 = vpop.f32.mrb[0].mxu0
  %v559 = vpop.f32.mrb[0].mxu0
  %v560 = vadd.f32 0.0, %v559
  %v561 = vpop.f32.mrb[0].mxu0
  %562 = vmatprep.mubr.bf16.mxu0 0
  %563 = vmatmul.mubr.bf16.gmra.mrb[0].mxu0 %v362
  %v564 = vpop.f32.mrb[0].mxu0
  %v565 = vadd.f32 0.0, %v564
  %v566 = vpop.f32.mrb[0].mxu0
  %v567 = vpop.f32.mrb[0].mxu0
  %v568 = vadd.f32 0.0, %v567
  %v569 = vpop.f32.mrb[0].mxu0
  %570 = vmatprep.mubr.bf16.mxu0 0
  %571 = vmatmul.mubr.bf16.gmra.mrb[0].mxu0 %v363
  %v572 = vpop.f32.mrb[0].mxu0
  %v573 = vadd.f32 0.0, %v572
  %v574 = vpop.f32.mrb[0].mxu0
  %v575 = vpop.f32.mrb[0].mxu0
  %v576 = vadd.f32 0.0, %v575
  %v577 = vpop.f32.mrb[0].mxu0
  %578 = vmatprep.mubr.bf16.mxu0 0
  %579 = vmatmul.mubr.bf16.gmra.mrb[0].mxu0 %v364
  %v580 = vpop.f32.mrb[0].mxu0
  %v581 = vadd.f32 0.0, %v580
  %v582 = vpop.f32.mrb[0].mxu0
  %v583 = vpop.f32.mrb[0].mxu0
  %v584 = vadd.f32 0.0, %v583
  %v585 = vpop.f32.mrb[0].mxu0
  %586 = vmatprep.mubr.bf16.mxu0 0
  %587 = vmatmul.mubr.bf16.gmra.mrb[0].mxu0 %v365
  %v588 = vpop.f32.mrb[0].mxu0
  %v589 = vadd.f32 0.0, %v588
  %v590 = vpop.f32.mrb[0].mxu0
  %v591 = vpop.f32.mrb[0].mxu0
  %v592 = vadd.f32 0.0, %v591
  %v593 = vpop.f32.mrb[0].mxu0
  %594 = vmatprep.mubr.bf16.mxu0 0
  %595 = vmatmul.mubr.bf16.gmra.mrb[0].mxu0 %v366
  %v596 = vpop.f32.mrb[0].mxu0
  %v597 = vadd.f32 0.0, %v596
  %v598 = vpop.f32.mrb[0].mxu0
  %v599 = vpop.f32.mrb[0].mxu0
  %v600 = vadd.f32 0.0, %v599
  %v601 = vpop.f32.mrb[0].mxu0
  %602 = vmatprep.mubr.bf16.mxu0 0
  %603 = vmatmul.mubr.bf16.gmra.mrb[0].mxu0 %v367
  %v604 = vpop.f32.mrb[0].mxu0
  %v605 = vadd.f32 0.0, %v604
  %v606 = vpop.f32.mrb[0].mxu0
  %v607 = vpop.f32.mrb[0].mxu0
  %v608 = vadd.f32 0.0, %v607
  %v609 = vpop.f32.mrb[0].mxu0
  %610 = vmatprep.mubr.bf16.mxu0 0
  %611 = vmatmul.mubr.bf16.gmra.mrb[0].mxu0 %v368
  %v612 = vpop.f32.mrb[0].mxu0
  %v613 = vadd.f32 0.0, %v612
  %v614 = vpop.f32.mrb[0].mxu0
  %v615 = vpop.f32.mrb[0].mxu0
  %v616 = vadd.f32 0.0, %v615
  %v617 = vpop.f32.mrb[0].mxu0
  %618 = vmatprep.mubr.bf16.mxu0 0
  %619 = vmatmul.mubr.bf16.gmra.mrb[0].mxu0 %v369
  %v620 = vpop.f32.mrb[0].mxu0
  %v621 = vadd.f32 0.0, %v620
  %v622 = vpop.f32.mrb[0].mxu0
  %v623 = vpop.f32.mrb[0].mxu0
  %v624 = vadd.f32 0.0, %v623
  %v625 = vpop.f32.mrb[0].mxu0
  %626 = vmatprep.mubr.bf16.mxu0 0
  %627 = vmatmul.mubr.bf16.gmra.mrb[0].mxu0 %v370
  %v628 = vpop.f32.mrb[0].mxu0
  %v629 = vadd.f32 0.0, %v628
  %v630 = vpop.f32.mrb[0].mxu0
  %v631 = vpop.f32.mrb[0].mxu0
  %v632 = vadd.f32 0.0, %v631
  %v633 = vpop.f32.mrb[0].mxu0
  %634 = vmatprep.mubr.bf16.mxu0 0
  %635 = vmatmul.mubr.bf16.gmra.mrb[0].mxu0 %v371
  %v636 = vpop.f32.mrb[0].mxu0
  %v637 = vadd.f32 0.0, %v636
  %v638 = vpop.f32.mrb[0].mxu0
  %v639 = vpop.f32.mrb[0].mxu0
  %v640 = vadd.f32 0.0, %v639
  %v641 = vpop.f32.mrb[0].mxu0
  %642 = vmatprep.mubr.bf16.mxu0 0
  %643 = vmatmul.mubr.bf16.gmra.mrb[0].mxu0 %v372
  %v644 = vpop.f32.mrb[0].mxu0
  %v645 = vadd.f32 0.0, %v644
  %v646 = vpop.f32.mrb[0].mxu0
  %v647 = vpop.f32.mrb[0].mxu0
  %v648 = vadd.f32 0.0, %v647
  %v649 = vpop.f32.mrb[0].mxu0
  %650 = vmatprep.mubr.bf16.mxu0 0
  %651 = vmatmul.mubr.bf16.gmra.mrb[0].mxu0 %v373
  %v652 = vpop.f32.mrb[0].mxu0
  %v653 = vadd.f32 0.0, %v652
  %v654 = vpop.f32.mrb[0].mxu0
  %v655 = vpop.f32.mrb[0].mxu0
  %v656 = vadd.f32 0.0, %v655
  %v657 = vpop.f32.mrb[0].mxu0
  %658 = vmatprep.mubr.bf16.mxu0 0
  %659 = vmatmul.mubr.bf16.gmra.mrb[0].mxu0 %v374
  %v660 = vpop.f32.mrb[0].mxu0
  %v661 = vadd.f32 0.0, %v660
  %v662 = vpop.f32.mrb[0].mxu0
  %v663 = vpop.f32.mrb[0].mxu0
  %v664 = vadd.f32 0.0, %v663
  %v665 = vpop.f32.mrb[0].mxu0
  %666 = vmatprep.mubr.bf16.mxu0 0
  %667 = vmatmul.mubr.bf16.gmra.mrb[0].mxu0 %v375
  %v668 = vpop.f32.mrb[0].mxu0
  %v669 = vadd.f32 0.0, %v668
  %v670 = vpop.f32.mrb[0].mxu0
  %v671 = vpop.f32.mrb[0].mxu0
  %v672 = vadd.f32 0.0, %v671
  %v673 = vpop.f32.mrb[0].mxu0
  %674 = vmatprep.mubr.bf16.mxu0 0
  %675 = vmatmul.mubr.bf16.gmra.mrb[0].mxu0 %v376
  %v676 = vpop.f32.mrb[0].mxu0
  %v677 = vadd.f32 0.0, %v676
  %v678 = vpop.f32.mrb[0].mxu0
  %v679 = vpop.f32.mrb[0].mxu0
  %v680 = vadd.f32 0.0, %v679
  %v681 = vpop.f32.mrb[0].mxu0
  %682 = vmatprep.mubr.bf16.mxu0 0
  %683 = vmatmul.mubr.bf16.gmra.mrb[0].mxu0 %v377
  %v684 = vpop.f32.mrb[0].mxu0
  %v685 = vadd.f32 0.0, %v684
  %v686 = vpop.f32.mrb[0].mxu0
  %v687 = vpop.f32.mrb[0].mxu0
  %v688 = vadd.f32 0.0, %v687
  %v689 = vpop.f32.mrb[0].mxu0
  %690 = vmatprep.mubr.bf16.mxu0 0
  %691 = vmatmul.mubr.bf16.gmra.mrb[0].mxu0 %v378
  %v692 = vpop.f32.mrb[0].mxu0
  %v693 = vadd.f32 0.0, %v692
  %v694 = vpop.f32.mrb[0].mxu0
  %v695 = vpop.f32.mrb[0].mxu0
  %v696 = vadd.f32 0.0, %v695
  %v697 = vpop.f32.mrb[0].mxu0
  %698 = vmatprep.mubr.bf16.mxu0 0
  %699 = vmatmul.mubr.bf16.gmra.mrb[0].mxu0 %v379
  %v700 = vpop.f32.mrb[0].mxu0
  %v701 = vadd.f32 0.0, %v700
  %v702 = vpop.f32.mrb[0].mxu0
  %v703 = vpop.f32.mrb[0].mxu0
  %v704 = vadd.f32 0.0, %v703
  %v705 = vpop.f32.mrb[0].mxu0
  %706 = vmatprep.mubr.bf16.mxu0 0
  %707 = vmatmul.mubr.bf16.gmra.mrb[0].mxu0 %v380
  %v708 = vpop.f32.mrb[0].mxu0
  %v709 = vadd.f32 0.0, %v708
  %v710 = vpop.f32.mrb[0].mxu0
  %v711 = vpop.f32.mrb[0].mxu0
  %v712 = vadd.f32 0.0, %v711
  %v713 = vpop.f32.mrb[0].mxu0
  %714 = vmatprep.mubr.bf16.mxu0 0
  %715 = vmatmul.mubr.bf16.gmra.mrb[0].mxu0 %v381
  %v716 = vpop.f32.mrb[0].mxu0
  %v717 = vadd.f32 0.0, %v716
  %v718 = vpop.f32.mrb[0].mxu0
  %v719 = vpop.f32.mrb[0].mxu0
  %v720 = vadd.f32 0.0, %v719
  %v721 = vpop.f32.mrb[0].mxu0
  %722 = vmatprep.mubr.bf16.mxu0 0
  %723 = vmatmul.mubr.bf16.gmra.mrb[0].mxu0 %v382
  %v724 = vpop.f32.mrb[0].mxu0
  %v725 = vadd.f32 0.0, %v724
  %v726 = vpop.f32.mrb[0].mxu0
  %v727 = vpop.f32.mrb[0].mxu0
  %v728 = vadd.f32 0.0, %v727
  %v729 = vpop.f32.mrb[0].mxu0
  %730 = vmatprep.mubr.bf16.mxu0 0
  %731 = vmatmul.mubr.bf16.gmra.mrb[0].mxu0 %v383
  %v732 = vpop.f32.mrb[0].mxu0
  %v733 = vadd.f32 0.0, %v732
  %v734 = vpop.f32.mrb[0].mxu0
  %v735 = vpop.f32.mrb[0].mxu0
  %v736 = vadd.f32 0.0, %v735
  %v737 = vpop.f32.mrb[0].mxu0
  %738 = vmatprep.mubr.bf16.mxu0 0
  %739 = vmatmul.mubr.bf16.gmra.mrb[0].mxu0 %v384
  %v740 = vpop.f32.mrb[0].mxu0
  %v741 = vadd.f32 0.0, %v740
  %v742 = vpop.f32.mrb[0].mxu0
  %v743 = vpop.f32.mrb[0].mxu0
  %v744 = vadd.f32 0.0, %v743
  %v745 = vpop.f32.mrb[0].mxu0
  %746 = vmatprep.mubr.bf16.mxu0 0
  %747 = vmatmul.mubr.bf16.gmra.mrb[0].mxu0 %v385
  %v748 = vpop.f32.mrb[0].mxu0
  %v749 = vadd.f32 0.0, %v748
  %v750 = vpop.f32.mrb[0].mxu0
  %v751 = vpop.f32.mrb[0].mxu0
  %v752 = vadd.f32 0.0, %v751
  %v753 = vpop.f32.mrb[0].mxu0
  %754 = vdwg.mxu0
  %v755 = vadd.f32 %v146, %v501
  %v756 = vadd.f32 %v147, %v504
  %v757 = vadd.f32 %v148, %v509
  %v758 = vadd.f32 %v149, %v512
  %v759 = vadd.f32 %v150, %v517
  %v760 = vadd.f32 %v151, %v520
  %v761 = vadd.f32 %v152, %v525
  %v762 = vadd.f32 %v153, %v528
  %v763 = vadd.f32 %v154, %v533
  %v764 = vadd.f32 %v155, %v536
  %v765 = vadd.f32 %v156, %v541
  %v766 = vadd.f32 %v157, %v544
  %v767 = vadd.f32 %v158, %v549
  %v768 = vadd.f32 %v159, %v552
  %v769 = vadd.f32 %v160, %v557
  %v770 = vadd.f32 %v161, %v560
  %v771 = vadd.f32 %v162, %v565
  %v772 = vadd.f32 %v163, %v568
  %v773 = vadd.f32 %v164, %v573
  %v774 = vadd.f32 %v165, %v576
  %v775 = vadd.f32 %v166, %v581
  %v776 = vadd.f32 %v167, %v584
  %v777 = vadd.f32 %v168, %v589
  %v778 = vadd.f32 %v169, %v592
  %v779 = vadd.f32 %v170, %v597
  %v780 = vadd.f32 %v171, %v600
  %v781 = vadd.f32 %v172, %v605
  %v782 = vadd.f32 %v173, %v608
  %v783 = vadd.f32 %v174, %v613
  %v784 = vadd.f32 %v175, %v616
  %v785 = vadd.f32 %v176, %v621
  %v786 = vadd.f32 %v177, %v624
  %v787 = vadd.f32 %v178, %v629
  %v788 = vadd.f32 %v179, %v632
  %v789 = vadd.f32 %v180, %v637
  %v790 = vadd.f32 %v181, %v640
  %v791 = vadd.f32 %v182, %v645
  %v792 = vadd.f32 %v183, %v648
  %v793 = vadd.f32 %v184, %v653
  %v794 = vadd.f32 %v185, %v656
  %v795 = vadd.f32 %v186, %v661
  %v796 = vadd.f32 %v187, %v664
  %v797 = vadd.f32 %v188, %v669
  %v798 = vadd.f32 %v189, %v672
  %v799 = vadd.f32 %v190, %v677
  %v800 = vadd.f32 %v191, %v680
  %v801 = vadd.f32 %v192, %v685
  %v802 = vadd.f32 %v193, %v688
  %v803 = vadd.f32 %v194, %v693
  %v804 = vadd.f32 %v195, %v696
  %v805 = vadd.f32 %v196, %v701
  %v806 = vadd.f32 %v197, %v704
  %v807 = vadd.f32 %v198, %v709
  %v808 = vadd.f32 %v199, %v712
  %v809 = vadd.f32 %v200, %v717
  %v810 = vadd.f32 %v201, %v720
  %v811 = vadd.f32 %v202, %v725
  %v812 = vadd.f32 %v203, %v728
  %v813 = vadd.f32 %v204, %v733
  %v814 = vadd.f32 %v205, %v736
  %v815 = vadd.f32 %v206, %v741
  %v816 = vadd.f32 %v207, %v744
  %v817 = vadd.f32 %v208, %v749
  %v818 = vadd.f32 %v209, %v752
  %819 = vst [vmem:[#allocation2] sm:$0xff] %v755
  %820 = vst [vmem:[#allocation2 + $0x8] sm:$0xff] %v756
  %821 = vst [vmem:[#allocation2 + $0x10] sm:$0xff] %v757
  %822 = vst [vmem:[#allocation2 + $0x18] sm:$0xff] %v758
  %823 = vst [vmem:[#allocation2 + $0x20] sm:$0xff] %v759
  %824 = vst [vmem:[#allocation2 + $0x28] sm:$0xff] %v760
  %825 = vst [vmem:[#allocation2 + $0x30] sm:$0xff] %v761
  %826 = vst [vmem:[#allocation2 + $0x38] sm:$0xff] %v762
  %827 = vst [vmem:[#allocation2 + $0x40] sm:$0xff] %v763
  %828 = vst [vmem:[#allocation2 + $0x48] sm:$0xff] %v764
  %829 = vst [vmem:[#allocation2 + $0x50] sm:$0xff] %v765
  %830 = vst [vmem:[#allocation2 + $0x58] sm:$0xff] %v766
  %831 = vst [vmem:[#allocation2 + $0x60] sm:$0xff] %v767
  %832 = vst [vmem:[#allocation2 + $0x68] sm:$0xff] %v768
  %833 = vst [vmem:[#allocation2 + $0x70] sm:$0xff] %v769
  %834 = vst [vmem:[#allocation2 + $0x78] sm:$0xff] %v770
  %835 = vst [vmem:[#allocation2 + $0x80] sm:$0xff] %v771
  %836 = vst [vmem:[#allocation2 + $0x88] sm:$0xff] %v772
  %837 = vst [vmem:[#allocation2 + $0x90] sm:$0xff] %v773
  %838 = vst [vmem:[#allocation2 + $0x98] sm:$0xff] %v774
  %839 = vst [vmem:[#allocation2 + $0xa0] sm:$0xff] %v775
  %840 = vst [vmem:[#allocation2 + $0xa8] sm:$0xff] %v776
  %841 = vst [vmem:[#allocation2 + $0xb0] sm:$0xff] %v777
  %842 = vst [vmem:[#allocation2 + $0xb8] sm:$0xff] %v778
  %843 = vst [vmem:[#allocation2 + $0xc0] sm:$0xff] %v779
  %844 = vst [vmem:[#allocation2 + $0xc8] sm:$0xff] %v780
  %845 = vst [vmem:[#allocation2 + $0xd0] sm:$0xff] %v781
  %846 = vst [vmem:[#allocation2 + $0xd8] sm:$0xff] %v782
  %847 = vst [vmem:[#allocation2 + $0xe0] sm:$0xff] %v783
  %848 = vst [vmem:[#allocation2 + $0xe8] sm:$0xff] %v784
  %849 = vst [vmem:[#allocation2 + $0xf0] sm:$0xff] %v785
  %850 = vst [vmem:[#allocation2 + $0xf8] sm:$0xff] %v786
  %851 = vst [vmem:[#allocation2 + $0x100] sm:$0xff] %v787
  %852 = vst [vmem:[#allocation2 + $0x108] sm:$0xff] %v788
  %853 = vst [vmem:[#allocation2 + $0x110] sm:$0xff] %v789
  %854 = vst [vmem:[#allocation2 + $0x118] sm:$0xff] %v790
  %855 = vst [vmem:[#allocation2 + $0x120] sm:$0xff] %v791
  %856 = vst [vmem:[#allocation2 + $0x128] sm:$0xff] %v792
  %857 = vst [vmem:[#allocation2 + $0x130] sm:$0xff] %v793
  %858 = vst [vmem:[#allocation2 + $0x138] sm:$0xff] %v794
  %859 = vst [vmem:[#allocation2 + $0x140] sm:$0xff] %v795
  %860 = vst [vmem:[#allocation2 + $0x148] sm:$0xff] %v796
  %861 = vst [vmem:[#allocation2 + $0x150] sm:$0xff] %v797
  %862 = vst [vmem:[#allocation2 + $0x158] sm:$0xff] %v798
  %863 = vst [vmem:[#allocation2 + $0x160] sm:$0xff] %v799
  %864 = vst [vmem:[#allocation2 + $0x168] sm:$0xff] %v800
  %865 = vst [vmem:[#allocation2 + $0x170] sm:$0xff] %v801
  %866 = vst [vmem:[#allocation2 + $0x178] sm:$0xff] %v802
  %867 = vst [vmem:[#allocation2 + $0x180] sm:$0xff] %v803
  %868 = vst [vmem:[#allocation2 + $0x188] sm:$0xff] %v804
  %869 = vst [vmem:[#allocation2 + $0x190] sm:$0xff] %v805
  %870 = vst [vmem:[#allocation2 + $0x198] sm:$0xff] %v806
  %871 = vst [vmem:[#allocation2 + $0x1a0] sm:$0xff] %v807
  %872 = vst [vmem:[#allocation2 + $0x1a8] sm:$0xff] %v808
  %873 = vst [vmem:[#allocation2 + $0x1b0] sm:$0xff] %v809
  %874 = vst [vmem:[#allocation2 + $0x1b8] sm:$0xff] %v810
  %875 = vst [vmem:[#allocation2 + $0x1c0] sm:$0xff] %v811
  %876 = vst [vmem:[#allocation2 + $0x1c8] sm:$0xff] %v812
  %877 = vst [vmem:[#allocation2 + $0x1d0] sm:$0xff] %v813
  %878 = vst [vmem:[#allocation2 + $0x1d8] sm:$0xff] %v814
  %879 = vst [vmem:[#allocation2 + $0x1e0] sm:$0xff] %v815
  %880 = vst [vmem:[#allocation2 + $0x1e8] sm:$0xff] %v816
  %881 = vst [vmem:[#allocation2 + $0x1f0] sm:$0xff] %v817
  %882 = vst [vmem:[#allocation2 + $0x1f8] sm:$0xff] %v818
  // Predicated region
  $region14: #{bottleneck_forward.6} parent=0 // pred_check
    %p883 = pneg %p14
  $region15: #{bottleneck_forward.6} parent=0 // pred_check_branch
    %885 = sbr.rel (%p883) target = $region17
  $region16: #{bottleneck_forward.6} parent=0 // pred_region
    %v886 = vld [vmem:[#allocation2] sm:$0xff]
    %v887 = vld [vmem:[#allocation2 + $0x8] sm:$0xff]
    %v888 = vld [vmem:[#allocation2 + $0x10] sm:$0xff]
    %v889 = vld [vmem:[#allocation2 + $0x18] sm:$0xff]
    %v890 = vld [vmem:[#allocation2 + $0x20] sm:$0xff]
    %v891 = vld [vmem:[#allocation2 + $0x28] sm:$0xff]
    %v892 = vld [vmem:[#allocation2 + $0x30] sm:$0xff]
    %v893 = vld [vmem:[#allocation2 + $0x38] sm:$0xff]
    %v894 = vld [vmem:[#allocation2 + $0x40] sm:$0xff]
    %v895 = vld [vmem:[#allocation2 + $0x48] sm:$0xff]
    %v896 = vld [vmem:[#allocation2 + $0x50] sm:$0xff]
    %v897 = vld [vmem:[#allocation2 + $0x58] sm:$0xff]
    %v898 = vld [vmem:[#allocation2 + $0x60] sm:$0xff]
    %v899 = vld [vmem:[#allocation2 + $0x68] sm:$0xff]
    %v900 = vld [vmem:[#allocation2 + $0x70] sm:$0xff]
    %v901 = vld [vmem:[#allocation2 + $0x78] sm:$0xff]
    %v902 = vld [vmem:[#allocation2 + $0x80] sm:$0xff]
    %v903 = vld [vmem:[#allocation2 + $0x88] sm:$0xff]
    %v904 = vld [vmem:[#allocation2 + $0x90] sm:$0xff]
    %v905 = vld [vmem:[#allocation2 + $0x98] sm:$0xff]
    %v906 = vld [vmem:[#allocation2 + $0xa0] sm:$0xff]
    %v907 = vld [vmem:[#allocation2 + $0xa8] sm:$0xff]
    %v908 = vld [vmem:[#allocation2 + $0xb0] sm:$0xff]
    %v909 = vld [vmem:[#allocation2 + $0xb8] sm:$0xff]
    %v910 = vld [vmem:[#allocation2 + $0xc0] sm:$0xff]
    %v911 = vld [vmem:[#allocation2 + $0xc8] sm:$0xff]
    %v912 = vld [vmem:[#allocation2 + $0xd0] sm:$0xff]
    %v913 = vld [vmem:[#allocation2 + $0xd8] sm:$0xff]
    %v914 = vld [vmem:[#allocation2 + $0xe0] sm:$0xff]
    %v915 = vld [vmem:[#allocation2 + $0xe8] sm:$0xff]
    %v916 = vld [vmem:[#allocation2 + $0xf0] sm:$0xff]
    %v917 = vld [vmem:[#allocation2 + $0xf8] sm:$0xff]
    %v918 = vld [vmem:[#allocation2 + $0x100] sm:$0xff]
    %v919 = vld [vmem:[#allocation2 + $0x108] sm:$0xff]
    %v920 = vld [vmem:[#allocation2 + $0x110] sm:$0xff]
    %v921 = vld [vmem:[#allocation2 + $0x118] sm:$0xff]
    %v922 = vld [vmem:[#allocation2 + $0x120] sm:$0xff]
    %v923 = vld [vmem:[#allocation2 + $0x128] sm:$0xff]
    %v924 = vld [vmem:[#allocation2 + $0x130] sm:$0xff]
    %v925 = vld [vmem:[#allocation2 + $0x138] sm:$0xff]
    %v926 = vld [vmem:[#allocation2 + $0x140] sm:$0xff]
    %v927 = vld [vmem:[#allocation2 + $0x148] sm:$0xff]
    %v928 = vld [vmem:[#allocation2 + $0x150] sm:$0xff]
    %v929 = vld [vmem:[#allocation2 + $0x158] sm:$0xff]
    %v930 = vld [vmem:[#allocation2 + $0x160] sm:$0xff]
    %v931 = vld [vmem:[#allocation2 + $0x168] sm:$0xff]
    %v932 = vld [vmem:[#allocation2 + $0x170] sm:$0xff]
    %v933 = vld [vmem:[#allocation2 + $0x178] sm:$0xff]
    %v934 = vld [vmem:[#allocation2 + $0x180] sm:$0xff]
    %v935 = vld [vmem:[#allocation2 + $0x188] sm:$0xff]
    %v936 = vld [vmem:[#allocation2 + $0x190] sm:$0xff]
    %v937 = vld [vmem:[#allocation2 + $0x198] sm:$0xff]
    %v938 = vld [vmem:[#allocation2 + $0x1a0] sm:$0xff]
    %v939 = vld [vmem:[#allocation2 + $0x1a8] sm:$0xff]
    %v940 = vld [vmem:[#allocation2 + $0x1b0] sm:$0xff]
    %v941 = vld [vmem:[#allocation2 + $0x1b8] sm:$0xff]
    %v942 = vld [vmem:[#allocation2 + $0x1c0] sm:$0xff]
    %v943 = vld [vmem:[#allocation2 + $0x1c8] sm:$0xff]
    %v944 = vld [vmem:[#allocation2 + $0x1d0] sm:$0xff]
    %v945 = vld [vmem:[#allocation2 + $0x1d8] sm:$0xff]
    %v946 = vld [vmem:[#allocation2 + $0x1e0] sm:$0xff]
    %v947 = vld [vmem:[#allocation2 + $0x1e8] sm:$0xff]
    %v948 = vld [vmem:[#allocation2 + $0x1f0] sm:$0xff]
    %v949 = vld [vmem:[#allocation2 + $0x1f8] sm:$0xff]
    %v950 = vpack.c.bf16 %v887, %v886
    %v951 = vpack.c.bf16 %v889, %v888
    %v952 = vpack.c.bf16 %v891, %v890
    %v953 = vpack.c.bf16 %v893, %v892
    %v954 = vpack.c.bf16 %v895, %v894
    %v955 = vpack.c.bf16 %v897, %v896
    %v956 = vpack.c.bf16 %v899, %v898
    %v957 = vpack.c.bf16 %v901, %v900
    %v958 = vpack.c.bf16 %v903, %v902
    %v959 = vpack.c.bf16 %v905, %v904
    %v960 = vpack.c.bf16 %v907, %v906
    %v961 = vpack.c.bf16 %v909, %v908
    %v962 = vpack.c.bf16 %v911, %v910
    %v963 = vpack.c.bf16 %v913, %v912
    %v964 = vpack.c.bf16 %v915, %v914
    %v965 = vpack.c.bf16 %v917, %v916
    %v966 = vpack.c.bf16 %v919, %v918
    %v967 = vpack.c.bf16 %v921, %v920
    %v968 = vpack.c.bf16 %v923, %v922
    %v969 = vpack.c.bf16 %v925, %v924
    %v970 = vpack.c.bf16 %v927, %v926
    %v971 = vpack.c.bf16 %v929, %v928
    %v972 = vpack.c.bf16 %v931, %v930
    %v973 = vpack.c.bf16 %v933, %v932
    %v974 = vpack.c.bf16 %v935, %v934
    %v975 = vpack.c.bf16 %v937, %v936
    %v976 = vpack.c.bf16 %v939, %v938
    %v977 = vpack.c.bf16 %v941, %v940
    %v978 = vpack.c.bf16 %v943, %v942
    %v979 = vpack.c.bf16 %v945, %v944
    %v980 = vpack.c.bf16 %v947, %v946
    %v981 = vpack.c.bf16 %v949, %v948
    %v1014 = vunpack.c.l.b16 %v950
    %v1015 = vunpack.c.h.b16 %v950
    %v1016 = vunpack.c.l.b16 %v951
    %v1017 = vunpack.c.h.b16 %v951
    %v1018 = vunpack.c.l.b16 %v952
    %v1019 = vunpack.c.h.b16 %v952
    %v1020 = vunpack.c.l.b16 %v953
    %v1021 = vunpack.c.h.b16 %v953
    %v1022 = vunpack.c.l.b16 %v954
    %v1023 = vunpack.c.h.b16 %v954
    %v1024 = vunpack.c.l.b16 %v955
    %v1025 = vunpack.c.h.b16 %v955
    %v1026 = vunpack.c.l.b16 %v956
    %v1027 = vunpack.c.h.b16 %v956
    %v1028 = vunpack.c.l.b16 %v957
    %v1029 = vunpack.c.h.b16 %v957
    %v1030 = vunpack.c.l.b16 %v958
    %v1031 = vunpack.c.h.b16 %v958
    %v1032 = vunpack.c.l.b16 %v959
    %v1033 = vunpack.c.h.b16 %v959
    %v1034 = vunpack.c.l.b16 %v960
    %v1035 = vunpack.c.h.b16 %v960
    %v1036 = vunpack.c.l.b16 %v961
    %v1037 = vunpack.c.h.b16 %v961
    %v1038 = vunpack.c.l.b16 %v962
    %v1039 = vunpack.c.h.b16 %v962
    %v1040 = vunpack.c.l.b16 %v963
    %v1041 = vunpack.c.h.b16 %v963
    %v1042 = vunpack.c.l.b16 %v964
    %v1043 = vunpack.c.h.b16 %v964
    %v1044 = vunpack.c.l.b16 %v965
    %v1045 = vunpack.c.h.b16 %v965
    %v1046 = vunpack.c.l.b16 %v966
    %v1047 = vunpack.c.h.b16 %v966
    %v1048 = vunpack.c.l.b16 %v967
    %v1049 = vunpack.c.h.b16 %v967
    %v1050 = vunpack.c.l.b16 %v968
    %v1051 = vunpack.c.h.b16 %v968
    %v1052 = vunpack.c.l.b16 %v969
    %v1053 = vunpack.c.h.b16 %v969
    %v1054 = vunpack.c.l.b16 %v970
    %v1055 = vunpack.c.h.b16 %v970
    %v1056 = vunpack.c.l.b16 %v971
    %v1057 = vunpack.c.h.b16 %v971
    %v1058 = vunpack.c.l.b16 %v972
    %v1059 = vunpack.c.h.b16 %v972
    %v1060 = vunpack.c.l.b16 %v973
    %v1061 = vunpack.c.h.b16 %v973
    %v1062 = vunpack.c.l.b16 %v974
    %v1063 = vunpack.c.h.b16 %v974
    %v1064 = vunpack.c.l.b16 %v975
    %v1065 = vunpack.c.h.b16 %v975
    %v1066 = vunpack.c.l.b16 %v976
    %v1067 = vunpack.c.h.b16 %v976
    %v1068 = vunpack.c.l.b16 %v977
    %v1069 = vunpack.c.h.b16 %v977
    %v1070 = vunpack.c.l.b16 %v978
    %v1071 = vunpack.c.h.b16 %v978
    %v1072 = vunpack.c.l.b16 %v979
    %v1073 = vunpack.c.h.b16 %v979
    %v1074 = vunpack.c.l.b16 %v980
    %v1075 = vunpack.c.h.b16 %v980
    %v1076 = vunpack.c.l.b16 %v981
    %v1077 = vunpack.c.h.b16 %v981
    %v1078 = vpack.c.b16 %v1014, %v1014
    %v1079 = vpack.c.b16 %v1015, %v1015
    %v1080 = vpack.c.b16 %v1016, %v1016
    %v1081 = vpack.c.b16 %v1017, %v1017
    %v1082 = vpack.c.b16 %v1018, %v1018
    %v1083 = vpack.c.b16 %v1019, %v1019
    %v1084 = vpack.c.b16 %v1020, %v1020
    %v1085 = vpack.c.b16 %v1021, %v1021
    %v1086 = vpack.c.b16 %v1022, %v1022
    %v1087 = vpack.c.b16 %v1023, %v1023
    %v1088 = vpack.c.b16 %v1024, %v1024
    %v1089 = vpack.c.b16 %v1025, %v1025
    %v1090 = vpack.c.b16 %v1026, %v1026
    %v1091 = vpack.c.b16 %v1027, %v1027
    %v1092 = vpack.c.b16 %v1028, %v1028
    %v1093 = vpack.c.b16 %v1029, %v1029
    %v1094 = vpack.c.b16 %v1030, %v1030
    %v1095 = vpack.c.b16 %v1031, %v1031
    %v1096 = vpack.c.b16 %v1032, %v1032
    %v1097 = vpack.c.b16 %v1033, %v1033
    %v1098 = vpack.c.b16 %v1034, %v1034
    %v1099 = vpack.c.b16 %v1035, %v1035
    %v1100 = vpack.c.b16 %v1036, %v1036
    %v1101 = vpack.c.b16 %v1037, %v1037
    %v1102 = vpack.c.b16 %v1038, %v1038
    %v1103 = vpack.c.b16 %v1039, %v1039
    %v1104 = vpack.c.b16 %v1040, %v1040
    %v1105 = vpack.c.b16 %v1041, %v1041
    %v1106 = vpack.c.b16 %v1042, %v1042
    %v1107 = vpack.c.b16 %v1043, %v1043
    %v1108 = vpack.c.b16 %v1044, %v1044
    %v1109 = vpack.c.b16 %v1045, %v1045
    %v1110 = vpack.c.b16 %v1046, %v1046
    %v1111 = vpack.c.b16 %v1047, %v1047
    %v1112 = vpack.c.b16 %v1048, %v1048
    %v1113 = vpack.c.b16 %v1049, %v1049
    %v1114 = vpack.c.b16 %v1050, %v1050
    %v1115 = vpack.c.b16 %v1051, %v1051
    %v1116 = vpack.c.b16 %v1052, %v1052
    %v1117 = vpack.c.b16 %v1053, %v1053
    %v1118 = vpack.c.b16 %v1054, %v1054
    %v1119 = vpack.c.b16 %v1055, %v1055
    %v1120 = vpack.c.b16 %v1056, %v1056
    %v1121 = vpack.c.b16 %v1057, %v1057
    %v1122 = vpack.c.b16 %v1058, %v1058
    %v1123 = vpack.c.b16 %v1059, %v1059
    %v1124 = vpack.c.b16 %v1060, %v1060
    %v1125 = vpack.c.b16 %v1061, %v1061
    %v1126 = vpack.c.b16 %v1062, %v1062
    %v1127 = vpack.c.b16 %v1063, %v1063
    %v1128 = vpack.c.b16 %v1064, %v1064
    %v1129 = vpack.c.b16 %v1065, %v1065
    %v1130 = vpack.c.b16 %v1066, %v1066
    %v1131 = vpack.c.b16 %v1067, %v1067
    %v1132 = vpack.c.b16 %v1068, %v1068
    %v1133 = vpack.c.b16 %v1069, %v1069
    %v1134 = vpack.c.b16 %v1070, %v1070
    %v1135 = vpack.c.b16 %v1071, %v1071
    %v1136 = vpack.c.b16 %v1072, %v1072
    %v1137 = vpack.c.b16 %v1073, %v1073
    %v1138 = vpack.c.b16 %v1074, %v1074
    %v1139 = vpack.c.b16 %v1075, %v1075
    %v1140 = vpack.c.b16 %v1076, %v1076
    %v1141 = vpack.c.b16 %v1077, %v1077
    %1206 = vst [vmem:[%s2] sm:$0xf] %v1078
    %1207 = vst [vmem:[%s2 + $0x4] sm:$0xf] %v1079
    %1208 = vst [vmem:[%s2 + $0x8] sm:$0xf] %v1080
    %1209 = vst [vmem:[%s2 + $0xc] sm:$0xf] %v1081
    %1210 = vst [vmem:[%s2 + $0x10] sm:$0xf] %v1082
    %1211 = vst [vmem:[%s2 + $0x14] sm:$0xf] %v1083
    %1212 = vst [vmem:[%s2 + $0x18] sm:$0xf] %v1084
    %1213 = vst [vmem:[%s2 + $0x1c] sm:$0xf] %v1085
    %1214 = vst [vmem:[%s2 + $0x20] sm:$0xf] %v1086
    %1215 = vst [vmem:[%s2 + $0x24] sm:$0xf] %v1087
    %1216 = vst [vmem:[%s2 + $0x28] sm:$0xf] %v1088
    %1217 = vst [vmem:[%s2 + $0x2c] sm:$0xf] %v1089
    %1218 = vst [vmem:[%s2 + $0x30] sm:$0xf] %v1090
    %1219 = vst [vmem:[%s2 + $0x34] sm:$0xf] %v1091
    %1220 = vst [vmem:[%s2 + $0x38] sm:$0xf] %v1092
    %1221 = vst [vmem:[%s2 + $0x3c] sm:$0xf] %v1093
    %1222 = vst [vmem:[%s2 + $0x40] sm:$0xf] %v1094
    %1223 = vst [vmem:[%s2 + $0x44] sm:$0xf] %v1095
    %1224 = vst [vmem:[%s2 + $0x48] sm:$0xf] %v1096
    %1225 = vst [vmem:[%s2 + $0x4c] sm:$0xf] %v1097
    %1226 = vst [vmem:[%s2 + $0x50] sm:$0xf] %v1098
    %1227 = vst [vmem:[%s2 + $0x54] sm:$0xf] %v1099
    %1228 = vst [vmem:[%s2 + $0x58] sm:$0xf] %v1100
    %1229 = vst [vmem:[%s2 + $0x5c] sm:$0xf] %v1101
    %1230 = vst [vmem:[%s2 + $0x60] sm:$0xf] %v1102
    %1231 = vst [vmem:[%s2 + $0x64] sm:$0xf] %v1103
    %1232 = vst [vmem:[%s2 + $0x68] sm:$0xf] %v1104
    %1233 = vst [vmem:[%s2 + $0x6c] sm:$0xf] %v1105
    %1234 = vst [vmem:[%s2 + $0x70] sm:$0xf] %v1106
    %1235 = vst [vmem:[%s2 + $0x74] sm:$0xf] %v1107
    %1236 = vst [vmem:[%s2 + $0x78] sm:$0xf] %v1108
    %1237 = vst [vmem:[%s2 + $0x7c] sm:$0xf] %v1109
    %1238 = vst [vmem:[%s2 + $0x80] sm:$0xf] %v1110
    %1239 = vst [vmem:[%s2 + $0x84] sm:$0xf] %v1111
    %1240 = vst [vmem:[%s2 + $0x88] sm:$0xf] %v1112
    %1241 = vst [vmem:[%s2 + $0x8c] sm:$0xf] %v1113
    %1242 = vst [vmem:[%s2 + $0x90] sm:$0xf] %v1114
    %1243 = vst [vmem:[%s2 + $0x94] sm:$0xf] %v1115
    %1244 = vst [vmem:[%s2 + $0x98] sm:$0xf] %v1116
    %1245 = vst [vmem:[%s2 + $0x9c] sm:$0xf] %v1117
    %1246 = vst [vmem:[%s2 + $0xa0] sm:$0xf] %v1118
    %1247 = vst [vmem:[%s2 + $0xa4] sm:$0xf] %v1119
    %1248 = vst [vmem:[%s2 + $0xa8] sm:$0xf] %v1120
    %1249 = vst [vmem:[%s2 + $0xac] sm:$0xf] %v1121
    %1250 = vst [vmem:[%s2 + $0xb0] sm:$0xf] %v1122
    %1251 = vst [vmem:[%s2 + $0xb4] sm:$0xf] %v1123
    %1252 = vst [vmem:[%s2 + $0xb8] sm:$0xf] %v1124
    %1253 = vst [vmem:[%s2 + $0xbc] sm:$0xf] %v1125
    %1254 = vst [vmem:[%s2 + $0xc0] sm:$0xf] %v1126
    %1255 = vst [vmem:[%s2 + $0xc4] sm:$0xf] %v1127
    %1256 = vst [vmem:[%s2 + $0xc8] sm:$0xf] %v1128
    %1257 = vst [vmem:[%s2 + $0xcc] sm:$0xf] %v1129
    %1258 = vst [vmem:[%s2 + $0xd0] sm:$0xf] %v1130
    %1259 = vst [vmem:[%s2 + $0xd4] sm:$0xf] %v1131
    %1260 = vst [vmem:[%s2 + $0xd8] sm:$0xf] %v1132
    %1261 = vst [vmem:[%s2 + $0xdc] sm:$0xf] %v1133
    %1262 = vst [vmem:[%s2 + $0xe0] sm:$0xf] %v1134
    %1263 = vst [vmem:[%s2 + $0xe4] sm:$0xf] %v1135
    %1264 = vst [vmem:[%s2 + $0xe8] sm:$0xf] %v1136
    %1265 = vst [vmem:[%s2 + $0xec] sm:$0xf] %v1137
    %1266 = vst [vmem:[%s2 + $0xf0] sm:$0xf] %v1138
    %1267 = vst [vmem:[%s2 + $0xf4] sm:$0xf] %v1139
    %1268 = vst [vmem:[%s2 + $0xf8] sm:$0xf] %v1140
    %1269 = vst [vmem:[%s2 + $0xfc] sm:$0xf] %v1141
    %v1270 = vadd.f32 %v886, %v887
    %v1271 = vadd.f32 %v1270, %v888
    %v1272 = vadd.f32 %v1271, %v889
    %v1273 = vadd.f32 %v1272, %v890
    %v1274 = vadd.f32 %v1273, %v891
    %v1275 = vadd.f32 %v1274, %v892
    %v1276 = vadd.f32 %v1275, %v893
    %v1277 = vadd.f32 %v1276, %v894
    %v1278 = vadd.f32 %v1277, %v895
    %v1279 = vadd.f32 %v1278, %v896
    %v1280 = vadd.f32 %v1279, %v897
    %v1281 = vadd.f32 %v1280, %v898
    %v1282 = vadd.f32 %v1281, %v899
    %v1283 = vadd.f32 %v1282, %v900
    %v1284 = vadd.f32 %v1283, %v901
    %v1285 = vadd.f32 %v1284, %v902
    %v1286 = vadd.f32 %v1285, %v903
    %v1287 = vadd.f32 %v1286, %v904
    %v1288 = vadd.f32 %v1287, %v905
    %v1289 = vadd.f32 %v1288, %v906
    %v1290 = vadd.f32 %v1289, %v907
    %v1291 = vadd.f32 %v1290, %v908
    %v1292 = vadd.f32 %v1291, %v909
    %v1293 = vadd.f32 %v1292, %v910
    %v1294 = vadd.f32 %v1293, %v911
    %v1295 = vadd.f32 %v1294, %v912
    %v1296 = vadd.f32 %v1295, %v913
    %v1297 = vadd.f32 %v1296, %v914
    %v1298 = vadd.f32 %v1297, %v915
    %v1299 = vadd.f32 %v1298, %v916
    %v1300 = vadd.f32 %v1299, %v917
    %v1301 = vadd.f32 %v1300, %v918
    %v1302 = vadd.f32 %v1301, %v919
    %v1303 = vadd.f32 %v1302, %v920
    %v1304 = vadd.f32 %v1303, %v921
    %v1305 = vadd.f32 %v1304, %v922
    %v1306 = vadd.f32 %v1305, %v923
    %v1307 = vadd.f32 %v1306, %v924
    %v1308 = vadd.f32 %v1307, %v925
    %v1309 = vadd.f32 %v1308, %v926
    %v1310 = vadd.f32 %v1309, %v927
    %v1311 = vadd.f32 %v1310, %v928
    %v1312 = vadd.f32 %v1311, %v929
    %v1313 = vadd.f32 %v1312, %v930
    %v1314 = vadd.f32 %v1313, %v931
    %v1315 = vadd.f32 %v1314, %v932
    %v1316 = vadd.f32 %v1315, %v933
    %v1317 = vadd.f32 %v1316, %v934
    %v1318 = vadd.f32 %v1317, %v935
    %v1319 = vadd.f32 %v1318, %v936
    %v1320 = vadd.f32 %v1319, %v937
    %v1321 = vadd.f32 %v1320, %v938
    %v1322 = vadd.f32 %v1321, %v939
    %v1323 = vadd.f32 %v1322, %v940
    %v1324 = vadd.f32 %v1323, %v941
    %v1325 = vadd.f32 %v1324, %v942
    %v1326 = vadd.f32 %v1325, %v943
    %v1327 = vadd.f32 %v1326, %v944
    %v1328 = vadd.f32 %v1327, %v945
    %v1329 = vadd.f32 %v1328, %v946
    %v1330 = vadd.f32 %v1329, %v947
    %v1331 = vadd.f32 %v1330, %v948
    %v1332 = vadd.f32 %v1331, %v949
    %v1333 = vrot.slane %v1332, 4
    %v1334 = vadd.f32 %v1332, %v1333
    %v1335 = vrot.slane %v1334, 2
    %v1336 = vadd.f32 %v1334, %v1335
    %v1337 = vrot.slane %v1336, 1
    %v1338 = vadd.f32 %v1336, %v1337
    %v1339 = vmul.f32 %v886, %v886
    %v1340 = vmul.f32 %v887, %v887
    %v1341 = vmul.f32 %v888, %v888
    %v1342 = vmul.f32 %v889, %v889
    %v1343 = vmul.f32 %v890, %v890
    %v1344 = vmul.f32 %v891, %v891
    %v1345 = vmul.f32 %v892, %v892
    %v1346 = vmul.f32 %v893, %v893
    %v1347 = vmul.f32 %v894, %v894
    %v1348 = vmul.f32 %v895, %v895
    %v1349 = vmul.f32 %v896, %v896
    %v1350 = vmul.f32 %v897, %v897
    %v1351 = vmul.f32 %v898, %v898
    %v1352 = vmul.f32 %v899, %v899
    %v1353 = vmul.f32 %v900, %v900
    %v1354 = vmul.f32 %v901, %v901
    %v1355 = vmul.f32 %v902, %v902
    %v1356 = vmul.f32 %v903, %v903
    %v1357 = vmul.f32 %v904, %v904
    %v1358 = vmul.f32 %v905, %v905
    %v1359 = vmul.f32 %v906, %v906
    %v1360 = vmul.f32 %v907, %v907
    %v1361 = vmul.f32 %v908, %v908
    %v1362 = vmul.f32 %v909, %v909
    %v1363 = vmul.f32 %v910, %v910
    %v1364 = vmul.f32 %v911, %v911
    %v1365 = vmul.f32 %v912, %v912
    %v1366 = vmul.f32 %v913, %v913
    %v1367 = vmul.f32 %v914, %v914
    %v1368 = vmul.f32 %v915, %v915
    %v1369 = vmul.f32 %v916, %v916
    %v1370 = vmul.f32 %v917, %v917
    %v1371 = vmul.f32 %v918, %v918
    %v1372 = vmul.f32 %v919, %v919
    %v1373 = vmul.f32 %v920, %v920
    %v1374 = vmul.f32 %v921, %v921
    %v1375 = vmul.f32 %v922, %v922
    %v1376 = vmul.f32 %v923, %v923
    %v1377 = vmul.f32 %v924, %v924
    %v1378 = vmul.f32 %v925, %v925
    %v1379 = vmul.f32 %v926, %v926
    %v1380 = vmul.f32 %v927, %v927
    %v1381 = vmul.f32 %v928, %v928
    %v1382 = vmul.f32 %v929, %v929
    %v1383 = vmul.f32 %v930, %v930
    %v1384 = vmul.f32 %v931, %v931
    %v1385 = vmul.f32 %v932, %v932
    %v1386 = vmul.f32 %v933, %v933
    %v1387 = vmul.f32 %v934, %v934
    %v1388 = vmul.f32 %v935, %v935
    %v1389 = vmul.f32 %v936, %v936
    %v1390 = vmul.f32 %v937, %v937
    %v1391 = vmul.f32 %v938, %v938
    %v1392 = vmul.f32 %v939, %v939
    %v1393 = vmul.f32 %v940, %v940
    %v1394 = vmul.f32 %v941, %v941
    %v1395 = vmul.f32 %v942, %v942
    %v1396 = vmul.f32 %v943, %v943
    %v1397 = vmul.f32 %v944, %v944
    %v1398 = vmul.f32 %v945, %v945
    %v1399 = vmul.f32 %v946, %v946
    %v1400 = vmul.f32 %v947, %v947
    %v1401 = vmul.f32 %v948, %v948
    %v1402 = vmul.f32 %v949, %v949
    %v1403 = vadd.f32 %v1339, %v1340
    %v1404 = vadd.f32 %v1403, %v1341
    %v1405 = vadd.f32 %v1404, %v1342
    %v1406 = vadd.f32 %v1405, %v1343
    %v1407 = vadd.f32 %v1406, %v1344
    %v1408 = vadd.f32 %v1407, %v1345
    %v1409 = vadd.f32 %v1408, %v1346
    %v1410 = vadd.f32 %v1409, %v1347
    %v1411 = vadd.f32 %v1410, %v1348
    %v1412 = vadd.f32 %v1411, %v1349
    %v1413 = vadd.f32 %v1412, %v1350
    %v1414 = vadd.f32 %v1413, %v1351
    %v1415 = vadd.f32 %v1414, %v1352
    %v1416 = vadd.f32 %v1415, %v1353
    %v1417 = vadd.f32 %v1416, %v1354
    %v1418 = vadd.f32 %v1417, %v1355
    %v1419 = vadd.f32 %v1418, %v1356
    %v1420 = vadd.f32 %v1419, %v1357
    %v1421 = vadd.f32 %v1420, %v1358
    %v1422 = vadd.f32 %v1421, %v1359
    %v1423 = vadd.f32 %v1422, %v1360
    %v1424 = vadd.f32 %v1423, %v1361
    %v1425 = vadd.f32 %v1424, %v1362
    %v1426 = vadd.f32 %v1425, %v1363
    %v1427 = vadd.f32 %v1426, %v1364
    %v1428 = vadd.f32 %v1427, %v1365
    %v1429 = vadd.f32 %v1428, %v1366
    %v1430 = vadd.f32 %v1429, %v1367
    %v1431 = vadd.f32 %v1430, %v1368
    %v1432 = vadd.f32 %v1431, %v1369
    %v1433 = vadd.f32 %v1432, %v1370
    %v1434 = vadd.f32 %v1433, %v1371
    %v1435 = vadd.f32 %v1434, %v1372
    %v1436 = vadd.f32 %v1435, %v1373
    %v1437 = vadd.f32 %v1436, %v1374
    %v1438 = vadd.f32 %v1437, %v1375
    %v1439 = vadd.f32 %v1438, %v1376
    %v1440 = vadd.f32 %v1439, %v1377
    %v1441 = vadd.f32 %v1440, %v1378
    %v1442 = vadd.f32 %v1441, %v1379
    %v1443 = vadd.f32 %v1442, %v1380
    %v1444 = vadd.f32 %v1443, %v1381
    %v1445 = vadd.f32 %v1444, %v1382
    %v1446 = vadd.f32 %v1445, %v1383
    %v1447 = vadd.f32 %v1446, %v1384
    %v1448 = vadd.f32 %v1447, %v1385
    %v1449 = vadd.f32 %v1448, %v1386
    %v1450 = vadd.f32 %v1449, %v1387
    %v1451 = vadd.f32 %v1450, %v1388
    %v1452 = vadd.f32 %v1451, %v1389
    %v1453 = vadd.f32 %v1452, %v1390
    %v1454 = vadd.f32 %v1453, %v1391
    %v1455 = vadd.f32 %v1454, %v1392
    %v1456 = vadd.f32 %v1455, %v1393
    %v1457 = vadd.f32 %v1456, %v1394
    %v1458 = vadd.f32 %v1457, %v1395
    %v1459 = vadd.f32 %v1458, %v1396
    %v1460 = vadd.f32 %v1459, %v1397
    %v1461 = vadd.f32 %v1460, %v1398
    %v1462 = vadd.f32 %v1461, %v1399
    %v1463 = vadd.f32 %v1462, %v1400
    %v1464 = vadd.f32 %v1463, %v1401
    %v1465 = vadd.f32 %v1464, %v1402
    %v1466 = vrot.slane %v1465, 4
    %v1467 = vadd.f32 %v1465, %v1466
    %v1468 = vrot.slane %v1467, 2
    %v1469 = vadd.f32 %v1467, %v1468
    %v1470 = vrot.slane %v1469, 1
    %v1471 = vadd.f32 %v1469, %v1470
    %vm1472 = vcmask 1040384
    %v1473 = vsel %vm1472, %v1338, %v1471
    %vm1474 = vcmask 1041408
    %v1475 = vsel %vm1474, %v1473, 0.0
    %1476 = vst [vmem:[%s3] sm:$0xff] %v1475
  $region17: #{bottleneck_forward.6} parent=0 // pred_fallthru
    _
  // Predicated region
  $region18: #{bottleneck_forward.6} parent=0 // pred_check
    _
  $region19: #{bottleneck_forward.6} parent=0 // pred_check_branch
    %1478 = sbr.rel (0) target = $region21
  $region20: #{bottleneck_forward.6} parent=0 // pred_region
    _
  $region21: #{bottleneck_forward.6} parent=0 // pred_fallthru
    _
  // Predicated region
  $region22: #{bottleneck_forward.6} parent=0 // pred_check
    _
  $region23: #{bottleneck_forward.6} parent=0 // pred_check_branch
    %1480 = sbr.rel (0) target = $region25
  $region24: #{bottleneck_forward.6} parent=0 // pred_region
    _
  $region25: #{bottleneck_forward.6} parent=0 // pred_fallthru
    _
  // Predicated region
  $region26: #{bottleneck_forward.6} parent=0 // pred_check
    _
  $region27: #{bottleneck_forward.6} parent=0 // pred_check_branch
    %1482 = sbr.rel (0) target = $region29
  $region28: #{bottleneck_forward.6} parent=0 // pred_region
    _
  $region29: #{bottleneck_forward.6} parent=0 // pred_fallthru
    _
  // Predicated region
  $region30: #{bottleneck_forward.6} parent=0 // pred_check
    _
  $region31: #{bottleneck_forward.6} parent=0 // pred_check_branch
    %1484 = sbr.rel (0) target = $region33
  $region32: #{bottleneck_forward.6} parent=0 // pred_region
    _
  $region33: #{bottleneck_forward.6} parent=0 // pred_fallthru
    _

// kernel: bottleneck_forward.10
$region0: #{bottleneck_forward.10}
  #allocation0 [shape = 'u32[]', space=smem, size = 0x4, offset = 0x4, fixed_abs, tag = 'smem constant byte address 0x4 - core index']
  #allocation1 [shape = 'u32[144,128]{1,0:T(1,128)}', space=vmem, size = 0x12000, scoped, tag = 'internal scratch']
  #allocation2 [shape = 'f32[128,128]{1,0:T(8,128)}', space=vmem, size = 0x10000, scoped, tag = 'scratch operand']
  %s0 = inlined_call_operand.vmem [shape: bf16[128,128], index: 0, kind: input, shape index: {}]
  %s1 = inlined_call_operand.vmem [shape: bf16[128,128], index: 1, kind: input, shape index: {}]
  %s2 = inlined_call_operand.vmem [shape: bf16[128,128], index: 2, kind: output, shape index: {0}]
  %s3 = inlined_call_operand.vmem [shape: f32[8,128], index: 3, kind: output, shape index: {1}]
  %4 = xla_tuple %s2, %s3
  %s5 = sld [smem:[#allocation0]]
  $region34: #{bottleneck_forward.10} parent=0
    _
  %s7 = ssub.s32 1, %s5
  %s8 = scalar_select 0, %s7, %s5
  // Predicated region
  $region2: #{bottleneck_forward.10} parent=0 // pred_check
    _
  $region3: #{bottleneck_forward.10} parent=0 // pred_check_branch
    %10 = sbr.rel (0) target = $region5
  $region4: #{bottleneck_forward.10} parent=0 // pred_region
    _
  $region5: #{bottleneck_forward.10} parent=0 // pred_fallthru
    _
  // Predicated region
  $region6: #{bottleneck_forward.10} parent=0 // pred_check
    _
  $region7: #{bottleneck_forward.10} parent=0 // pred_check_branch
    %12 = sbr.rel (0) target = $region9
  $region8: #{bottleneck_forward.10} parent=0 // pred_region
    _
  $region9: #{bottleneck_forward.10} parent=0 // pred_fallthru
    _
  %p14 = scmp.eq.s32.totalorder 0, 0
  // Predicated region
  $region10: #{bottleneck_forward.10} parent=0 // pred_check
    %p15 = pneg %p14
  $region11: #{bottleneck_forward.10} parent=0 // pred_check_branch
    %17 = sbr.rel (%p15) target = $region13
  $region12: #{bottleneck_forward.10} parent=0 // pred_region
    %18 = vst [vmem:[#allocation2] sm:$0xff] 0.0
    %19 = vst [vmem:[#allocation2 + $0x8] sm:$0xff] 0.0
    %20 = vst [vmem:[#allocation2 + $0x10] sm:$0xff] 0.0
    %21 = vst [vmem:[#allocation2 + $0x18] sm:$0xff] 0.0
    %22 = vst [vmem:[#allocation2 + $0x20] sm:$0xff] 0.0
    %23 = vst [vmem:[#allocation2 + $0x28] sm:$0xff] 0.0
    %24 = vst [vmem:[#allocation2 + $0x30] sm:$0xff] 0.0
    %25 = vst [vmem:[#allocation2 + $0x38] sm:$0xff] 0.0
    %26 = vst [vmem:[#allocation2 + $0x40] sm:$0xff] 0.0
    %27 = vst [vmem:[#allocation2 + $0x48] sm:$0xff] 0.0
    %28 = vst [vmem:[#allocation2 + $0x50] sm:$0xff] 0.0
    %29 = vst [vmem:[#allocation2 + $0x58] sm:$0xff] 0.0
    %30 = vst [vmem:[#allocation2 + $0x60] sm:$0xff] 0.0
    %31 = vst [vmem:[#allocation2 + $0x68] sm:$0xff] 0.0
    %32 = vst [vmem:[#allocation2 + $0x70] sm:$0xff] 0.0
    %33 = vst [vmem:[#allocation2 + $0x78] sm:$0xff] 0.0
  $region13: #{bottleneck_forward.10} parent=0 // pred_fallthru
    _
  %v34 = vld [vmem:[%s0] sm:$0xf]
  %v35 = vld [vmem:[%s0 + $0x4] sm:$0xf]
  %v36 = vld [vmem:[%s0 + $0x8] sm:$0xf]
  %v37 = vld [vmem:[%s0 + $0xc] sm:$0xf]
  %v38 = vld [vmem:[%s0 + $0x10] sm:$0xf]
  %v39 = vld [vmem:[%s0 + $0x14] sm:$0xf]
  %v40 = vld [vmem:[%s0 + $0x18] sm:$0xf]
  %v41 = vld [vmem:[%s0 + $0x1c] sm:$0xf]
  %v42 = vld [vmem:[%s0 + $0x20] sm:$0xf]
  %v43 = vld [vmem:[%s0 + $0x24] sm:$0xf]
  %v44 = vld [vmem:[%s0 + $0x28] sm:$0xf]
  %v45 = vld [vmem:[%s0 + $0x2c] sm:$0xf]
  %v46 = vld [vmem:[%s0 + $0x30] sm:$0xf]
  %v47 = vld [vmem:[%s0 + $0x34] sm:$0xf]
  %v48 = vld [vmem:[%s0 + $0x38] sm:$0xf]
  %v49 = vld [vmem:[%s0 + $0x3c] sm:$0xf]
  %v50 = vld [vmem:[#allocation2] sm:$0xff]
  %v51 = vld [vmem:[#allocation2 + $0x8] sm:$0xff]
  %v52 = vld [vmem:[#allocation2 + $0x10] sm:$0xff]
  %v53 = vld [vmem:[#allocation2 + $0x18] sm:$0xff]
  %v54 = vld [vmem:[#allocation2 + $0x20] sm:$0xff]
  %v55 = vld [vmem:[#allocation2 + $0x28] sm:$0xff]
  %v56 = vld [vmem:[#allocation2 + $0x30] sm:$0xff]
  %v57 = vld [vmem:[#allocation2 + $0x38] sm:$0xff]
  %v58 = vld [vmem:[#allocation2 + $0x40] sm:$0xff]
  %v59 = vld [vmem:[#allocation2 + $0x48] sm:$0xff]
  %v60 = vld [vmem:[#allocation2 + $0x50] sm:$0xff]
  %v61 = vld [vmem:[#allocation2 + $0x58] sm:$0xff]
  %v62 = vld [vmem:[#allocation2 + $0x60] sm:$0xff]
  %v63 = vld [vmem:[#allocation2 + $0x68] sm:$0xff]
  %v64 = vld [vmem:[#allocation2 + $0x70] sm:$0xff]
  %v65 = vld [vmem:[#allocation2 + $0x78] sm:$0xff]
  %v66 = vld [vmem:[%s1] sm:$0xf]
  %v67 = vld [vmem:[%s1 + $0x4] sm:$0xf]
  %v68 = vld [vmem:[%s1 + $0x8] sm:$0xf]
  %v69 = vld [vmem:[%s1 + $0xc] sm:$0xf]
  %v70 = vld [vmem:[%s1 + $0x10] sm:$0xf]
  %v71 = vld [vmem:[%s1 + $0x14] sm:$0xf]
  %v72 = vld [vmem:[%s1 + $0x18] sm:$0xf]
  %v73 = vld [vmem:[%s1 + $0x1c] sm:$0xf]
  %v74 = vld [vmem:[%s1 + $0x20] sm:$0xf]
  %v75 = vld [vmem:[%s1 + $0x24] sm:$0xf]
  %v76 = vld [vmem:[%s1 + $0x28] sm:$0xf]
  %v77 = vld [vmem:[%s1 + $0x2c] sm:$0xf]
  %v78 = vld [vmem:[%s1 + $0x30] sm:$0xf]
  %v79 = vld [vmem:[%s1 + $0x34] sm:$0xf]
  %v80 = vld [vmem:[%s1 + $0x38] sm:$0xf]
  %v81 = vld [vmem:[%s1 + $0x3c] sm:$0xf]
  %v98 = vunpack.c.l.b16 %v34
  %v99 = vunpack.c.l.b16 %v35
  %v100 = vunpack.c.l.b16 %v36
  %v101 = vunpack.c.l.b16 %v37
  %v102 = vunpack.c.l.b16 %v38
  %v103 = vunpack.c.l.b16 %v39
  %v104 = vunpack.c.l.b16 %v40
  %v105 = vunpack.c.l.b16 %v41
  %v106 = vunpack.c.l.b16 %v42
  %v107 = vunpack.c.l.b16 %v43
  %v108 = vunpack.c.l.b16 %v44
  %v109 = vunpack.c.l.b16 %v45
  %v110 = vunpack.c.l.b16 %v46
  %v111 = vunpack.c.l.b16 %v47
  %v112 = vunpack.c.l.b16 %v48
  %v113 = vunpack.c.l.b16 %v49
  %v114 = vpack.c.b16 %v99, %v98
  %v115 = vpack.c.b16 %v101, %v100
  %v116 = vpack.c.b16 %v103, %v102
  %v117 = vpack.c.b16 %v105, %v104
  %v118 = vpack.c.b16 %v107, %v106
  %v119 = vpack.c.b16 %v109, %v108
  %v120 = vpack.c.b16 %v111, %v110
  %v121 = vpack.c.b16 %v113, %v112
  %v146 = vunpack.c.l.b16 %v66
  %v147 = vunpack.c.l.b16 %v67
  %v148 = vunpack.c.l.b16 %v68
  %v149 = vunpack.c.l.b16 %v69
  %v150 = vunpack.c.l.b16 %v70
  %v151 = vunpack.c.l.b16 %v71
  %v152 = vunpack.c.l.b16 %v72
  %v153 = vunpack.c.l.b16 %v73
  %v154 = vunpack.c.l.b16 %v74
  %v155 = vunpack.c.l.b16 %v75
  %v156 = vunpack.c.l.b16 %v76
  %v157 = vunpack.c.l.b16 %v77
  %v158 = vunpack.c.l.b16 %v78
  %v159 = vunpack.c.l.b16 %v79
  %v160 = vunpack.c.l.b16 %v80
  %v161 = vunpack.c.l.b16 %v81
  %v162 = vpack.c.b16 %v147, %v146
  %v163 = vpack.c.b16 %v149, %v148
  %v164 = vpack.c.b16 %v151, %v150
  %v165 = vpack.c.b16 %v153, %v152
  %v166 = vpack.c.b16 %v155, %v154
  %v167 = vpack.c.b16 %v157, %v156
  %v168 = vpack.c.b16 %v159, %v158
  %v169 = vpack.c.b16 %v161, %v160
  %178 = vmatprep.subr.bf16.mxu0 0
  %179 = vmatpush1.bf16.msra.mxu0 %v162
  %180 = vmatprep.subr.bf16.mxu0 0
  %181 = vmatpush1.bf16.msra.mxu0 %v163
  %182 = vmatprep.subr.bf16.mxu0 0
  %183 = vmatpush1.bf16.msra.mxu0 %v164
  %184 = vmatprep.subr.bf16.mxu0 0
  %185 = vmatpush1.bf16.msra.mxu0 %v165
  %186 = vmatprep.subr.bf16.mxu0 0
  %187 = vmatpush1.bf16.msra.mxu0 %v166
  %188 = vmatprep.subr.bf16.mxu0 0
  %189 = vmatpush1.bf16.msra.mxu0 %v167
  %190 = vmatprep.subr.bf16.mxu0 0
  %191 = vmatpush1.bf16.msra.mxu0 %v168
  %192 = vmatprep.subr.bf16.mxu0 0
  %193 = vmatpush1.bf16.msra.mxu0 %v169
  %194 = vmatprep.subr.bf16.mxu0 0
  %195 = vmatpush1.bf16.msra.mxu0 0
  %196 = vmatprep.subr.bf16.mxu0 0
  %197 = vmatpush1.bf16.msra.mxu0 0
  %198 = vmatprep.subr.bf16.mxu0 0
  %199 = vmatpush1.bf16.msra.mxu0 0
  %200 = vmatprep.subr.bf16.mxu0 0
  %201 = vmatpush1.bf16.msra.mxu0 0
  %202 = vmatprep.subr.bf16.mxu0 0
  %203 = vmatpush1.bf16.msra.mxu0 0
  %204 = vmatprep.subr.bf16.mxu0 0
  %205 = vmatpush1.bf16.msra.mxu0 0
  %206 = vmatprep.subr.bf16.mxu0 0
  %207 = vmatpush1.bf16.msra.mxu0 0
  %208 = vmatprep.subr.bf16.mxu0 0
  %209 = vmatpush1.bf16.msra.mxu0 0
  %210 = vmatprep.mubr.bf16.mxu0 0
  %211 = vmatmul.mubr.bf16.gmra.mrb[0].mxu0 %v114
  %v212 = vpop.f32.mrb[0].mxu0
  %v213 = vadd.f32 0.0, %v212
  %v214 = vpop.f32.mrb[0].mxu0
  %v215 = vpop.f32.mrb[0].mxu0
  %v216 = vadd.f32 0.0, %v215
  %v217 = vpop.f32.mrb[0].mxu0
  %218 = vmatprep.mubr.bf16.mxu0 0
  %219 = vmatmul.mubr.bf16.gmra.mrb[0].mxu0 %v115
  %v220 = vpop.f32.mrb[0].mxu0
  %v221 = vadd.f32 0.0, %v220
  %v222 = vpop.f32.mrb[0].mxu0
  %v223 = vpop.f32.mrb[0].mxu0
  %v224 = vadd.f32 0.0, %v223
  %v225 = vpop.f32.mrb[0].mxu0
  %226 = vmatprep.mubr.bf16.mxu0 0
  %227 = vmatmul.mubr.bf16.gmra.mrb[0].mxu0 %v116
  %v228 = vpop.f32.mrb[0].mxu0
  %v229 = vadd.f32 0.0, %v228
  %v230 = vpop.f32.mrb[0].mxu0
  %v231 = vpop.f32.mrb[0].mxu0
  %v232 = vadd.f32 0.0, %v231
  %v233 = vpop.f32.mrb[0].mxu0
  %234 = vmatprep.mubr.bf16.mxu0 0
  %235 = vmatmul.mubr.bf16.gmra.mrb[0].mxu0 %v117
  %v236 = vpop.f32.mrb[0].mxu0
  %v237 = vadd.f32 0.0, %v236
  %v238 = vpop.f32.mrb[0].mxu0
  %v239 = vpop.f32.mrb[0].mxu0
  %v240 = vadd.f32 0.0, %v239
  %v241 = vpop.f32.mrb[0].mxu0
  %242 = vmatprep.mubr.bf16.mxu0 0
  %243 = vmatmul.mubr.bf16.gmra.mrb[0].mxu0 %v118
  %v244 = vpop.f32.mrb[0].mxu0
  %v245 = vadd.f32 0.0, %v244
  %v246 = vpop.f32.mrb[0].mxu0
  %v247 = vpop.f32.mrb[0].mxu0
  %v248 = vadd.f32 0.0, %v247
  %v249 = vpop.f32.mrb[0].mxu0
  %250 = vmatprep.mubr.bf16.mxu0 0
  %251 = vmatmul.mubr.bf16.gmra.mrb[0].mxu0 %v119
  %v252 = vpop.f32.mrb[0].mxu0
  %v253 = vadd.f32 0.0, %v252
  %v254 = vpop.f32.mrb[0].mxu0
  %v255 = vpop.f32.mrb[0].mxu0
  %v256 = vadd.f32 0.0, %v255
  %v257 = vpop.f32.mrb[0].mxu0
  %258 = vmatprep.mubr.bf16.mxu0 0
  %259 = vmatmul.mubr.bf16.gmra.mrb[0].mxu0 %v120
  %v260 = vpop.f32.mrb[0].mxu0
  %v261 = vadd.f32 0.0, %v260
  %v262 = vpop.f32.mrb[0].mxu0
  %v263 = vpop.f32.mrb[0].mxu0
  %v264 = vadd.f32 0.0, %v263
  %v265 = vpop.f32.mrb[0].mxu0
  %266 = vmatprep.mubr.bf16.mxu0 0
  %267 = vmatmul.mubr.bf16.gmra.mrb[0].mxu0 %v121
  %v268 = vpop.f32.mrb[0].mxu0
  %v269 = vadd.f32 0.0, %v268
  %v270 = vpop.f32.mrb[0].mxu0
  %v271 = vpop.f32.mrb[0].mxu0
  %v272 = vadd.f32 0.0, %v271
  %v273 = vpop.f32.mrb[0].mxu0
  %274 = vdwg.mxu0
  %v275 = vadd.f32 %v50, %v213
  %v276 = vadd.f32 %v51, %v216
  %v277 = vadd.f32 %v52, %v221
  %v278 = vadd.f32 %v53, %v224
  %v279 = vadd.f32 %v54, %v229
  %v280 = vadd.f32 %v55, %v232
  %v281 = vadd.f32 %v56, %v237
  %v282 = vadd.f32 %v57, %v240
  %v283 = vadd.f32 %v58, %v245
  %v284 = vadd.f32 %v59, %v248
  %v285 = vadd.f32 %v60, %v253
  %v286 = vadd.f32 %v61, %v256
  %v287 = vadd.f32 %v62, %v261
  %v288 = vadd.f32 %v63, %v264
  %v289 = vadd.f32 %v64, %v269
  %v290 = vadd.f32 %v65, %v272
  %291 = vst [vmem:[#allocation2] sm:$0xff] %v275
  %292 = vst [vmem:[#allocation2 + $0x8] sm:$0xff] %v276
  %293 = vst [vmem:[#allocation2 + $0x10] sm:$0xff] %v277
  %294 = vst [vmem:[#allocation2 + $0x18] sm:$0xff] %v278
  %295 = vst [vmem:[#allocation2 + $0x20] sm:$0xff] %v279
  %296 = vst [vmem:[#allocation2 + $0x28] sm:$0xff] %v280
  %297 = vst [vmem:[#allocation2 + $0x30] sm:$0xff] %v281
  %298 = vst [vmem:[#allocation2 + $0x38] sm:$0xff] %v282
  %299 = vst [vmem:[#allocation2 + $0x40] sm:$0xff] %v283
  %300 = vst [vmem:[#allocation2 + $0x48] sm:$0xff] %v284
  %301 = vst [vmem:[#allocation2 + $0x50] sm:$0xff] %v285
  %302 = vst [vmem:[#allocation2 + $0x58] sm:$0xff] %v286
  %303 = vst [vmem:[#allocation2 + $0x60] sm:$0xff] %v287
  %304 = vst [vmem:[#allocation2 + $0x68] sm:$0xff] %v288
  %305 = vst [vmem:[#allocation2 + $0x70] sm:$0xff] %v289
  %306 = vst [vmem:[#allocation2 + $0x78] sm:$0xff] %v290
  // Predicated region
  $region14: #{bottleneck_forward.10} parent=0 // pred_check
    %p307 = pneg %p14
  $region15: #{bottleneck_forward.10} parent=0 // pred_check_branch
    %309 = sbr.rel (%p307) target = $region17
  $region16: #{bottleneck_forward.10} parent=0 // pred_region
    %v310 = vld [vmem:[#allocation2] sm:$0xff]
    %v311 = vld [vmem:[#allocation2 + $0x8] sm:$0xff]
    %v312 = vld [vmem:[#allocation2 + $0x10] sm:$0xff]
    %v313 = vld [vmem:[#allocation2 + $0x18] sm:$0xff]
    %v314 = vld [vmem:[#allocation2 + $0x20] sm:$0xff]
    %v315 = vld [vmem:[#allocation2 + $0x28] sm:$0xff]
    %v316 = vld [vmem:[#allocation2 + $0x30] sm:$0xff]
    %v317 = vld [vmem:[#allocation2 + $0x38] sm:$0xff]
    %v318 = vld [vmem:[#allocation2 + $0x40] sm:$0xff]
    %v319 = vld [vmem:[#allocation2 + $0x48] sm:$0xff]
    %v320 = vld [vmem:[#allocation2 + $0x50] sm:$0xff]
    %v321 = vld [vmem:[#allocation2 + $0x58] sm:$0xff]
    %v322 = vld [vmem:[#allocation2 + $0x60] sm:$0xff]
    %v323 = vld [vmem:[#allocation2 + $0x68] sm:$0xff]
    %v324 = vld [vmem:[#allocation2 + $0x70] sm:$0xff]
    %v325 = vld [vmem:[#allocation2 + $0x78] sm:$0xff]
    %v326 = vpack.c.bf16 %v311, %v310
    %v327 = vpack.c.bf16 %v313, %v312
    %v328 = vpack.c.bf16 %v315, %v314
    %v329 = vpack.c.bf16 %v317, %v316
    %v330 = vpack.c.bf16 %v319, %v318
    %v331 = vpack.c.bf16 %v321, %v320
    %v332 = vpack.c.bf16 %v323, %v322
    %v333 = vpack.c.bf16 %v325, %v324
    %v342 = vunpack.c.l.b16 %v326
    %v343 = vunpack.c.h.b16 %v326
    %v344 = vunpack.c.l.b16 %v327
    %v345 = vunpack.c.h.b16 %v327
    %v346 = vunpack.c.l.b16 %v328
    %v347 = vunpack.c.h.b16 %v328
    %v348 = vunpack.c.l.b16 %v329
    %v349 = vunpack.c.h.b16 %v329
    %v350 = vunpack.c.l.b16 %v330
    %v351 = vunpack.c.h.b16 %v330
    %v352 = vunpack.c.l.b16 %v331
    %v353 = vunpack.c.h.b16 %v331
    %v354 = vunpack.c.l.b16 %v332
    %v355 = vunpack.c.h.b16 %v332
    %v356 = vunpack.c.l.b16 %v333
    %v357 = vunpack.c.h.b16 %v333
    %v358 = vpack.c.b16 %v342, %v342
    %v359 = vpack.c.b16 %v343, %v343
    %v360 = vpack.c.b16 %v344, %v344
    %v361 = vpack.c.b16 %v345, %v345
    %v362 = vpack.c.b16 %v346, %v346
    %v363 = vpack.c.b16 %v347, %v347
    %v364 = vpack.c.b16 %v348, %v348
    %v365 = vpack.c.b16 %v349, %v349
    %v366 = vpack.c.b16 %v350, %v350
    %v367 = vpack.c.b16 %v351, %v351
    %v368 = vpack.c.b16 %v352, %v352
    %v369 = vpack.c.b16 %v353, %v353
    %v370 = vpack.c.b16 %v354, %v354
    %v371 = vpack.c.b16 %v355, %v355
    %v372 = vpack.c.b16 %v356, %v356
    %v373 = vpack.c.b16 %v357, %v357
    %390 = vst [vmem:[%s2] sm:$0xf] %v358
    %391 = vst [vmem:[%s2 + $0x4] sm:$0xf] %v359
    %392 = vst [vmem:[%s2 + $0x8] sm:$0xf] %v360
    %393 = vst [vmem:[%s2 + $0xc] sm:$0xf] %v361
    %394 = vst [vmem:[%s2 + $0x10] sm:$0xf] %v362
    %395 = vst [vmem:[%s2 + $0x14] sm:$0xf] %v363
    %396 = vst [vmem:[%s2 + $0x18] sm:$0xf] %v364
    %397 = vst [vmem:[%s2 + $0x1c] sm:$0xf] %v365
    %398 = vst [vmem:[%s2 + $0x20] sm:$0xf] %v366
    %399 = vst [vmem:[%s2 + $0x24] sm:$0xf] %v367
    %400 = vst [vmem:[%s2 + $0x28] sm:$0xf] %v368
    %401 = vst [vmem:[%s2 + $0x2c] sm:$0xf] %v369
    %402 = vst [vmem:[%s2 + $0x30] sm:$0xf] %v370
    %403 = vst [vmem:[%s2 + $0x34] sm:$0xf] %v371
    %404 = vst [vmem:[%s2 + $0x38] sm:$0xf] %v372
    %405 = vst [vmem:[%s2 + $0x3c] sm:$0xf] %v373
    %v406 = vadd.f32 %v310, %v311
    %v407 = vadd.f32 %v406, %v312
    %v408 = vadd.f32 %v407, %v313
    %v409 = vadd.f32 %v408, %v314
    %v410 = vadd.f32 %v409, %v315
    %v411 = vadd.f32 %v410, %v316
    %v412 = vadd.f32 %v411, %v317
    %v413 = vadd.f32 %v412, %v318
    %v414 = vadd.f32 %v413, %v319
    %v415 = vadd.f32 %v414, %v320
    %v416 = vadd.f32 %v415, %v321
    %v417 = vadd.f32 %v416, %v322
    %v418 = vadd.f32 %v417, %v323
    %v419 = vadd.f32 %v418, %v324
    %v420 = vadd.f32 %v419, %v325
    %v421 = vrot.slane %v420, 4
    %v422 = vadd.f32 %v420, %v421
    %v423 = vrot.slane %v422, 2
    %v424 = vadd.f32 %v422, %v423
    %v425 = vrot.slane %v424, 1
    %v426 = vadd.f32 %v424, %v425
    %v427 = vmul.f32 %v310, %v310
    %v428 = vmul.f32 %v311, %v311
    %v429 = vmul.f32 %v312, %v312
    %v430 = vmul.f32 %v313, %v313
    %v431 = vmul.f32 %v314, %v314
    %v432 = vmul.f32 %v315, %v315
    %v433 = vmul.f32 %v316, %v316
    %v434 = vmul.f32 %v317, %v317
    %v435 = vmul.f32 %v318, %v318
    %v436 = vmul.f32 %v319, %v319
    %v437 = vmul.f32 %v320, %v320
    %v438 = vmul.f32 %v321, %v321
    %v439 = vmul.f32 %v322, %v322
    %v440 = vmul.f32 %v323, %v323
    %v441 = vmul.f32 %v324, %v324
    %v442 = vmul.f32 %v325, %v325
    %v443 = vadd.f32 %v427, %v428
    %v444 = vadd.f32 %v443, %v429
    %v445 = vadd.f32 %v444, %v430
    %v446 = vadd.f32 %v445, %v431
    %v447 = vadd.f32 %v446, %v432
    %v448 = vadd.f32 %v447, %v433
    %v449 = vadd.f32 %v448, %v434
    %v450 = vadd.f32 %v449, %v435
    %v451 = vadd.f32 %v450, %v436
    %v452 = vadd.f32 %v451, %v437
    %v453 = vadd.f32 %v452, %v438
    %v454 = vadd.f32 %v453, %v439
    %v455 = vadd.f32 %v454, %v440
    %v456 = vadd.f32 %v455, %v441
    %v457 = vadd.f32 %v456, %v442
    %v458 = vrot.slane %v457, 4
    %v459 = vadd.f32 %v457, %v458
    %v460 = vrot.slane %v459, 2
    %v461 = vadd.f32 %v459, %v460
    %v462 = vrot.slane %v461, 1
    %v463 = vadd.f32 %v461, %v462
    %vm464 = vcmask 1040384
    %v465 = vsel %vm464, %v426, %v463
    %vm466 = vcmask 1041408
    %v467 = vsel %vm466, %v465, 0.0
    %468 = vst [vmem:[%s3] sm:$0xff] %v467
  $region17: #{bottleneck_forward.10} parent=0 // pred_fallthru
    _
  // Predicated region
  $region18: #{bottleneck_forward.10} parent=0 // pred_check
    _
  $region19: #{bottleneck_forward.10} parent=0 // pred_check_branch
    %470 = sbr.rel (0) target = $region21
  $region20: #{bottleneck_forward.10} parent=0 // pred_region
    _
  $region21: #{bottleneck_forward.10} parent=0 // pred_fallthru
    _
  // Predicated region
  $region22: #{bottleneck_forward.10} parent=0 // pred_check
    _
  $region23: #{bottleneck_forward.10} parent=0 // pred_check_branch
    %472 = sbr.rel (0) target = $region25
  $region24: #{bottleneck_forward.10} parent=0 // pred_region
    _
  $region25: #{bottleneck_forward.10} parent=0 // pred_fallthru
    _
  // Predicated region
  $region26: #{bottleneck_forward.10} parent=0 // pred_check
    _
  $region27: #{bottleneck_forward.10} parent=0 // pred_check_branch
    %474 = sbr.rel (0) target = $region29
  $region28: #{bottleneck_forward.10} parent=0 // pred_region
    _
  $region29: #{bottleneck_forward.10} parent=0 // pred_fallthru
    _
  // Predicated region
  $region30: #{bottleneck_forward.10} parent=0 // pred_check
    _
  $region31: #{bottleneck_forward.10} parent=0 // pred_check_branch
    %476 = sbr.rel (0) target = $region33
  $region32: #{bottleneck_forward.10} parent=0 // pred_region
    _
  $region33: #{bottleneck_forward.10} parent=0 // pred_fallthru
    _

// kernel: bottleneck_forward.8
$region0: #{bottleneck_forward.8}
  #allocation0 [shape = 'u32[]', space=smem, size = 0x4, offset = 0x4, fixed_abs, tag = 'smem constant byte address 0x4 - core index']
  #allocation1 [shape = 'u32[144,128]{1,0:T(1,128)}', space=vmem, size = 0x12000, scoped, tag = 'internal scratch']
  #allocation2 [shape = 'f32[128,128]{1,0:T(8,128)}', space=vmem, size = 0x10000, scoped, tag = 'scratch operand']
  %s0 = inlined_call_operand.vmem [shape: bf16[128,1152], index: 0, kind: input, shape index: {}]
  %s1 = inlined_call_operand.vmem [shape: bf16[1152,128], index: 1, kind: input, shape index: {}]
  %s2 = inlined_call_operand.vmem [shape: bf16[128,128], index: 2, kind: output, shape index: {0}]
  %s3 = inlined_call_operand.vmem [shape: f32[8,128], index: 3, kind: output, shape index: {1}]
  %4 = xla_tuple %s2, %s3
  %s5 = sld [smem:[#allocation0]]
  $region98: #{bottleneck_forward.8} parent=0
    _
  %s7 = ssub.s32 1, %s5
  %s8 = scalar_select 0, %s7, %s5
  $region1: #{bottleneck_forward.8} parent=0
    #allocation3 [shape = 'u8[65536]{0}', space=vmem, size = 0x10000, scoped, tag = 'input window, operand 0']
    loop: start=0, step=1, limit=11
    $region2: #{bottleneck_forward.8} parent=1 // loop_pre_header
      _
    $region3: #{bottleneck_forward.8} parent=1 // loop_header
      %s10 = sphi 0, %s14
      %p11 = scmp.ge.s32.totalorder %s10, 11
      %s17 = sphi 0, %s36
      %s18 = sphi 0, %s32
      %s19 = sphi 0, %s28
      %s20 = sphi 0, %s17
      %s21 = sphi 0, %s18
      %s22 = sphi 0, %s19
      %s23 = sphi 0, %s20
      %s24 = sphi 0, %s21
      %s25 = sphi 0, %s22
      %s41 = sphi 0, %s43
      %s44 = sphi 0, %s41
      %s45 = sphi 0, %s44
      %s61 = sphi 0, %s45
      %s69 = sphi 0, %s71
      %s72 = sphi 0, %s69
      %s73 = sphi 0, %s72
      %s89 = sphi 0, %s73
      %s97 = sphi 0, %s99
      %s100 = sphi 0, %s97
      %s101 = sphi 0, %s100
      %s117 = sphi 0, %s101
      %s125 = sphi 0, %s127
      %s128 = sphi 0, %s125
      %s129 = sphi 0, %s128
      %s145 = sphi 0, %s129
    $region4: #{bottleneck_forward.8} parent=1 // loop_header_branch
      %13 = sbr.rel (%p11) target = $region8
    $region5: #{bottleneck_forward.8} parent=1 // loop_body
      %s15 = ssub.s32 %s10, 1
      %s16 = ssub.s32 %s10, 2
      %s26 = sadd.s32 1, %s19
      %p27 = scmp.ge.s32.totalorder %s26, 9
      %s28 = scalar_select %p27, 0, %s26
      %s29 = sadd.s32 1, %s18
      %s30 = scalar_select %p27, %s29, %s18
      %p31 = scmp.ge.s32.totalorder %s30, 1
      %s32 = scalar_select %p31, 0, %s30
      %s33 = sadd.s32 1, %s17
      %s34 = scalar_select %p31, %s33, %s17
      %p35 = scmp.ge.s32.totalorder %s34, 1
      %s36 = scalar_select %p35, 0, %s34
      %s37 = ssub.s32 %s17, %s36
      %s38 = ssub.s32 %s19, %s28
      %s39 = sor.u32 %s37, %s38
      %p40 = scmp.eq.s32.totalorder %s39, 0
      %s42 = sadd.s32 %s41, 1
      %s43 = scalar_select %p40, %s41, %s42
      %p46 = pneg %p40
      %p47 = scmp.eq.s32.totalorder %s10, 8
      %p48 = por %p46, %p47
      %p49 = scmp.ne.s32.totalorder %s41, %s44
      %p50 = scmp.eq.s32.totalorder %s10, 0
      %p51 = por %p49, %p50
      %p52 = scmp.ne.s32.totalorder %s41, %s44
      %p53 = scmp.eq.s32.totalorder %s15, 8
      %p54 = por %p52, %p53
      %p55 = scmp.ne.s32.totalorder %s44, %s45
      %p56 = scmp.eq.s32.totalorder %s15, 0
      %p57 = por %p55, %p56
      %p58 = scmp.ne.s32.totalorder %s44, %s45
      %p59 = scmp.eq.s32.totalorder %s16, 8
      %p60 = por %p58, %p59
      %p62 = scmp.ne.s32.totalorder %s45, %s61
      %p63 = scmp.eq.s32.totalorder %s16, 0
      %p64 = por %p62, %p63
      %s65 = ssub.s32 %s19, %s28
      %s66 = ssub.s32 %s18, %s32
      %s67 = sor.u32 %s65, %s66
      %p68 = scmp.eq.s32.totalorder %s67, 0
      %s70 = sadd.s32 %s69, 1
      %s71 = scalar_select %p68, %s69, %s70
      %p74 = pneg %p68
      %p75 = scmp.eq.s32.totalorder %s10, 8
      %p76 = por %p74, %p75
      %p77 = scmp.ne.s32.totalorder %s69, %s72
      %p78 = scmp.eq.s32.totalorder %s10, 0
      %p79 = por %p77, %p78
      %p80 = scmp.ne.s32.totalorder %s69, %s72
      %p81 = scmp.eq.s32.totalorder %s15, 8
      %p82 = por %p80, %p81
      %p83 = scmp.ne.s32.totalorder %s72, %s73
      %p84 = scmp.eq.s32.totalorder %s15, 0
      %p85 = por %p83, %p84
      %p86 = scmp.ne.s32.totalorder %s72, %s73
      %p87 = scmp.eq.s32.totalorder %s16, 8
      %p88 = por %p86, %p87
      %p90 = scmp.ne.s32.totalorder %s73, %s89
      %p91 = scmp.eq.s32.totalorder %s16, 0
      %p92 = por %p90, %p91
      %s93 = ssub.s32 %s17, %s36
      %s94 = ssub.s32 %s18, %s32
      %s95 = sor.u32 %s93, %s94
      %p96 = scmp.eq.s32.totalorder %s95, 0
      %s98 = sadd.s32 %s97, 1
      %s99 = scalar_select %p96, %s97, %s98
      %p102 = pneg %p96
      %p103 = scmp.eq.s32.totalorder %s10, 8
      %p104 = por %p102, %p103
      %p105 = scmp.ne.s32.totalorder %s97, %s100
      %p106 = scmp.eq.s32.totalorder %s10, 0
      %p107 = por %p105, %p106
      %p108 = scmp.ne.s32.totalorder %s97, %s100
      %p109 = scmp.eq.s32.totalorder %s15, 8
      %p110 = por %p108, %p109
      %p111 = scmp.ne.s32.totalorder %s100, %s101
      %p112 = scmp.eq.s32.totalorder %s15, 0
      %p113 = por %p111, %p112
      %p114 = scmp.ne.s32.totalorder %s100, %s101
      %p115 = scmp.eq.s32.totalorder %s16, 8
      %p116 = por %p114, %p115
      %p118 = scmp.ne.s32.totalorder %s101, %s117
      %p119 = scmp.eq.s32.totalorder %s16, 0
      %p120 = por %p118, %p119
      %s121 = ssub.s32 %s17, %s36
      %s122 = ssub.s32 %s18, %s32
      %s123 = sor.u32 %s121, %s122
      %p124 = scmp.eq.s32.totalorder %s123, 0
      %s126 = sadd.s32 %s125, 1
      %s127 = scalar_select %p124, %s125, %s126
      %p130 = pneg %p124
      %p131 = scmp.eq.s32.totalorder %s10, 8
      %p132 = por %p130, %p131
      %p133 = scmp.ne.s32.totalorder %s125, %s128
      %p134 = scmp.eq.s32.totalorder %s10, 0
      %p135 = por %p133, %p134
      %p136 = scmp.ne.s32.totalorder %s125, %s128
      %p137 = scmp.eq.s32.totalorder %s15, 8
      %p138 = por %p136, %p137
      %p139 = scmp.ne.s32.totalorder %s128, %s129
      %p140 = scmp.eq.s32.totalorder %s15, 0
      %p141 = por %p139, %p140
      %p142 = scmp.ne.s32.totalorder %s128, %s129
      %p143 = scmp.eq.s32.totalorder %s16, 8
      %p144 = por %p142, %p143
      %p146 = scmp.ne.s32.totalorder %s129, %s145
      %p147 = scmp.eq.s32.totalorder %s16, 0
      %p148 = por %p146, %p147
      %p149 = scmp.le.s32.totalorder 1, %s10
      %p150 = scmp.lt.s32.totalorder %s10, 10
      %p151 = pnand %p149, %p150
      %p152 = pneg %p151
      // Predicated region
      $region9: #{bottleneck_forward.8} parent=5 // pred_check
        _
      $region10: #{bottleneck_forward.8} parent=5 // pred_check_branch
        %154 = sbr.rel (%p151) target = $region12
      $region11: #{bottleneck_forward.8} parent=5 // pred_region
        %s155 = ssub.s32 %s10, 1
      $region12: #{bottleneck_forward.8} parent=5 // pred_fallthru
        _
      %p156 = scmp.lt.s32.totalorder %s10, 9
      // Predicated region
      $region13: #{bottleneck_forward.8} parent=5 // pred_check
        %p157 = pneg %p156
      $region14: #{bottleneck_forward.8} parent=5 // pred_check_branch
        %159 = sbr.rel (%p157) target = $region16
      $region15: #{bottleneck_forward.8} parent=5 // pred_region
        // Predicated region
        $region17: #{bottleneck_forward.8} parent=15 // pred_check
          %p160 = pneg %p51
        $region18: #{bottleneck_forward.8} parent=15 // pred_check_branch
          %162 = sbr.rel (%p160) target = $region20
        $region19: #{bottleneck_forward.8} parent=15 // pred_region
          %s163 = sand.u32 %s41, 1
          %s164 = sand.u32 %s41, 1
          %s165 = smul.addr %s164, 64
          %s166 = scalar_lea.vmem [#allocation3], %s165
          %s167 = smul.u32 16, %s17
          %s168 = smul.addr %s167, 9
          %s169 = sadd.s32 %s19, %s168
          %s170 = smul.addr %s169, 4
          %s171 = scalar_lea.vmem %s0, %s170
          // Predicated region
          $region21: #{bottleneck_forward.8} parent=19 // pred_check
            _
          $region22: #{bottleneck_forward.8} parent=19 // pred_check_branch
            %173 = sbr.rel (0) target = $region24
          $region23: #{bottleneck_forward.8} parent=19 // pred_region
            // Predicated region
            $region25: #{bottleneck_forward.8} parent=23 // pred_check
              _
            $region26: #{bottleneck_forward.8} parent=23 // pred_check_branch
              %175 = sbr.rel target = $region28
            $region27: #{bottleneck_forward.8} parent=23 // pred_region
              // Predicated region
              $region40: #{bottleneck_forward.8} parent=27 // pred_check
                _
              $region41: #{bottleneck_forward.8} parent=27 // pred_check_branch
                %220 = sbr.rel (0) target = $region43
              $region42: #{bottleneck_forward.8} parent=27 // pred_region
                loop: start=0, step=1, limit=1
                $region44: #{bottleneck_forward.8} parent=42 // loop_pre_header
                  _
                $region45: #{bottleneck_forward.8} parent=42 // loop_header
                  %s222 = sphi 0, %s226
                  %p223 = scmp.ge.s32.totalorder %s222, 1
                  %s227 = sphi %s171, %s171
                  %s228 = sphi %s166, %s166
                $region46: #{bottleneck_forward.8} parent=42 // loop_header_branch
                  %225 = sbr.rel (%p223) target = $region50
                $region47: #{bottleneck_forward.8} parent=42 // loop_body
                  _
                $region48: #{bottleneck_forward.8} parent=42 // loop_footer
                  %s226 = sadd.s32 1, %s222
                $region49: #{bottleneck_forward.8} parent=42 // loop_footer_branch
                  %221 = sbr.rel target = $region45
                $region50: #{bottleneck_forward.8} parent=42 // loop_exit
                  _
                loop: start=0, step=1, limit=1
                $region51: #{bottleneck_forward.8} parent=42 // loop_pre_header
                  _
                $region52: #{bottleneck_forward.8} parent=42 // loop_header
                  %s231 = sphi 0, %s235
                  %p232 = scmp.ge.s32.totalorder %s231, 1
                  %s236 = sphi %s171, %s171
                  %s237 = sphi %s166, %s166
                $region53: #{bottleneck_forward.8} parent=42 // loop_header_branch
                  %234 = sbr.rel (%p232) target = $region57
                $region54: #{bottleneck_forward.8} parent=42 // loop_body
                  %v238 = vld [vmem:[%s236] sm:$0xf]
                  %239 = vst [vmem:[%s237] sm:$0xf] %v238
                  %v240 = vld [vmem:[%s236 + $0x24] sm:$0xf]
                  %241 = vst [vmem:[%s237 + $0x4] sm:$0xf] %v240
                  %v242 = vld [vmem:[%s236 + $0x48] sm:$0xf]
                  %243 = vst [vmem:[%s237 + $0x8] sm:$0xf] %v242
                  %v244 = vld [vmem:[%s236 + $0x6c] sm:$0xf]
                  %245 = vst [vmem:[%s237 + $0xc] sm:$0xf] %v244
                  %v246 = vld [vmem:[%s236 + $0x90] sm:$0xf]
                  %247 = vst [vmem:[%s237 + $0x10] sm:$0xf] %v246
                  %v248 = vld [vmem:[%s236 + $0xb4] sm:$0xf]
                  %249 = vst [vmem:[%s237 + $0x14] sm:$0xf] %v248
                  %v250 = vld [vmem:[%s236 + $0xd8] sm:$0xf]
                  %251 = vst [vmem:[%s237 + $0x18] sm:$0xf] %v250
                  %v252 = vld [vmem:[%s236 + $0xfc] sm:$0xf]
                  %253 = vst [vmem:[%s237 + $0x1c] sm:$0xf] %v252
                  %v254 = vld [vmem:[%s236 + $0x120] sm:$0xf]
                  %255 = vst [vmem:[%s237 + $0x20] sm:$0xf] %v254
                  %v256 = vld [vmem:[%s236 + $0x144] sm:$0xf]
                  %257 = vst [vmem:[%s237 + $0x24] sm:$0xf] %v256
                  %v258 = vld [vmem:[%s236 + $0x168] sm:$0xf]
                  %259 = vst [vmem:[%s237 + $0x28] sm:$0xf] %v258
                  %v260 = vld [vmem:[%s236 + $0x18c] sm:$0xf]
                  %261 = vst [vmem:[%s237 + $0x2c] sm:$0xf] %v260
                  %v262 = vld [vmem:[%s236 + $0x1b0] sm:$0xf]
                  %263 = vst [vmem:[%s237 + $0x30] sm:$0xf] %v262
                  %v264 = vld [vmem:[%s236 + $0x1d4] sm:$0xf]
                  %265 = vst [vmem:[%s237 + $0x34] sm:$0xf] %v264
                  %v266 = vld [vmem:[%s236 + $0x1f8] sm:$0xf]
                  %267 = vst [vmem:[%s237 + $0x38] sm:$0xf] %v266
                  %v268 = vld [vmem:[%s236 + $0x21c] sm:$0xf]
                  %269 = vst [vmem:[%s237 + $0x3c] sm:$0xf] %v268
                $region55: #{bottleneck_forward.8} parent=42 // loop_footer
                  %s235 = sadd.s32 1, %s231
                $region56: #{bottleneck_forward.8} parent=42 // loop_footer_branch
                  %230 = sbr.rel target = $region52
                $region57: #{bottleneck_forward.8} parent=42 // loop_exit
                  _
              $region43: #{bottleneck_forward.8} parent=27 // pred_fallthru
                _
            $region28: #{bottleneck_forward.8} parent=23 // pred_fallthru
              _
            // Predicated region
            $region29: #{bottleneck_forward.8} parent=23 // pred_check
              _
            $region30: #{bottleneck_forward.8} parent=23 // pred_check_branch
              %177 = sbr.rel (0) target = $region32
            $region31: #{bottleneck_forward.8} parent=23 // pred_region
              loop: start=0, step=1, limit=1
              $region33: #{bottleneck_forward.8} parent=31 // loop_pre_header
                _
              $region34: #{bottleneck_forward.8} parent=31 // loop_header
                %s180 = sphi 0, %s184
                %p181 = scmp.ge.s32.totalorder %s180, 1
                %s185 = sphi %s171, %s171
                %s186 = sphi %s166, %s166
              $region35: #{bottleneck_forward.8} parent=31 // loop_header_branch
                %183 = sbr.rel (%p181) target = $region39
              $region36: #{bottleneck_forward.8} parent=31 // loop_body
                %v187 = vld [vmem:[%s185] sm:$0xf]
                %188 = vst [vmem:[%s186] sm:$0xf] %v187
                %v189 = vld [vmem:[%s185 + $0x24] sm:$0xf]
                %190 = vst [vmem:[%s186 + $0x4] sm:$0xf] %v189
                %v191 = vld [vmem:[%s185 + $0x48] sm:$0xf]
                %192 = vst [vmem:[%s186 + $0x8] sm:$0xf] %v191
                %v193 = vld [vmem:[%s185 + $0x6c] sm:$0xf]
                %194 = vst [vmem:[%s186 + $0xc] sm:$0xf] %v193
                %v195 = vld [vmem:[%s185 + $0x90] sm:$0xf]
                %196 = vst [vmem:[%s186 + $0x10] sm:$0xf] %v195
                %v197 = vld [vmem:[%s185 + $0xb4] sm:$0xf]
                %198 = vst [vmem:[%s186 + $0x14] sm:$0xf] %v197
                %v199 = vld [vmem:[%s185 + $0xd8] sm:$0xf]
                %200 = vst [vmem:[%s186 + $0x18] sm:$0xf] %v199
                %v201 = vld [vmem:[%s185 + $0xfc] sm:$0xf]
                %202 = vst [vmem:[%s186 + $0x1c] sm:$0xf] %v201
                %v203 = vld [vmem:[%s185 + $0x120] sm:$0xf]
                %204 = vst [vmem:[%s186 + $0x20] sm:$0xf] %v203
                %v205 = vld [vmem:[%s185 + $0x144] sm:$0xf]
                %206 = vst [vmem:[%s186 + $0x24] sm:$0xf] %v205
                %v207 = vld [vmem:[%s185 + $0x168] sm:$0xf]
                %208 = vst [vmem:[%s186 + $0x28] sm:$0xf] %v207
                %v209 = vld [vmem:[%s185 + $0x18c] sm:$0xf]
                %210 = vst [vmem:[%s186 + $0x2c] sm:$0xf] %v209
                %v211 = vld [vmem:[%s185 + $0x1b0] sm:$0xf]
                %212 = vst [vmem:[%s186 + $0x30] sm:$0xf] %v211
                %v213 = vld [vmem:[%s185 + $0x1d4] sm:$0xf]
                %214 = vst [vmem:[%s186 + $0x34] sm:$0xf] %v213
                %v215 = vld [vmem:[%s185 + $0x1f8] sm:$0xf]
                %216 = vst [vmem:[%s186 + $0x38] sm:$0xf] %v215
                %v217 = vld [vmem:[%s185 + $0x21c] sm:$0xf]
                %218 = vst [vmem:[%s186 + $0x3c] sm:$0xf] %v217
              $region37: #{bottleneck_forward.8} parent=31 // loop_footer
                %s184 = sadd.s32 1, %s180
              $region38: #{bottleneck_forward.8} parent=31 // loop_footer_branch
                %179 = sbr.rel target = $region34
              $region39: #{bottleneck_forward.8} parent=31 // loop_exit
                _
            $region32: #{bottleneck_forward.8} parent=23 // pred_fallthru
              _
          $region24: #{bottleneck_forward.8} parent=19 // pred_fallthru
            _
          %270 = vnop
        $region20: #{bottleneck_forward.8} parent=15 // pred_fallthru
          _
        // Predicated region
        $region58: #{bottleneck_forward.8} parent=15 // pred_check
          %p271 = pneg %p79
        $region59: #{bottleneck_forward.8} parent=15 // pred_check_branch
          %273 = sbr.rel (%p271) target = $region61
        $region60: #{bottleneck_forward.8} parent=15 // pred_region
          %s274 = smul.u32 16, %s19
          %p275 = scmp.lt.s32.totalorder %s274, 143
          %s276 = scalar_select %p275, %s274, 143
          %p277 = scmp.lt.s32.totalorder %s18, 0
          %s278 = scalar_select %p277, %s18, 0
          %s279 = sadd.s32 %s278, %s276
          %s280 = smul.addr %s279, 4
          %s281 = scalar_lea.vmem %s1, %s280
          %s282 = smul.u32 16, %s19
        $region61: #{bottleneck_forward.8} parent=15 // pred_fallthru
          _
      $region16: #{bottleneck_forward.8} parent=5 // pred_fallthru
        _
      %p283 = scmp.le.s32.totalorder 1, %s10
      %p284 = scmp.lt.s32.totalorder %s10, 10
      %p285 = pnand %p283, %p284
      %p286 = pneg %p285
      // Predicated region
      $region62: #{bottleneck_forward.8} parent=5 // pred_check
        _
      $region63: #{bottleneck_forward.8} parent=5 // pred_check_branch
        %288 = sbr.rel (%p285) target = $region65
      $region64: #{bottleneck_forward.8} parent=5 // pred_region
        %s289 = ssub.s32 %s10, 1
        %s290 = sand.u32 %s44, 1
        %s291 = sand.u32 %s44, 1
        %s292 = smul.addr %s291, 64
        %s293 = scalar_lea.vmem [#allocation3], %s292
        // Predicated region
        $region66: #{bottleneck_forward.8} parent=64 // pred_check
          %p294 = pneg %p57
        $region67: #{bottleneck_forward.8} parent=64 // pred_check_branch
          %296 = sbr.rel (%p294) target = $region69
        $region68: #{bottleneck_forward.8} parent=64 // pred_region
          _
        $region69: #{bottleneck_forward.8} parent=64 // pred_fallthru
          _
        %s297 = sand.u32 %s44, 1
        %s298 = sand.u32 %s44, 1
        %s299 = smul.addr %s298, 64
        %s300 = scalar_lea.vmem [#allocation3], %s299
        %p301 = pneg %p57
        %p302 = pneg %p54
        %s303 = smul.u32 16, %s22
        %p304 = scmp.lt.s32.totalorder %s303, 143
        %s305 = scalar_select %p304, %s303, 143
        %p306 = scmp.lt.s32.totalorder %s21, 0
        %s307 = scalar_select %p306, %s21, 0
        %s308 = sadd.s32 %s307, %s305
        %s309 = smul.addr %s308, 4
        %s310 = scalar_lea.vmem %s1, %s309
        %p311 = pneg %p85
        %p312 = pneg %p82
        %p313 = pneg %p113
        %p314 = pneg %p110
        %s315 = smul.u32 16, %s20
        %p316 = scmp.lt.s32.totalorder %s315, 15
        %s317 = scalar_select %p316, %s315, 15
        %p318 = scmp.lt.s32.totalorder %s21, 0
        %s319 = scalar_select %p318, %s21, 0
        %s320 = sadd.s32 %s319, %s317
        %s321 = smul.addr %s320, 4
        %s322 = scalar_lea.vmem %s2, %s321
        %p323 = pneg %p141
        %p324 = pneg %p138
        %p325 = scmp.lt.s32.totalorder %s20, 0
        %s326 = scalar_select %p325, %s20, 0
        %p327 = scmp.lt.s32.totalorder %s21, 0
        %s328 = scalar_select %p327, %s21, 0
        %s329 = sadd.s32 %s328, %s326
        %s330 = smul.addr %s329, 8
        %s331 = scalar_lea.vmem %s3, %s330
        %s332 = smul.u32 16, %s20
        %s333 = smul.u32 16, %s22
        %p334 = scmp.lt.s32.totalorder %s333, 143
        %s335 = scalar_select %p334, %s333, 143
        %p336 = scmp.lt.s32.totalorder %s21, 0
        %s337 = scalar_select %p336, %s21, 0
        %s338 = sadd.s32 %s337, %s335
        %s339 = smul.addr %s338, 4
        %s340 = scalar_lea.vmem %s1, %s339
        %s341 = smul.u32 16, %s22
        %s342 = smul.u32 16, %s20
        %p343 = scmp.lt.s32.totalorder %s342, 15
        %s344 = scalar_select %p343, %s342, 15
        %p345 = scmp.lt.s32.totalorder %s21, 0
        %s346 = scalar_select %p345, %s21, 0
        %s347 = sadd.s32 %s346, %s344
        %s348 = smul.addr %s347, 4
        %s349 = scalar_lea.vmem %s2, %s348
        %s350 = smul.u32 16, %s20
        %p351 = scmp.lt.s32.totalorder %s20, 0
        %s352 = scalar_select %p351, %s20, 0
        %p353 = scmp.lt.s32.totalorder %s21, 0
        %s354 = scalar_select %p353, %s21, 0
        %s355 = sadd.s32 %s354, %s352
        %s356 = smul.addr %s355, 8
        %s357 = scalar_lea.vmem %s3, %s356
        %p359 = scmp.eq.s32.totalorder %s22, 0
        // Predicated region
        $region70: #{bottleneck_forward.8} parent=64 // pred_check
          %p360 = pneg %p359
        $region71: #{bottleneck_forward.8} parent=64 // pred_check_branch
          %362 = sbr.rel (%p360) target = $region73
        $region72: #{bottleneck_forward.8} parent=64 // pred_region
          %363 = vst [vmem:[#allocation2] sm:$0xff] 0.0
          %364 = vst [vmem:[#allocation2 + $0x8] sm:$0xff] 0.0
          %365 = vst [vmem:[#allocation2 + $0x10] sm:$0xff] 0.0
          %366 = vst [vmem:[#allocation2 + $0x18] sm:$0xff] 0.0
          %367 = vst [vmem:[#allocation2 + $0x20] sm:$0xff] 0.0
          %368 = vst [vmem:[#allocation2 + $0x28] sm:$0xff] 0.0
          %369 = vst [vmem:[#allocation2 + $0x30] sm:$0xff] 0.0
          %370 = vst [vmem:[#allocation2 + $0x38] sm:$0xff] 0.0
          %371 = vst [vmem:[#allocation2 + $0x40] sm:$0xff] 0.0
          %372 = vst [vmem:[#allocation2 + $0x48] sm:$0xff] 0.0
          %373 = vst [vmem:[#allocation2 + $0x50] sm:$0xff] 0.0
          %374 = vst [vmem:[#allocation2 + $0x58] sm:$0xff] 0.0
          %375 = vst [vmem:[#allocation2 + $0x60] sm:$0xff] 0.0
          %376 = vst [vmem:[#allocation2 + $0x68] sm:$0xff] 0.0
          %377 = vst [vmem:[#allocation2 + $0x70] sm:$0xff] 0.0
          %378 = vst [vmem:[#allocation2 + $0x78] sm:$0xff] 0.0
        $region73: #{bottleneck_forward.8} parent=64 // pred_fallthru
          _
        %v379 = vld [vmem:[%s293] sm:$0xf]
        %v380 = vld [vmem:[%s293 + $0x4] sm:$0xf]
        %v381 = vld [vmem:[%s293 + $0x8] sm:$0xf]
        %v382 = vld [vmem:[%s293 + $0xc] sm:$0xf]
        %v383 = vld [vmem:[%s293 + $0x10] sm:$0xf]
        %v384 = vld [vmem:[%s293 + $0x14] sm:$0xf]
        %v385 = vld [vmem:[%s293 + $0x18] sm:$0xf]
        %v386 = vld [vmem:[%s293 + $0x1c] sm:$0xf]
        %v387 = vld [vmem:[%s293 + $0x20] sm:$0xf]
        %v388 = vld [vmem:[%s293 + $0x24] sm:$0xf]
        %v389 = vld [vmem:[%s293 + $0x28] sm:$0xf]
        %v390 = vld [vmem:[%s293 + $0x2c] sm:$0xf]
        %v391 = vld [vmem:[%s293 + $0x30] sm:$0xf]
        %v392 = vld [vmem:[%s293 + $0x34] sm:$0xf]
        %v393 = vld [vmem:[%s293 + $0x38] sm:$0xf]
        %v394 = vld [vmem:[%s293 + $0x3c] sm:$0xf]
        %v395 = vld [vmem:[#allocation2] sm:$0xff]
        %v396 = vld [vmem:[#allocation2 + $0x8] sm:$0xff]
        %v397 = vld [vmem:[#allocation2 + $0x10] sm:$0xff]
        %v398 = vld [vmem:[#allocation2 + $0x18] sm:$0xff]
        %v399 = vld [vmem:[#allocation2 + $0x20] sm:$0xff]
        %v400 = vld [vmem:[#allocation2 + $0x28] sm:$0xff]
        %v401 = vld [vmem:[#allocation2 + $0x30] sm:$0xff]
        %v402 = vld [vmem:[#allocation2 + $0x38] sm:$0xff]
        %v403 = vld [vmem:[#allocation2 + $0x40] sm:$0xff]
        %v404 = vld [vmem:[#allocation2 + $0x48] sm:$0xff]
        %v405 = vld [vmem:[#allocation2 + $0x50] sm:$0xff]
        %v406 = vld [vmem:[#allocation2 + $0x58] sm:$0xff]
        %v407 = vld [vmem:[#allocation2 + $0x60] sm:$0xff]
        %v408 = vld [vmem:[#allocation2 + $0x68] sm:$0xff]
        %v409 = vld [vmem:[#allocation2 + $0x70] sm:$0xff]
        %v410 = vld [vmem:[#allocation2 + $0x78] sm:$0xff]
        %v411 = vld [vmem:[%s340] sm:$0xf]
        %v412 = vld [vmem:[%s340 + $0x4] sm:$0xf]
        %v413 = vld [vmem:[%s340 + $0x8] sm:$0xf]
        %v414 = vld [vmem:[%s340 + $0xc] sm:$0xf]
        %v415 = vld [vmem:[%s340 + $0x10] sm:$0xf]
        %v416 = vld [vmem:[%s340 + $0x14] sm:$0xf]
        %v417 = vld [vmem:[%s340 + $0x18] sm:$0xf]
        %v418 = vld [vmem:[%s340 + $0x1c] sm:$0xf]
        %v419 = vld [vmem:[%s340 + $0x20] sm:$0xf]
        %v420 = vld [vmem:[%s340 + $0x24] sm:$0xf]
        %v421 = vld [vmem:[%s340 + $0x28] sm:$0xf]
        %v422 = vld [vmem:[%s340 + $0x2c] sm:$0xf]
        %v423 = vld [vmem:[%s340 + $0x30] sm:$0xf]
        %v424 = vld [vmem:[%s340 + $0x34] sm:$0xf]
        %v425 = vld [vmem:[%s340 + $0x38] sm:$0xf]
        %v426 = vld [vmem:[%s340 + $0x3c] sm:$0xf]
        %v443 = vunpack.c.l.b16 %v379
        %v444 = vunpack.c.l.b16 %v380
        %v445 = vunpack.c.l.b16 %v381
        %v446 = vunpack.c.l.b16 %v382
        %v447 = vunpack.c.l.b16 %v383
        %v448 = vunpack.c.l.b16 %v384
        %v449 = vunpack.c.l.b16 %v385
        %v450 = vunpack.c.l.b16 %v386
        %v451 = vunpack.c.l.b16 %v387
        %v452 = vunpack.c.l.b16 %v388
        %v453 = vunpack.c.l.b16 %v389
        %v454 = vunpack.c.l.b16 %v390
        %v455 = vunpack.c.l.b16 %v391
        %v456 = vunpack.c.l.b16 %v392
        %v457 = vunpack.c.l.b16 %v393
        %v458 = vunpack.c.l.b16 %v394
        %v459 = vpack.c.b16 %v444, %v443
        %v460 = vpack.c.b16 %v446, %v445
        %v461 = vpack.c.b16 %v448, %v447
        %v462 = vpack.c.b16 %v450, %v449
        %v463 = vpack.c.b16 %v452, %v451
        %v464 = vpack.c.b16 %v454, %v453
        %v465 = vpack.c.b16 %v456, %v455
        %v466 = vpack.c.b16 %v458, %v457
        %v491 = vunpack.c.l.b16 %v411
        %v492 = vunpack.c.l.b16 %v412
        %v493 = vunpack.c.l.b16 %v413
        %v494 = vunpack.c.l.b16 %v414
        %v495 = vunpack.c.l.b16 %v415
        %v496 = vunpack.c.l.b16 %v416
        %v497 = vunpack.c.l.b16 %v417
        %v498 = vunpack.c.l.b16 %v418
        %v499 = vunpack.c.l.b16 %v419
        %v500 = vunpack.c.l.b16 %v420
        %v501 = vunpack.c.l.b16 %v421
        %v502 = vunpack.c.l.b16 %v422
        %v503 = vunpack.c.l.b16 %v423
        %v504 = vunpack.c.l.b16 %v424
        %v505 = vunpack.c.l.b16 %v425
        %v506 = vunpack.c.l.b16 %v426
        %v507 = vpack.c.b16 %v492, %v491
        %v508 = vpack.c.b16 %v494, %v493
        %v509 = vpack.c.b16 %v496, %v495
        %v510 = vpack.c.b16 %v498, %v497
        %v511 = vpack.c.b16 %v500, %v499
        %v512 = vpack.c.b16 %v502, %v501
        %v513 = vpack.c.b16 %v504, %v503
        %v514 = vpack.c.b16 %v506, %v505
        %523 = vmatprep.subr.bf16.mxu0 0
        %524 = vmatpush1.bf16.msra.mxu0 %v507
        %525 = vmatprep.subr.bf16.mxu0 0
        %526 = vmatpush1.bf16.msra.mxu0 %v508
        %527 = vmatprep.subr.bf16.mxu0 0
        %528 = vmatpush1.bf16.msra.mxu0 %v509
        %529 = vmatprep.subr.bf16.mxu0 0
        %530 = vmatpush1.bf16.msra.mxu0 %v510
        %531 = vmatprep.subr.bf16.mxu0 0
        %532 = vmatpush1.bf16.msra.mxu0 %v511
        %533 = vmatprep.subr.bf16.mxu0 0
        %534 = vmatpush1.bf16.msra.mxu0 %v512
        %535 = vmatprep.subr.bf16.mxu0 0
        %536 = vmatpush1.bf16.msra.mxu0 %v513
        %537 = vmatprep.subr.bf16.mxu0 0
        %538 = vmatpush1.bf16.msra.mxu0 %v514
        %539 = vmatprep.subr.bf16.mxu0 0
        %540 = vmatpush1.bf16.msra.mxu0 0
        %541 = vmatprep.subr.bf16.mxu0 0
        %542 = vmatpush1.bf16.msra.mxu0 0
        %543 = vmatprep.subr.bf16.mxu0 0
        %544 = vmatpush1.bf16.msra.mxu0 0
        %545 = vmatprep.subr.bf16.mxu0 0
        %546 = vmatpush1.bf16.msra.mxu0 0
        %547 = vmatprep.subr.bf16.mxu0 0
        %548 = vmatpush1.bf16.msra.mxu0 0
        %549 = vmatprep.subr.bf16.mxu0 0
        %550 = vmatpush1.bf16.msra.mxu0 0
        %551 = vmatprep.subr.bf16.mxu0 0
        %552 = vmatpush1.bf16.msra.mxu0 0
        %553 = vmatprep.subr.bf16.mxu0 0
        %554 = vmatpush1.bf16.msra.mxu0 0
        %555 = vmatprep.mubr.bf16.mxu0 0
        %556 = vmatmul.mubr.bf16.gmra.mrb[0].mxu0 %v459
        %v557 = vpop.f32.mrb[0].mxu0
        %v558 = vadd.f32 0.0, %v557
        %v559 = vpop.f32.mrb[0].mxu0
        %v560 = vpop.f32.mrb[0].mxu0
        %v561 = vadd.f32 0.0, %v560
        %v562 = vpop.f32.mrb[0].mxu0
        %563 = vmatprep.mubr.bf16.mxu0 0
        %564 = vmatmul.mubr.bf16.gmra.mrb[0].mxu0 %v460
        %v565 = vpop.f32.mrb[0].mxu0
        %v566 = vadd.f32 0.0, %v565
        %v567 = vpop.f32.mrb[0].mxu0
        %v568 = vpop.f32.mrb[0].mxu0
        %v569 = vadd.f32 0.0, %v568
        %v570 = vpop.f32.mrb[0].mxu0
        %571 = vmatprep.mubr.bf16.mxu0 0
        %572 = vmatmul.mubr.bf16.gmra.mrb[0].mxu0 %v461
        %v573 = vpop.f32.mrb[0].mxu0
        %v574 = vadd.f32 0.0, %v573
        %v575 = vpop.f32.mrb[0].mxu0
        %v576 = vpop.f32.mrb[0].mxu0
        %v577 = vadd.f32 0.0, %v576
        %v578 = vpop.f32.mrb[0].mxu0
        %579 = vmatprep.mubr.bf16.mxu0 0
        %580 = vmatmul.mubr.bf16.gmra.mrb[0].mxu0 %v462
        %v581 = vpop.f32.mrb[0].mxu0
        %v582 = vadd.f32 0.0, %v581
        %v583 = vpop.f32.mrb[0].mxu0
        %v584 = vpop.f32.mrb[0].mxu0
        %v585 = vadd.f32 0.0, %v584
        %v586 = vpop.f32.mrb[0].mxu0
        %587 = vmatprep.mubr.bf16.mxu0 0
        %588 = vmatmul.mubr.bf16.gmra.mrb[0].mxu0 %v463
        %v589 = vpop.f32.mrb[0].mxu0
        %v590 = vadd.f32 0.0, %v589
        %v591 = vpop.f32.mrb[0].mxu0
        %v592 = vpop.f32.mrb[0].mxu0
        %v593 = vadd.f32 0.0, %v592
        %v594 = vpop.f32.mrb[0].mxu0
        %595 = vmatprep.mubr.bf16.mxu0 0
        %596 = vmatmul.mubr.bf16.gmra.mrb[0].mxu0 %v464
        %v597 = vpop.f32.mrb[0].mxu0
        %v598 = vadd.f32 0.0, %v597
        %v599 = vpop.f32.mrb[0].mxu0
        %v600 = vpop.f32.mrb[0].mxu0
        %v601 = vadd.f32 0.0, %v600
        %v602 = vpop.f32.mrb[0].mxu0
        %603 = vmatprep.mubr.bf16.mxu0 0
        %604 = vmatmul.mubr.bf16.gmra.mrb[0].mxu0 %v465
        %v605 = vpop.f32.mrb[0].mxu0
        %v606 = vadd.f32 0.0, %v605
        %v607 = vpop.f32.mrb[0].mxu0
        %v608 = vpop.f32.mrb[0].mxu0
        %v609 = vadd.f32 0.0, %v608
        %v610 = vpop.f32.mrb[0].mxu0
        %611 = vmatprep.mubr.bf16.mxu0 0
        %612 = vmatmul.mubr.bf16.gmra.mrb[0].mxu0 %v466
        %v613 = vpop.f32.mrb[0].mxu0
        %v614 = vadd.f32 0.0, %v613
        %v615 = vpop.f32.mrb[0].mxu0
        %v616 = vpop.f32.mrb[0].mxu0
        %v617 = vadd.f32 0.0, %v616
        %v618 = vpop.f32.mrb[0].mxu0
        %619 = vdwg.mxu0
        %v620 = vadd.f32 %v395, %v558
        %v621 = vadd.f32 %v396, %v561
        %v622 = vadd.f32 %v397, %v566
        %v623 = vadd.f32 %v398, %v569
        %v624 = vadd.f32 %v399, %v574
        %v625 = vadd.f32 %v400, %v577
        %v626 = vadd.f32 %v401, %v582
        %v627 = vadd.f32 %v402, %v585
        %v628 = vadd.f32 %v403, %v590
        %v629 = vadd.f32 %v404, %v593
        %v630 = vadd.f32 %v405, %v598
        %v631 = vadd.f32 %v406, %v601
        %v632 = vadd.f32 %v407, %v606
        %v633 = vadd.f32 %v408, %v609
        %v634 = vadd.f32 %v409, %v614
        %v635 = vadd.f32 %v410, %v617
        %636 = vst [vmem:[#allocation2] sm:$0xff] %v620
        %637 = vst [vmem:[#allocation2 + $0x8] sm:$0xff] %v621
        %638 = vst [vmem:[#allocation2 + $0x10] sm:$0xff] %v622
        %639 = vst [vmem:[#allocation2 + $0x18] sm:$0xff] %v623
        %640 = vst [vmem:[#allocation2 + $0x20] sm:$0xff] %v624
        %641 = vst [vmem:[#allocation2 + $0x28] sm:$0xff] %v625
        %642 = vst [vmem:[#allocation2 + $0x30] sm:$0xff] %v626
        %643 = vst [vmem:[#allocation2 + $0x38] sm:$0xff] %v627
        %644 = vst [vmem:[#allocation2 + $0x40] sm:$0xff] %v628
        %645 = vst [vmem:[#allocation2 + $0x48] sm:$0xff] %v629
        %646 = vst [vmem:[#allocation2 + $0x50] sm:$0xff] %v630
        %647 = vst [vmem:[#allocation2 + $0x58] sm:$0xff] %v631
        %648 = vst [vmem:[#allocation2 + $0x60] sm:$0xff] %v632
        %649 = vst [vmem:[#allocation2 + $0x68] sm:$0xff] %v633
        %650 = vst [vmem:[#allocation2 + $0x70] sm:$0xff] %v634
        %651 = vst [vmem:[#allocation2 + $0x78] sm:$0xff] %v635
        %p652 = scmp.eq.s32.totalorder %s22, 8
        // Predicated region
        $region74: #{bottleneck_forward.8} parent=64 // pred_check
          %p653 = pneg %p652
        $region75: #{bottleneck_forward.8} parent=64 // pred_check_branch
          %655 = sbr.rel (%p653) target = $region77
        $region76: #{bottleneck_forward.8} parent=64 // pred_region
          %v656 = vld [vmem:[#allocation2] sm:$0xff]
          %v657 = vld [vmem:[#allocation2 + $0x8] sm:$0xff]
          %v658 = vld [vmem:[#allocation2 + $0x10] sm:$0xff]
          %v659 = vld [vmem:[#allocation2 + $0x18] sm:$0xff]
          %v660 = vld [vmem:[#allocation2 + $0x20] sm:$0xff]
          %v661 = vld [vmem:[#allocation2 + $0x28] sm:$0xff]
          %v662 = vld [vmem:[#allocation2 + $0x30] sm:$0xff]
          %v663 = vld [vmem:[#allocation2 + $0x38] sm:$0xff]
          %v664 = vld [vmem:[#allocation2 + $0x40] sm:$0xff]
          %v665 = vld [vmem:[#allocation2 + $0x48] sm:$0xff]
          %v666 = vld [vmem:[#allocation2 + $0x50] sm:$0xff]
          %v667 = vld [vmem:[#allocation2 + $0x58] sm:$0xff]
          %v668 = vld [vmem:[#allocation2 + $0x60] sm:$0xff]
          %v669 = vld [vmem:[#allocation2 + $0x68] sm:$0xff]
          %v670 = vld [vmem:[#allocation2 + $0x70] sm:$0xff]
          %v671 = vld [vmem:[#allocation2 + $0x78] sm:$0xff]
          %v672 = vpack.c.bf16 %v657, %v656
          %v673 = vpack.c.bf16 %v659, %v658
          %v674 = vpack.c.bf16 %v661, %v660
          %v675 = vpack.c.bf16 %v663, %v662
          %v676 = vpack.c.bf16 %v665, %v664
          %v677 = vpack.c.bf16 %v667, %v666
          %v678 = vpack.c.bf16 %v669, %v668
          %v679 = vpack.c.bf16 %v671, %v670
          %v688 = vunpack.c.l.b16 %v672
          %v689 = vunpack.c.h.b16 %v672
          %v690 = vunpack.c.l.b16 %v673
          %v691 = vunpack.c.h.b16 %v673
          %v692 = vunpack.c.l.b16 %v674
          %v693 = vunpack.c.h.b16 %v674
          %v694 = vunpack.c.l.b16 %v675
          %v695 = vunpack.c.h.b16 %v675
          %v696 = vunpack.c.l.b16 %v676
          %v697 = vunpack.c.h.b16 %v676
          %v698 = vunpack.c.l.b16 %v677
          %v699 = vunpack.c.h.b16 %v677
          %v700 = vunpack.c.l.b16 %v678
          %v701 = vunpack.c.h.b16 %v678
          %v702 = vunpack.c.l.b16 %v679
          %v703 = vunpack.c.h.b16 %v679
          %v704 = vpack.c.b16 %v688, %v688
          %v705 = vpack.c.b16 %v689, %v689
          %v706 = vpack.c.b16 %v690, %v690
          %v707 = vpack.c.b16 %v691, %v691
          %v708 = vpack.c.b16 %v692, %v692
          %v709 = vpack.c.b16 %v693, %v693
          %v710 = vpack.c.b16 %v694, %v694
          %v711 = vpack.c.b16 %v695, %v695
          %v712 = vpack.c.b16 %v696, %v696
          %v713 = vpack.c.b16 %v697, %v697
          %v714 = vpack.c.b16 %v698, %v698
          %v715 = vpack.c.b16 %v699, %v699
          %v716 = vpack.c.b16 %v700, %v700
          %v717 = vpack.c.b16 %v701, %v701
          %v718 = vpack.c.b16 %v702, %v702
          %v719 = vpack.c.b16 %v703, %v703
          %736 = vst [vmem:[%s349] sm:$0xf] %v704
          %737 = vst [vmem:[%s349 + $0x4] sm:$0xf] %v705
          %738 = vst [vmem:[%s349 + $0x8] sm:$0xf] %v706
          %739 = vst [vmem:[%s349 + $0xc] sm:$0xf] %v707
          %740 = vst [vmem:[%s349 + $0x10] sm:$0xf] %v708
          %741 = vst [vmem:[%s349 + $0x14] sm:$0xf] %v709
          %742 = vst [vmem:[%s349 + $0x18] sm:$0xf] %v710
          %743 = vst [vmem:[%s349 + $0x1c] sm:$0xf] %v711
          %744 = vst [vmem:[%s349 + $0x20] sm:$0xf] %v712
          %745 = vst [vmem:[%s349 + $0x24] sm:$0xf] %v713
          %746 = vst [vmem:[%s349 + $0x28] sm:$0xf] %v714
          %747 = vst [vmem:[%s349 + $0x2c] sm:$0xf] %v715
          %748 = vst [vmem:[%s349 + $0x30] sm:$0xf] %v716
          %749 = vst [vmem:[%s349 + $0x34] sm:$0xf] %v717
          %750 = vst [vmem:[%s349 + $0x38] sm:$0xf] %v718
          %751 = vst [vmem:[%s349 + $0x3c] sm:$0xf] %v719
          %v752 = vadd.f32 %v656, %v657
          %v753 = vadd.f32 %v752, %v658
          %v754 = vadd.f32 %v753, %v659
          %v755 = vadd.f32 %v754, %v660
          %v756 = vadd.f32 %v755, %v661
          %v757 = vadd.f32 %v756, %v662
          %v758 = vadd.f32 %v757, %v663
          %v759 = vadd.f32 %v758, %v664
          %v760 = vadd.f32 %v759, %v665
          %v761 = vadd.f32 %v760, %v666
          %v762 = vadd.f32 %v761, %v667
          %v763 = vadd.f32 %v762, %v668
          %v764 = vadd.f32 %v763, %v669
          %v765 = vadd.f32 %v764, %v670
          %v766 = vadd.f32 %v765, %v671
          %v767 = vrot.slane %v766, 4
          %v768 = vadd.f32 %v766, %v767
          %v769 = vrot.slane %v768, 2
          %v770 = vadd.f32 %v768, %v769
          %v771 = vrot.slane %v770, 1
          %v772 = vadd.f32 %v770, %v771
          %v773 = vmul.f32 %v656, %v656
          %v774 = vmul.f32 %v657, %v657
          %v775 = vmul.f32 %v658, %v658
          %v776 = vmul.f32 %v659, %v659
          %v777 = vmul.f32 %v660, %v660
          %v778 = vmul.f32 %v661, %v661
          %v779 = vmul.f32 %v662, %v662
          %v780 = vmul.f32 %v663, %v663
          %v781 = vmul.f32 %v664, %v664
          %v782 = vmul.f32 %v665, %v665
          %v783 = vmul.f32 %v666, %v666
          %v784 = vmul.f32 %v667, %v667
          %v785 = vmul.f32 %v668, %v668
          %v786 = vmul.f32 %v669, %v669
          %v787 = vmul.f32 %v670, %v670
          %v788 = vmul.f32 %v671, %v671
          %v789 = vadd.f32 %v773, %v774
          %v790 = vadd.f32 %v789, %v775
          %v791 = vadd.f32 %v790, %v776
          %v792 = vadd.f32 %v791, %v777
          %v793 = vadd.f32 %v792, %v778
          %v794 = vadd.f32 %v793, %v779
          %v795 = vadd.f32 %v794, %v780
          %v796 = vadd.f32 %v795, %v781
          %v797 = vadd.f32 %v796, %v782
          %v798 = vadd.f32 %v797, %v783
          %v799 = vadd.f32 %v798, %v784
          %v800 = vadd.f32 %v799, %v785
          %v801 = vadd.f32 %v800, %v786
          %v802 = vadd.f32 %v801, %v787
          %v803 = vadd.f32 %v802, %v788
          %v804 = vrot.slane %v803, 4
          %v805 = vadd.f32 %v803, %v804
          %v806 = vrot.slane %v805, 2
          %v807 = vadd.f32 %v805, %v806
          %v808 = vrot.slane %v807, 1
          %v809 = vadd.f32 %v807, %v808
          %vm810 = vcmask 1040384
          %v811 = vsel %vm810, %v772, %v809
          %vm812 = vcmask 1041408
          %v813 = vsel %vm812, %v811, 0.0
          %814 = vst [vmem:[%s357] sm:$0xff] %v813
        $region77: #{bottleneck_forward.8} parent=64 // pred_fallthru
          _
        %s815 = smul.u32 16, %s20
        %p816 = scmp.lt.s32.totalorder %s815, 15
        %s817 = scalar_select %p816, %s815, 15
        %p818 = scmp.lt.s32.totalorder %s21, 0
        %s819 = scalar_select %p818, %s21, 0
        %s820 = sadd.s32 %s819, %s817
        %s821 = smul.addr %s820, 4
        %s822 = scalar_lea.vmem %s2, %s821
        %p823 = scmp.lt.s32.totalorder %s20, 0
        %s824 = scalar_select %p823, %s20, 0
        %p825 = scmp.lt.s32.totalorder %s21, 0
        %s826 = scalar_select %p825, %s21, 0
        %s827 = sadd.s32 %s826, %s824
        %s828 = smul.addr %s827, 8
        %s829 = scalar_lea.vmem %s3, %s828
        // Predicated region
        $region78: #{bottleneck_forward.8} parent=64 // pred_check
          %p830 = pneg %p110
        $region79: #{bottleneck_forward.8} parent=64 // pred_check_branch
          %832 = sbr.rel (%p830) target = $region81
        $region80: #{bottleneck_forward.8} parent=64 // pred_region
          %s833 = smul.u32 16, %s20
        $region81: #{bottleneck_forward.8} parent=64 // pred_fallthru
          _
        // Predicated region
        $region82: #{bottleneck_forward.8} parent=64 // pred_check
          %p834 = pneg %p138
        $region83: #{bottleneck_forward.8} parent=64 // pred_check_branch
          %836 = sbr.rel (%p834) target = $region85
        $region84: #{bottleneck_forward.8} parent=64 // pred_region
          _
        $region85: #{bottleneck_forward.8} parent=64 // pred_fallthru
          _
        // Predicated region
        $region86: #{bottleneck_forward.8} parent=64 // pred_check
          %p837 = pneg %p110
        $region87: #{bottleneck_forward.8} parent=64 // pred_check_branch
          %839 = sbr.rel (%p837) target = $region89
        $region88: #{bottleneck_forward.8} parent=64 // pred_region
          %s840 = smul.u32 16, %s20
          %p841 = scmp.lt.s32.totalorder %s840, 15
          %s842 = scalar_select %p841, %s840, 15
          %p843 = scmp.lt.s32.totalorder %s21, 0
          %s844 = scalar_select %p843, %s21, 0
          %s845 = sadd.s32 %s844, %s842
          %s846 = smul.addr %s845, 4
          %s847 = scalar_lea.vmem %s2, %s846
        $region89: #{bottleneck_forward.8} parent=64 // pred_fallthru
          _
        // Predicated region
        $region90: #{bottleneck_forward.8} parent=64 // pred_check
          %p848 = pneg %p138
        $region91: #{bottleneck_forward.8} parent=64 // pred_check_branch
          %850 = sbr.rel (%p848) target = $region93
        $region92: #{bottleneck_forward.8} parent=64 // pred_region
          %p851 = scmp.lt.s32.totalorder %s20, 0
          %s852 = scalar_select %p851, %s20, 0
          %p853 = scmp.lt.s32.totalorder %s21, 0
          %s854 = scalar_select %p853, %s21, 0
          %s855 = sadd.s32 %s854, %s852
          %s856 = smul.addr %s855, 8
          %s857 = scalar_lea.vmem %s3, %s856
        $region93: #{bottleneck_forward.8} parent=64 // pred_fallthru
          _
      $region65: #{bottleneck_forward.8} parent=5 // pred_fallthru
        _
      %p858 = scmp.le.s32.totalorder 2, %s10
      // Predicated region
      $region94: #{bottleneck_forward.8} parent=5 // pred_check
        %p859 = pneg %p858
      $region95: #{bottleneck_forward.8} parent=5 // pred_check_branch
        %861 = sbr.rel (%p859) target = $region97
      $region96: #{bottleneck_forward.8} parent=5 // pred_region
        %s862 = ssub.s32 %s10, 2
      $region97: #{bottleneck_forward.8} parent=5 // pred_fallthru
        _
    $region6: #{bottleneck_forward.8} parent=1 // loop_footer
      %s14 = sadd.s32 1, %s10
    $region7: #{bottleneck_forward.8} parent=1 // loop_footer_branch
      %9 = sbr.rel target = $region3
    $region8: #{bottleneck_forward.8} parent=1 // loop_exit
      _

// kernel: bottleneck_forward.9
$region0: #{bottleneck_forward.9}
  #allocation0 [shape = 'u32[]', space=smem, size = 0x4, offset = 0x4, fixed_abs, tag = 'smem constant byte address 0x4 - core index']
  #allocation1 [shape = 'u32[144,128]{1,0:T(1,128)}', space=vmem, size = 0x12000, scoped, tag = 'internal scratch']
  #allocation2 [shape = 'f32[128,128]{1,0:T(8,128)}', space=vmem, size = 0x10000, scoped, tag = 'scratch operand']
  %s0 = inlined_call_operand.vmem [shape: bf16[128,128], index: 0, kind: input, shape index: {}]
  %s1 = inlined_call_operand.vmem [shape: f32[1,128], index: 1, kind: input, shape index: {}]
  %s2 = inlined_call_operand.vmem [shape: f32[1,128], index: 2, kind: input, shape index: {}]
  %s3 = inlined_call_operand.vmem [shape: bf16[128,128], index: 3, kind: input, shape index: {}]
  %s4 = inlined_call_operand.vmem [shape: bf16[128,128], index: 4, kind: output, shape index: {0}]
  %s5 = inlined_call_operand.vmem [shape: f32[8,128], index: 5, kind: output, shape index: {1}]
  %6 = xla_tuple %s4, %s5
  %s7 = sld [smem:[#allocation0]]
  $region42: #{bottleneck_forward.9} parent=0
    _
  %s9 = ssub.s32 1, %s7
  %s10 = scalar_select 0, %s9, %s7
  // Predicated region
  $region2: #{bottleneck_forward.9} parent=0 // pred_check
    _
  $region3: #{bottleneck_forward.9} parent=0 // pred_check_branch
    %12 = sbr.rel (0) target = $region5
  $region4: #{bottleneck_forward.9} parent=0 // pred_region
    _
  $region5: #{bottleneck_forward.9} parent=0 // pred_fallthru
    _
  // Predicated region
  $region6: #{bottleneck_forward.9} parent=0 // pred_check
    _
  $region7: #{bottleneck_forward.9} parent=0 // pred_check_branch
    %14 = sbr.rel (0) target = $region9
  $region8: #{bottleneck_forward.9} parent=0 // pred_region
    _
  $region9: #{bottleneck_forward.9} parent=0 // pred_fallthru
    _
  // Predicated region
  $region10: #{bottleneck_forward.9} parent=0 // pred_check
    _
  $region11: #{bottleneck_forward.9} parent=0 // pred_check_branch
    %16 = sbr.rel (0) target = $region13
  $region12: #{bottleneck_forward.9} parent=0 // pred_region
    _
  $region13: #{bottleneck_forward.9} parent=0 // pred_fallthru
    _
  // Predicated region
  $region14: #{bottleneck_forward.9} parent=0 // pred_check
    _
  $region15: #{bottleneck_forward.9} parent=0 // pred_check_branch
    %18 = sbr.rel (0) target = $region17
  $region16: #{bottleneck_forward.9} parent=0 // pred_region
    _
  $region17: #{bottleneck_forward.9} parent=0 // pred_fallthru
    _
  %p20 = scmp.eq.s32.totalorder 0, 0
  // Predicated region
  $region18: #{bottleneck_forward.9} parent=0 // pred_check
    %p21 = pneg %p20
  $region19: #{bottleneck_forward.9} parent=0 // pred_check_branch
    %23 = sbr.rel (%p21) target = $region21
  $region20: #{bottleneck_forward.9} parent=0 // pred_region
    %24 = vst [vmem:[#allocation2] sm:$0xff] 0.0
    %25 = vst [vmem:[#allocation2 + $0x8] sm:$0xff] 0.0
    %26 = vst [vmem:[#allocation2 + $0x10] sm:$0xff] 0.0
    %27 = vst [vmem:[#allocation2 + $0x18] sm:$0xff] 0.0
    %28 = vst [vmem:[#allocation2 + $0x20] sm:$0xff] 0.0
    %29 = vst [vmem:[#allocation2 + $0x28] sm:$0xff] 0.0
    %30 = vst [vmem:[#allocation2 + $0x30] sm:$0xff] 0.0
    %31 = vst [vmem:[#allocation2 + $0x38] sm:$0xff] 0.0
    %32 = vst [vmem:[#allocation2 + $0x40] sm:$0xff] 0.0
    %33 = vst [vmem:[#allocation2 + $0x48] sm:$0xff] 0.0
    %34 = vst [vmem:[#allocation2 + $0x50] sm:$0xff] 0.0
    %35 = vst [vmem:[#allocation2 + $0x58] sm:$0xff] 0.0
    %36 = vst [vmem:[#allocation2 + $0x60] sm:$0xff] 0.0
    %37 = vst [vmem:[#allocation2 + $0x68] sm:$0xff] 0.0
    %38 = vst [vmem:[#allocation2 + $0x70] sm:$0xff] 0.0
    %39 = vst [vmem:[#allocation2 + $0x78] sm:$0xff] 0.0
  $region21: #{bottleneck_forward.9} parent=0 // pred_fallthru
    _
  %v40 = vld [vmem:[%s0] sm:$0xf]
  %v41 = vld [vmem:[%s0 + $0x4] sm:$0xf]
  %v42 = vld [vmem:[%s0 + $0x8] sm:$0xf]
  %v43 = vld [vmem:[%s0 + $0xc] sm:$0xf]
  %v44 = vld [vmem:[%s0 + $0x10] sm:$0xf]
  %v45 = vld [vmem:[%s0 + $0x14] sm:$0xf]
  %v46 = vld [vmem:[%s0 + $0x18] sm:$0xf]
  %v47 = vld [vmem:[%s0 + $0x1c] sm:$0xf]
  %v48 = vld [vmem:[%s0 + $0x20] sm:$0xf]
  %v49 = vld [vmem:[%s0 + $0x24] sm:$0xf]
  %v50 = vld [vmem:[%s0 + $0x28] sm:$0xf]
  %v51 = vld [vmem:[%s0 + $0x2c] sm:$0xf]
  %v52 = vld [vmem:[%s0 + $0x30] sm:$0xf]
  %v53 = vld [vmem:[%s0 + $0x34] sm:$0xf]
  %v54 = vld [vmem:[%s0 + $0x38] sm:$0xf]
  %v55 = vld [vmem:[%s0 + $0x3c] sm:$0xf]
  %v56 = vunpack.c.l.bf16 %v40
  %v57 = vunpack.c.l.bf16 %v41
  %v58 = vunpack.c.l.bf16 %v42
  %v59 = vunpack.c.l.bf16 %v43
  %v60 = vunpack.c.l.bf16 %v44
  %v61 = vunpack.c.l.bf16 %v45
  %v62 = vunpack.c.l.bf16 %v46
  %v63 = vunpack.c.l.bf16 %v47
  %v64 = vunpack.c.l.bf16 %v48
  %v65 = vunpack.c.l.bf16 %v49
  %v66 = vunpack.c.l.bf16 %v50
  %v67 = vunpack.c.l.bf16 %v51
  %v68 = vunpack.c.l.bf16 %v52
  %v69 = vunpack.c.l.bf16 %v53
  %v70 = vunpack.c.l.bf16 %v54
  %v71 = vunpack.c.l.bf16 %v55
  %v72 = vld [vmem:[%s1] sm:$0x1]
  %v74 = vlaneseq
  %v75 = vshrl.u32 %v74, 7
  %v76 = vsub.s32 0, %v75
  %v77 = vrot.slane %v72, %v76
  %v79 = vmul.f32 %v56, %v77
  %v80 = vmul.f32 %v57, %v77
  %v81 = vmul.f32 %v58, %v77
  %v82 = vmul.f32 %v59, %v77
  %v83 = vmul.f32 %v60, %v77
  %v84 = vmul.f32 %v61, %v77
  %v85 = vmul.f32 %v62, %v77
  %v86 = vmul.f32 %v63, %v77
  %v87 = vmul.f32 %v64, %v77
  %v88 = vmul.f32 %v65, %v77
  %v89 = vmul.f32 %v66, %v77
  %v90 = vmul.f32 %v67, %v77
  %v91 = vmul.f32 %v68, %v77
  %v92 = vmul.f32 %v69, %v77
  %v93 = vmul.f32 %v70, %v77
  %v94 = vmul.f32 %v71, %v77
  %v95 = vld [vmem:[%s2] sm:$0x1]
  %v97 = vlaneseq
  %v98 = vshrl.u32 %v97, 7
  %v99 = vsub.s32 0, %v98
  %v100 = vrot.slane %v95, %v99
  %v102 = vadd.f32 %v79, %v100
  %v103 = vadd.f32 %v80, %v100
  %v104 = vadd.f32 %v81, %v100
  %v105 = vadd.f32 %v82, %v100
  %v106 = vadd.f32 %v83, %v100
  %v107 = vadd.f32 %v84, %v100
  %v108 = vadd.f32 %v85, %v100
  %v109 = vadd.f32 %v86, %v100
  %v110 = vadd.f32 %v87, %v100
  %v111 = vadd.f32 %v88, %v100
  %v112 = vadd.f32 %v89, %v100
  %v113 = vadd.f32 %v90, %v100
  %v114 = vadd.f32 %v91, %v100
  %v115 = vadd.f32 %v92, %v100
  %v116 = vadd.f32 %v93, %v100
  %v117 = vadd.f32 %v94, %v100
  %v118 = vmax.f32 %v102, 0.0
  %v119 = vmax.f32 %v103, 0.0
  %v120 = vmax.f32 %v104, 0.0
  %v121 = vmax.f32 %v105, 0.0
  %v122 = vmax.f32 %v106, 0.0
  %v123 = vmax.f32 %v107, 0.0
  %v124 = vmax.f32 %v108, 0.0
  %v125 = vmax.f32 %v109, 0.0
  %v126 = vmax.f32 %v110, 0.0
  %v127 = vmax.f32 %v111, 0.0
  %v128 = vmax.f32 %v112, 0.0
  %v129 = vmax.f32 %v113, 0.0
  %v130 = vmax.f32 %v114, 0.0
  %v131 = vmax.f32 %v115, 0.0
  %v132 = vmax.f32 %v116, 0.0
  %v133 = vmax.f32 %v117, 0.0
  %v134 = vpack.c.bf16 %v119, %v118
  %v135 = vpack.c.bf16 %v121, %v120
  %v136 = vpack.c.bf16 %v123, %v122
  %v137 = vpack.c.bf16 %v125, %v124
  %v138 = vpack.c.bf16 %v127, %v126
  %v139 = vpack.c.bf16 %v129, %v128
  %v140 = vpack.c.bf16 %v131, %v130
  %v141 = vpack.c.bf16 %v133, %v132
  %v142 = vld [vmem:[#allocation2] sm:$0xff]
  %v143 = vld [vmem:[#allocation2 + $0x8] sm:$0xff]
  %v144 = vld [vmem:[#allocation2 + $0x10] sm:$0xff]
  %v145 = vld [vmem:[#allocation2 + $0x18] sm:$0xff]
  %v146 = vld [vmem:[#allocation2 + $0x20] sm:$0xff]
  %v147 = vld [vmem:[#allocation2 + $0x28] sm:$0xff]
  %v148 = vld [vmem:[#allocation2 + $0x30] sm:$0xff]
  %v149 = vld [vmem:[#allocation2 + $0x38] sm:$0xff]
  %v150 = vld [vmem:[#allocation2 + $0x40] sm:$0xff]
  %v151 = vld [vmem:[#allocation2 + $0x48] sm:$0xff]
  %v152 = vld [vmem:[#allocation2 + $0x50] sm:$0xff]
  %v153 = vld [vmem:[#allocation2 + $0x58] sm:$0xff]
  %v154 = vld [vmem:[#allocation2 + $0x60] sm:$0xff]
  %v155 = vld [vmem:[#allocation2 + $0x68] sm:$0xff]
  %v156 = vld [vmem:[#allocation2 + $0x70] sm:$0xff]
  %v157 = vld [vmem:[#allocation2 + $0x78] sm:$0xff]
  %v158 = vld [vmem:[%s3] sm:$0xf]
  %v159 = vld [vmem:[%s3 + $0x4] sm:$0xf]
  %v160 = vld [vmem:[%s3 + $0x8] sm:$0xf]
  %v161 = vld [vmem:[%s3 + $0xc] sm:$0xf]
  %v162 = vld [vmem:[%s3 + $0x10] sm:$0xf]
  %v163 = vld [vmem:[%s3 + $0x14] sm:$0xf]
  %v164 = vld [vmem:[%s3 + $0x18] sm:$0xf]
  %v165 = vld [vmem:[%s3 + $0x1c] sm:$0xf]
  %v166 = vld [vmem:[%s3 + $0x20] sm:$0xf]
  %v167 = vld [vmem:[%s3 + $0x24] sm:$0xf]
  %v168 = vld [vmem:[%s3 + $0x28] sm:$0xf]
  %v169 = vld [vmem:[%s3 + $0x2c] sm:$0xf]
  %v170 = vld [vmem:[%s3 + $0x30] sm:$0xf]
  %v171 = vld [vmem:[%s3 + $0x34] sm:$0xf]
  %v172 = vld [vmem:[%s3 + $0x38] sm:$0xf]
  %v173 = vld [vmem:[%s3 + $0x3c] sm:$0xf]
  %v190 = vunpack.c.l.b16 %v158
  %v191 = vunpack.c.l.b16 %v159
  %v192 = vunpack.c.l.b16 %v160
  %v193 = vunpack.c.l.b16 %v161
  %v194 = vunpack.c.l.b16 %v162
  %v195 = vunpack.c.l.b16 %v163
  %v196 = vunpack.c.l.b16 %v164
  %v197 = vunpack.c.l.b16 %v165
  %v198 = vunpack.c.l.b16 %v166
  %v199 = vunpack.c.l.b16 %v167
  %v200 = vunpack.c.l.b16 %v168
  %v201 = vunpack.c.l.b16 %v169
  %v202 = vunpack.c.l.b16 %v170
  %v203 = vunpack.c.l.b16 %v171
  %v204 = vunpack.c.l.b16 %v172
  %v205 = vunpack.c.l.b16 %v173
  %v206 = vpack.c.b16 %v191, %v190
  %v207 = vpack.c.b16 %v193, %v192
  %v208 = vpack.c.b16 %v195, %v194
  %v209 = vpack.c.b16 %v197, %v196
  %v210 = vpack.c.b16 %v199, %v198
  %v211 = vpack.c.b16 %v201, %v200
  %v212 = vpack.c.b16 %v203, %v202
  %v213 = vpack.c.b16 %v205, %v204
  %222 = vmatprep.subr.bf16.mxu0 0
  %223 = vmatpush1.bf16.msra.mxu0 %v206
  %224 = vmatprep.subr.bf16.mxu0 0
  %225 = vmatpush1.bf16.msra.mxu0 %v207
  %226 = vmatprep.subr.bf16.mxu0 0
  %227 = vmatpush1.bf16.msra.mxu0 %v208
  %228 = vmatprep.subr.bf16.mxu0 0
  %229 = vmatpush1.bf16.msra.mxu0 %v209
  %230 = vmatprep.subr.bf16.mxu0 0
  %231 = vmatpush1.bf16.msra.mxu0 %v210
  %232 = vmatprep.subr.bf16.mxu0 0
  %233 = vmatpush1.bf16.msra.mxu0 %v211
  %234 = vmatprep.subr.bf16.mxu0 0
  %235 = vmatpush1.bf16.msra.mxu0 %v212
  %236 = vmatprep.subr.bf16.mxu0 0
  %237 = vmatpush1.bf16.msra.mxu0 %v213
  %238 = vmatprep.subr.bf16.mxu0 0
  %239 = vmatpush1.bf16.msra.mxu0 0
  %240 = vmatprep.subr.bf16.mxu0 0
  %241 = vmatpush1.bf16.msra.mxu0 0
  %242 = vmatprep.subr.bf16.mxu0 0
  %243 = vmatpush1.bf16.msra.mxu0 0
  %244 = vmatprep.subr.bf16.mxu0 0
  %245 = vmatpush1.bf16.msra.mxu0 0
  %246 = vmatprep.subr.bf16.mxu0 0
  %247 = vmatpush1.bf16.msra.mxu0 0
  %248 = vmatprep.subr.bf16.mxu0 0
  %249 = vmatpush1.bf16.msra.mxu0 0
  %250 = vmatprep.subr.bf16.mxu0 0
  %251 = vmatpush1.bf16.msra.mxu0 0
  %252 = vmatprep.subr.bf16.mxu0 0
  %253 = vmatpush1.bf16.msra.mxu0 0
  %254 = vmatprep.mubr.bf16.mxu0 0
  %255 = vmatmul.mubr.bf16.gmra.mrb[0].mxu0 %v134
  %v256 = vpop.f32.mrb[0].mxu0
  %v257 = vadd.f32 0.0, %v256
  %v258 = vpop.f32.mrb[0].mxu0
  %v259 = vpop.f32.mrb[0].mxu0
  %v260 = vadd.f32 0.0, %v259
  %v261 = vpop.f32.mrb[0].mxu0
  %262 = vmatprep.mubr.bf16.mxu0 0
  %263 = vmatmul.mubr.bf16.gmra.mrb[0].mxu0 %v135
  %v264 = vpop.f32.mrb[0].mxu0
  %v265 = vadd.f32 0.0, %v264
  %v266 = vpop.f32.mrb[0].mxu0
  %v267 = vpop.f32.mrb[0].mxu0
  %v268 = vadd.f32 0.0, %v267
  %v269 = vpop.f32.mrb[0].mxu0
  %270 = vmatprep.mubr.bf16.mxu0 0
  %271 = vmatmul.mubr.bf16.gmra.mrb[0].mxu0 %v136
  %v272 = vpop.f32.mrb[0].mxu0
  %v273 = vadd.f32 0.0, %v272
  %v274 = vpop.f32.mrb[0].mxu0
  %v275 = vpop.f32.mrb[0].mxu0
  %v276 = vadd.f32 0.0, %v275
  %v277 = vpop.f32.mrb[0].mxu0
  %278 = vmatprep.mubr.bf16.mxu0 0
  %279 = vmatmul.mubr.bf16.gmra.mrb[0].mxu0 %v137
  %v280 = vpop.f32.mrb[0].mxu0
  %v281 = vadd.f32 0.0, %v280
  %v282 = vpop.f32.mrb[0].mxu0
  %v283 = vpop.f32.mrb[0].mxu0
  %v284 = vadd.f32 0.0, %v283
  %v285 = vpop.f32.mrb[0].mxu0
  %286 = vmatprep.mubr.bf16.mxu0 0
  %287 = vmatmul.mubr.bf16.gmra.mrb[0].mxu0 %v138
  %v288 = vpop.f32.mrb[0].mxu0
  %v289 = vadd.f32 0.0, %v288
  %v290 = vpop.f32.mrb[0].mxu0
  %v291 = vpop.f32.mrb[0].mxu0
  %v292 = vadd.f32 0.0, %v291
  %v293 = vpop.f32.mrb[0].mxu0
  %294 = vmatprep.mubr.bf16.mxu0 0
  %295 = vmatmul.mubr.bf16.gmra.mrb[0].mxu0 %v139
  %v296 = vpop.f32.mrb[0].mxu0
  %v297 = vadd.f32 0.0, %v296
  %v298 = vpop.f32.mrb[0].mxu0
  %v299 = vpop.f32.mrb[0].mxu0
  %v300 = vadd.f32 0.0, %v299
  %v301 = vpop.f32.mrb[0].mxu0
  %302 = vmatprep.mubr.bf16.mxu0 0
  %303 = vmatmul.mubr.bf16.gmra.mrb[0].mxu0 %v140
  %v304 = vpop.f32.mrb[0].mxu0
  %v305 = vadd.f32 0.0, %v304
  %v306 = vpop.f32.mrb[0].mxu0
  %v307 = vpop.f32.mrb[0].mxu0
  %v308 = vadd.f32 0.0, %v307
  %v309 = vpop.f32.mrb[0].mxu0
  %310 = vmatprep.mubr.bf16.mxu0 0
  %311 = vmatmul.mubr.bf16.gmra.mrb[0].mxu0 %v141
  %v312 = vpop.f32.mrb[0].mxu0
  %v313 = vadd.f32 0.0, %v312
  %v314 = vpop.f32.mrb[0].mxu0
  %v315 = vpop.f32.mrb[0].mxu0
  %v316 = vadd.f32 0.0, %v315
  %v317 = vpop.f32.mrb[0].mxu0
  %318 = vdwg.mxu0
  %v319 = vadd.f32 %v142, %v257
  %v320 = vadd.f32 %v143, %v260
  %v321 = vadd.f32 %v144, %v265
  %v322 = vadd.f32 %v145, %v268
  %v323 = vadd.f32 %v146, %v273
  %v324 = vadd.f32 %v147, %v276
  %v325 = vadd.f32 %v148, %v281
  %v326 = vadd.f32 %v149, %v284
  %v327 = vadd.f32 %v150, %v289
  %v328 = vadd.f32 %v151, %v292
  %v329 = vadd.f32 %v152, %v297
  %v330 = vadd.f32 %v153, %v300
  %v331 = vadd.f32 %v154, %v305
  %v332 = vadd.f32 %v155, %v308
  %v333 = vadd.f32 %v156, %v313
  %v334 = vadd.f32 %v157, %v316
  %335 = vst [vmem:[#allocation2] sm:$0xff] %v319
  %336 = vst [vmem:[#allocation2 + $0x8] sm:$0xff] %v320
  %337 = vst [vmem:[#allocation2 + $0x10] sm:$0xff] %v321
  %338 = vst [vmem:[#allocation2 + $0x18] sm:$0xff] %v322
  %339 = vst [vmem:[#allocation2 + $0x20] sm:$0xff] %v323
  %340 = vst [vmem:[#allocation2 + $0x28] sm:$0xff] %v324
  %341 = vst [vmem:[#allocation2 + $0x30] sm:$0xff] %v325
  %342 = vst [vmem:[#allocation2 + $0x38] sm:$0xff] %v326
  %343 = vst [vmem:[#allocation2 + $0x40] sm:$0xff] %v327
  %344 = vst [vmem:[#allocation2 + $0x48] sm:$0xff] %v328
  %345 = vst [vmem:[#allocation2 + $0x50] sm:$0xff] %v329
  %346 = vst [vmem:[#allocation2 + $0x58] sm:$0xff] %v330
  %347 = vst [vmem:[#allocation2 + $0x60] sm:$0xff] %v331
  %348 = vst [vmem:[#allocation2 + $0x68] sm:$0xff] %v332
  %349 = vst [vmem:[#allocation2 + $0x70] sm:$0xff] %v333
  %350 = vst [vmem:[#allocation2 + $0x78] sm:$0xff] %v334
  // Predicated region
  $region22: #{bottleneck_forward.9} parent=0 // pred_check
    %p351 = pneg %p20
  $region23: #{bottleneck_forward.9} parent=0 // pred_check_branch
    %353 = sbr.rel (%p351) target = $region25
  $region24: #{bottleneck_forward.9} parent=0 // pred_region
    %v354 = vld [vmem:[#allocation2] sm:$0xff]
    %v355 = vld [vmem:[#allocation2 + $0x8] sm:$0xff]
    %v356 = vld [vmem:[#allocation2 + $0x10] sm:$0xff]
    %v357 = vld [vmem:[#allocation2 + $0x18] sm:$0xff]
    %v358 = vld [vmem:[#allocation2 + $0x20] sm:$0xff]
    %v359 = vld [vmem:[#allocation2 + $0x28] sm:$0xff]
    %v360 = vld [vmem:[#allocation2 + $0x30] sm:$0xff]
    %v361 = vld [vmem:[#allocation2 + $0x38] sm:$0xff]
    %v362 = vld [vmem:[#allocation2 + $0x40] sm:$0xff]
    %v363 = vld [vmem:[#allocation2 + $0x48] sm:$0xff]
    %v364 = vld [vmem:[#allocation2 + $0x50] sm:$0xff]
    %v365 = vld [vmem:[#allocation2 + $0x58] sm:$0xff]
    %v366 = vld [vmem:[#allocation2 + $0x60] sm:$0xff]
    %v367 = vld [vmem:[#allocation2 + $0x68] sm:$0xff]
    %v368 = vld [vmem:[#allocation2 + $0x70] sm:$0xff]
    %v369 = vld [vmem:[#allocation2 + $0x78] sm:$0xff]
    %v370 = vpack.c.bf16 %v355, %v354
    %v371 = vpack.c.bf16 %v357, %v356
    %v372 = vpack.c.bf16 %v359, %v358
    %v373 = vpack.c.bf16 %v361, %v360
    %v374 = vpack.c.bf16 %v363, %v362
    %v375 = vpack.c.bf16 %v365, %v364
    %v376 = vpack.c.bf16 %v367, %v366
    %v377 = vpack.c.bf16 %v369, %v368
    %v386 = vunpack.c.l.b16 %v370
    %v387 = vunpack.c.h.b16 %v370
    %v388 = vunpack.c.l.b16 %v371
    %v389 = vunpack.c.h.b16 %v371
    %v390 = vunpack.c.l.b16 %v372
    %v391 = vunpack.c.h.b16 %v372
    %v392 = vunpack.c.l.b16 %v373
    %v393 = vunpack.c.h.b16 %v373
    %v394 = vunpack.c.l.b16 %v374
    %v395 = vunpack.c.h.b16 %v374
    %v396 = vunpack.c.l.b16 %v375
    %v397 = vunpack.c.h.b16 %v375
    %v398 = vunpack.c.l.b16 %v376
    %v399 = vunpack.c.h.b16 %v376
    %v400 = vunpack.c.l.b16 %v377
    %v401 = vunpack.c.h.b16 %v377
    %v402 = vpack.c.b16 %v386, %v386
    %v403 = vpack.c.b16 %v387, %v387
    %v404 = vpack.c.b16 %v388, %v388
    %v405 = vpack.c.b16 %v389, %v389
    %v406 = vpack.c.b16 %v390, %v390
    %v407 = vpack.c.b16 %v391, %v391
    %v408 = vpack.c.b16 %v392, %v392
    %v409 = vpack.c.b16 %v393, %v393
    %v410 = vpack.c.b16 %v394, %v394
    %v411 = vpack.c.b16 %v395, %v395
    %v412 = vpack.c.b16 %v396, %v396
    %v413 = vpack.c.b16 %v397, %v397
    %v414 = vpack.c.b16 %v398, %v398
    %v415 = vpack.c.b16 %v399, %v399
    %v416 = vpack.c.b16 %v400, %v400
    %v417 = vpack.c.b16 %v401, %v401
    %434 = vst [vmem:[%s4] sm:$0xf] %v402
    %435 = vst [vmem:[%s4 + $0x4] sm:$0xf] %v403
    %436 = vst [vmem:[%s4 + $0x8] sm:$0xf] %v404
    %437 = vst [vmem:[%s4 + $0xc] sm:$0xf] %v405
    %438 = vst [vmem:[%s4 + $0x10] sm:$0xf] %v406
    %439 = vst [vmem:[%s4 + $0x14] sm:$0xf] %v407
    %440 = vst [vmem:[%s4 + $0x18] sm:$0xf] %v408
    %441 = vst [vmem:[%s4 + $0x1c] sm:$0xf] %v409
    %442 = vst [vmem:[%s4 + $0x20] sm:$0xf] %v410
    %443 = vst [vmem:[%s4 + $0x24] sm:$0xf] %v411
    %444 = vst [vmem:[%s4 + $0x28] sm:$0xf] %v412
    %445 = vst [vmem:[%s4 + $0x2c] sm:$0xf] %v413
    %446 = vst [vmem:[%s4 + $0x30] sm:$0xf] %v414
    %447 = vst [vmem:[%s4 + $0x34] sm:$0xf] %v415
    %448 = vst [vmem:[%s4 + $0x38] sm:$0xf] %v416
    %449 = vst [vmem:[%s4 + $0x3c] sm:$0xf] %v417
    %v450 = vadd.f32 %v354, %v355
    %v451 = vadd.f32 %v450, %v356
    %v452 = vadd.f32 %v451, %v357
    %v453 = vadd.f32 %v452, %v358
    %v454 = vadd.f32 %v453, %v359
    %v455 = vadd.f32 %v454, %v360
    %v456 = vadd.f32 %v455, %v361
    %v457 = vadd.f32 %v456, %v362
    %v458 = vadd.f32 %v457, %v363
    %v459 = vadd.f32 %v458, %v364
    %v460 = vadd.f32 %v459, %v365
    %v461 = vadd.f32 %v460, %v366
    %v462 = vadd.f32 %v461, %v367
    %v463 = vadd.f32 %v462, %v368
    %v464 = vadd.f32 %v463, %v369
    %v465 = vrot.slane %v464, 4
    %v466 = vadd.f32 %v464, %v465
    %v467 = vrot.slane %v466, 2
    %v468 = vadd.f32 %v466, %v467
    %v469 = vrot.slane %v468, 1
    %v470 = vadd.f32 %v468, %v469
    %v471 = vmul.f32 %v354, %v354
    %v472 = vmul.f32 %v355, %v355
    %v473 = vmul.f32 %v356, %v356
    %v474 = vmul.f32 %v357, %v357
    %v475 = vmul.f32 %v358, %v358
    %v476 = vmul.f32 %v359, %v359
    %v477 = vmul.f32 %v360, %v360
    %v478 = vmul.f32 %v361, %v361
    %v479 = vmul.f32 %v362, %v362
    %v480 = vmul.f32 %v363, %v363
    %v481 = vmul.f32 %v364, %v364
    %v482 = vmul.f32 %v365, %v365
    %v483 = vmul.f32 %v366, %v366
    %v484 = vmul.f32 %v367, %v367
    %v485 = vmul.f32 %v368, %v368
    %v486 = vmul.f32 %v369, %v369
    %v487 = vadd.f32 %v471, %v472
    %v488 = vadd.f32 %v487, %v473
    %v489 = vadd.f32 %v488, %v474
    %v490 = vadd.f32 %v489, %v475
    %v491 = vadd.f32 %v490, %v476
    %v492 = vadd.f32 %v491, %v477
    %v493 = vadd.f32 %v492, %v478
    %v494 = vadd.f32 %v493, %v479
    %v495 = vadd.f32 %v494, %v480
    %v496 = vadd.f32 %v495, %v481
    %v497 = vadd.f32 %v496, %v482
    %v498 = vadd.f32 %v497, %v483
    %v499 = vadd.f32 %v498, %v484
    %v500 = vadd.f32 %v499, %v485
    %v501 = vadd.f32 %v500, %v486
    %v502 = vrot.slane %v501, 4
    %v503 = vadd.f32 %v501, %v502
    %v504 = vrot.slane %v503, 2
    %v505 = vadd.f32 %v503, %v504
    %v506 = vrot.slane %v505, 1
    %v507 = vadd.f32 %v505, %v506
    %vm508 = vcmask 1040384
    %v509 = vsel %vm508, %v470, %v507
    %vm510 = vcmask 1041408
    %v511 = vsel %vm510, %v509, 0.0
    %512 = vst [vmem:[%s5] sm:$0xff] %v511
  $region25: #{bottleneck_forward.9} parent=0 // pred_fallthru
    _
  // Predicated region
  $region26: #{bottleneck_forward.9} parent=0 // pred_check
    _
  $region27: #{bottleneck_forward.9} parent=0 // pred_check_branch
    %514 = sbr.rel (0) target = $region29
  $region28: #{bottleneck_forward.9} parent=0 // pred_region
    _
  $region29: #{bottleneck_forward.9} parent=0 // pred_fallthru
    _
  // Predicated region
  $region30: #{bottleneck_forward.9} parent=0 // pred_check
    _
  $region31: #{bottleneck_forward.9} parent=0 // pred_check_branch
    %516 = sbr.rel (0) target = $region33
  $region32: #{bottleneck_forward.9} parent=0 // pred_region
    _
  $region33: #{bottleneck_forward.9} parent=0 // pred_fallthru
    _
  // Predicated region
  $region34: #{bottleneck_forward.9} parent=0 // pred_check
    _
  $region35: #{bottleneck_forward.9} parent=0 // pred_check_branch
    %518 = sbr.rel (0) target = $region37
  $region36: #{bottleneck_forward.9} parent=0 // pred_region
    _
  $region37: #{bottleneck_forward.9} parent=0 // pred_fallthru
    _
  // Predicated region
  $region38: #{bottleneck_forward.9} parent=0 // pred_check
    _
  $region39: #{bottleneck_forward.9} parent=0 // pred_check_branch
    %520 = sbr.rel (0) target = $region41
  $region40: #{bottleneck_forward.9} parent=0 // pred_region
    _
  $region41: #{bottleneck_forward.9} parent=0 // pred_fallthru
    _

// kernel: bottleneck_forward.11
$region0: #{bottleneck_forward.11}
  #allocation0 [shape = 'u32[]', space=smem, size = 0x4, offset = 0x4, fixed_abs, tag = 'smem constant byte address 0x4 - core index']
  #allocation1 [shape = 'u32[144,128]{1,0:T(1,128)}', space=vmem, size = 0x12000, scoped, tag = 'internal scratch']
  %s0 = inlined_call_operand.vmem [shape: bf16[128,128], index: 0, kind: input, shape index: {}]
  %s1 = inlined_call_operand.vmem [shape: f32[1,128], index: 1, kind: input, shape index: {}]
  %s2 = inlined_call_operand.vmem [shape: f32[1,128], index: 2, kind: input, shape index: {}]
  %s3 = inlined_call_operand.vmem [shape: bf16[128,128], index: 3, kind: input, shape index: {}]
  %s4 = inlined_call_operand.vmem [shape: f32[1,128], index: 4, kind: input, shape index: {}]
  %s5 = inlined_call_operand.vmem [shape: f32[1,128], index: 5, kind: input, shape index: {}]
  %s6 = inlined_call_operand.hbm [shape: f32[128,128], index: 6, kind: output, shape index: {}]
  %s7 = sld [smem:[#allocation0]]
  $region34: #{bottleneck_forward.11} parent=0
    _
  %s9 = ssub.s32 1, %s7
  %s10 = scalar_select 0, %s9, %s7
  $region1: #{bottleneck_forward.11} parent=0
    #allocation2 [shape = 'u8[65536]{0}', space=vmem, size = 0x10000, scoped, tag = 'output window, operand 0, single buffered']
    #allocation3 [shape = 's32[1]{0}', space=sflag, size = 0x4, scoped, tag = 'scoped memory for bottleneck_forward.11']
    %11 = vsyncpa [#allocation3], 0
    // Predicated region
    $region2: #{bottleneck_forward.11} parent=1 // pred_check
      _
    $region3: #{bottleneck_forward.11} parent=1 // pred_check_branch
      %13 = sbr.rel (0) target = $region5
    $region4: #{bottleneck_forward.11} parent=1 // pred_region
      _
    $region5: #{bottleneck_forward.11} parent=1 // pred_fallthru
      _
    // Predicated region
    $region6: #{bottleneck_forward.11} parent=1 // pred_check
      _
    $region7: #{bottleneck_forward.11} parent=1 // pred_check_branch
      %15 = sbr.rel (0) target = $region9
    $region8: #{bottleneck_forward.11} parent=1 // pred_region
      _
    $region9: #{bottleneck_forward.11} parent=1 // pred_fallthru
      _
    // Predicated region
    $region10: #{bottleneck_forward.11} parent=1 // pred_check
      _
    $region11: #{bottleneck_forward.11} parent=1 // pred_check_branch
      %17 = sbr.rel (0) target = $region13
    $region12: #{bottleneck_forward.11} parent=1 // pred_region
      _
    $region13: #{bottleneck_forward.11} parent=1 // pred_fallthru
      _
    // Predicated region
    $region14: #{bottleneck_forward.11} parent=1 // pred_check
      _
    $region15: #{bottleneck_forward.11} parent=1 // pred_check_branch
      %19 = sbr.rel (0) target = $region17
    $region16: #{bottleneck_forward.11} parent=1 // pred_region
      _
    $region17: #{bottleneck_forward.11} parent=1 // pred_fallthru
      _
    // Predicated region
    $region18: #{bottleneck_forward.11} parent=1 // pred_check
      _
    $region19: #{bottleneck_forward.11} parent=1 // pred_check_branch
      %21 = sbr.rel (0) target = $region21
    $region20: #{bottleneck_forward.11} parent=1 // pred_region
      _
    $region21: #{bottleneck_forward.11} parent=1 // pred_fallthru
      _
    // Predicated region
    $region22: #{bottleneck_forward.11} parent=1 // pred_check
      _
    $region23: #{bottleneck_forward.11} parent=1 // pred_check_branch
      %23 = sbr.rel (0) target = $region25
    $region24: #{bottleneck_forward.11} parent=1 // pred_region
      _
    $region25: #{bottleneck_forward.11} parent=1 // pred_fallthru
      _
    %v24 = vld [vmem:[%s0] sm:$0xf]
    %v25 = vld [vmem:[%s0 + $0x4] sm:$0xf]
    %v26 = vld [vmem:[%s0 + $0x8] sm:$0xf]
    %v27 = vld [vmem:[%s0 + $0xc] sm:$0xf]
    %v28 = vld [vmem:[%s0 + $0x10] sm:$0xf]
    %v29 = vld [vmem:[%s0 + $0x14] sm:$0xf]
    %v30 = vld [vmem:[%s0 + $0x18] sm:$0xf]
    %v31 = vld [vmem:[%s0 + $0x1c] sm:$0xf]
    %v32 = vld [vmem:[%s0 + $0x20] sm:$0xf]
    %v33 = vld [vmem:[%s0 + $0x24] sm:$0xf]
    %v34 = vld [vmem:[%s0 + $0x28] sm:$0xf]
    %v35 = vld [vmem:[%s0 + $0x2c] sm:$0xf]
    %v36 = vld [vmem:[%s0 + $0x30] sm:$0xf]
    %v37 = vld [vmem:[%s0 + $0x34] sm:$0xf]
    %v38 = vld [vmem:[%s0 + $0x38] sm:$0xf]
    %v39 = vld [vmem:[%s0 + $0x3c] sm:$0xf]
    %v40 = vunpack.c.l.bf16 %v24
    %v41 = vunpack.c.l.bf16 %v25
    %v42 = vunpack.c.l.bf16 %v26
    %v43 = vunpack.c.l.bf16 %v27
    %v44 = vunpack.c.l.bf16 %v28
    %v45 = vunpack.c.l.bf16 %v29
    %v46 = vunpack.c.l.bf16 %v30
    %v47 = vunpack.c.l.bf16 %v31
    %v48 = vunpack.c.l.bf16 %v32
    %v49 = vunpack.c.l.bf16 %v33
    %v50 = vunpack.c.l.bf16 %v34
    %v51 = vunpack.c.l.bf16 %v35
    %v52 = vunpack.c.l.bf16 %v36
    %v53 = vunpack.c.l.bf16 %v37
    %v54 = vunpack.c.l.bf16 %v38
    %v55 = vunpack.c.l.bf16 %v39
    %v56 = vld [vmem:[%s1] sm:$0x1]
    %v58 = vlaneseq
    %v59 = vshrl.u32 %v58, 7
    %v60 = vsub.s32 0, %v59
    %v61 = vrot.slane %v56, %v60
    %v63 = vmul.f32 %v40, %v61
    %v64 = vmul.f32 %v41, %v61
    %v65 = vmul.f32 %v42, %v61
    %v66 = vmul.f32 %v43, %v61
    %v67 = vmul.f32 %v44, %v61
    %v68 = vmul.f32 %v45, %v61
    %v69 = vmul.f32 %v46, %v61
    %v70 = vmul.f32 %v47, %v61
    %v71 = vmul.f32 %v48, %v61
    %v72 = vmul.f32 %v49, %v61
    %v73 = vmul.f32 %v50, %v61
    %v74 = vmul.f32 %v51, %v61
    %v75 = vmul.f32 %v52, %v61
    %v76 = vmul.f32 %v53, %v61
    %v77 = vmul.f32 %v54, %v61
    %v78 = vmul.f32 %v55, %v61
    %v79 = vld [vmem:[%s2] sm:$0x1]
    %v81 = vlaneseq
    %v82 = vshrl.u32 %v81, 7
    %v83 = vsub.s32 0, %v82
    %v84 = vrot.slane %v79, %v83
    %v86 = vadd.f32 %v63, %v84
    %v87 = vadd.f32 %v64, %v84
    %v88 = vadd.f32 %v65, %v84
    %v89 = vadd.f32 %v66, %v84
    %v90 = vadd.f32 %v67, %v84
    %v91 = vadd.f32 %v68, %v84
    %v92 = vadd.f32 %v69, %v84
    %v93 = vadd.f32 %v70, %v84
    %v94 = vadd.f32 %v71, %v84
    %v95 = vadd.f32 %v72, %v84
    %v96 = vadd.f32 %v73, %v84
    %v97 = vadd.f32 %v74, %v84
    %v98 = vadd.f32 %v75, %v84
    %v99 = vadd.f32 %v76, %v84
    %v100 = vadd.f32 %v77, %v84
    %v101 = vadd.f32 %v78, %v84
    %v102 = vld [vmem:[%s3] sm:$0xf]
    %v103 = vld [vmem:[%s3 + $0x4] sm:$0xf]
    %v104 = vld [vmem:[%s3 + $0x8] sm:$0xf]
    %v105 = vld [vmem:[%s3 + $0xc] sm:$0xf]
    %v106 = vld [vmem:[%s3 + $0x10] sm:$0xf]
    %v107 = vld [vmem:[%s3 + $0x14] sm:$0xf]
    %v108 = vld [vmem:[%s3 + $0x18] sm:$0xf]
    %v109 = vld [vmem:[%s3 + $0x1c] sm:$0xf]
    %v110 = vld [vmem:[%s3 + $0x20] sm:$0xf]
    %v111 = vld [vmem:[%s3 + $0x24] sm:$0xf]
    %v112 = vld [vmem:[%s3 + $0x28] sm:$0xf]
    %v113 = vld [vmem:[%s3 + $0x2c] sm:$0xf]
    %v114 = vld [vmem:[%s3 + $0x30] sm:$0xf]
    %v115 = vld [vmem:[%s3 + $0x34] sm:$0xf]
    %v116 = vld [vmem:[%s3 + $0x38] sm:$0xf]
    %v117 = vld [vmem:[%s3 + $0x3c] sm:$0xf]
    %v118 = vunpack.c.l.bf16 %v102
    %v119 = vunpack.c.l.bf16 %v103
    %v120 = vunpack.c.l.bf16 %v104
    %v121 = vunpack.c.l.bf16 %v105
    %v122 = vunpack.c.l.bf16 %v106
    %v123 = vunpack.c.l.bf16 %v107
    %v124 = vunpack.c.l.bf16 %v108
    %v125 = vunpack.c.l.bf16 %v109
    %v126 = vunpack.c.l.bf16 %v110
    %v127 = vunpack.c.l.bf16 %v111
    %v128 = vunpack.c.l.bf16 %v112
    %v129 = vunpack.c.l.bf16 %v113
    %v130 = vunpack.c.l.bf16 %v114
    %v131 = vunpack.c.l.bf16 %v115
    %v132 = vunpack.c.l.bf16 %v116
    %v133 = vunpack.c.l.bf16 %v117
    %v134 = vld [vmem:[%s4] sm:$0x1]
    %v136 = vlaneseq
    %v137 = vshrl.u32 %v136, 7
    %v138 = vsub.s32 0, %v137
    %v139 = vrot.slane %v134, %v138
    %v141 = vmul.f32 %v118, %v139
    %v142 = vmul.f32 %v119, %v139
    %v143 = vmul.f32 %v120, %v139
    %v144 = vmul.f32 %v121, %v139
    %v145 = vmul.f32 %v122, %v139
    %v146 = vmul.f32 %v123, %v139
    %v147 = vmul.f32 %v124, %v139
    %v148 = vmul.f32 %v125, %v139
    %v149 = vmul.f32 %v126, %v139
    %v150 = vmul.f32 %v127, %v139
    %v151 = vmul.f32 %v128, %v139
    %v152 = vmul.f32 %v129, %v139
    %v153 = vmul.f32 %v130, %v139
    %v154 = vmul.f32 %v131, %v139
    %v155 = vmul.f32 %v132, %v139
    %v156 = vmul.f32 %v133, %v139
    %v157 = vld [vmem:[%s5] sm:$0x1]
    %v159 = vlaneseq
    %v160 = vshrl.u32 %v159, 7
    %v161 = vsub.s32 0, %v160
    %v162 = vrot.slane %v157, %v161
    %v164 = vadd.f32 %v141, %v162
    %v165 = vadd.f32 %v142, %v162
    %v166 = vadd.f32 %v143, %v162
    %v167 = vadd.f32 %v144, %v162
    %v168 = vadd.f32 %v145, %v162
    %v169 = vadd.f32 %v146, %v162
    %v170 = vadd.f32 %v147, %v162
    %v171 = vadd.f32 %v148, %v162
    %v172 = vadd.f32 %v149, %v162
    %v173 = vadd.f32 %v150, %v162
    %v174 = vadd.f32 %v151, %v162
    %v175 = vadd.f32 %v152, %v162
    %v176 = vadd.f32 %v153, %v162
    %v177 = vadd.f32 %v154, %v162
    %v178 = vadd.f32 %v155, %v162
    %v179 = vadd.f32 %v156, %v162
    %v180 = vadd.f32 %v86, %v164
    %v181 = vadd.f32 %v87, %v165
    %v182 = vadd.f32 %v88, %v166
    %v183 = vadd.f32 %v89, %v167
    %v184 = vadd.f32 %v90, %v168
    %v185 = vadd.f32 %v91, %v169
    %v186 = vadd.f32 %v92, %v170
    %v187 = vadd.f32 %v93, %v171
    %v188 = vadd.f32 %v94, %v172
    %v189 = vadd.f32 %v95, %v173
    %v190 = vadd.f32 %v96, %v174
    %v191 = vadd.f32 %v97, %v175
    %v192 = vadd.f32 %v98, %v176
    %v193 = vadd.f32 %v99, %v177
    %v194 = vadd.f32 %v100, %v178
    %v195 = vadd.f32 %v101, %v179
    %v196 = vmax.f32 %v180, 0.0
    %v197 = vmax.f32 %v181, 0.0
    %v198 = vmax.f32 %v182, 0.0
    %v199 = vmax.f32 %v183, 0.0
    %v200 = vmax.f32 %v184, 0.0
    %v201 = vmax.f32 %v185, 0.0
    %v202 = vmax.f32 %v186, 0.0
    %v203 = vmax.f32 %v187, 0.0
    %v204 = vmax.f32 %v188, 0.0
    %v205 = vmax.f32 %v189, 0.0
    %v206 = vmax.f32 %v190, 0.0
    %v207 = vmax.f32 %v191, 0.0
    %v208 = vmax.f32 %v192, 0.0
    %v209 = vmax.f32 %v193, 0.0
    %v210 = vmax.f32 %v194, 0.0
    %v211 = vmax.f32 %v195, 0.0
    %212 = vst [vmem:[#allocation2] sm:$0xff] %v196
    %213 = vst [vmem:[#allocation2 + $0x8] sm:$0xff] %v197
    %214 = vst [vmem:[#allocation2 + $0x10] sm:$0xff] %v198
    %215 = vst [vmem:[#allocation2 + $0x18] sm:$0xff] %v199
    %216 = vst [vmem:[#allocation2 + $0x20] sm:$0xff] %v200
    %217 = vst [vmem:[#allocation2 + $0x28] sm:$0xff] %v201
    %218 = vst [vmem:[#allocation2 + $0x30] sm:$0xff] %v202
    %219 = vst [vmem:[#allocation2 + $0x38] sm:$0xff] %v203
    %220 = vst [vmem:[#allocation2 + $0x40] sm:$0xff] %v204
    %221 = vst [vmem:[#allocation2 + $0x48] sm:$0xff] %v205
    %222 = vst [vmem:[#allocation2 + $0x50] sm:$0xff] %v206
    %223 = vst [vmem:[#allocation2 + $0x58] sm:$0xff] %v207
    %224 = vst [vmem:[#allocation2 + $0x60] sm:$0xff] %v208
    %225 = vst [vmem:[#allocation2 + $0x68] sm:$0xff] %v209
    %226 = vst [vmem:[#allocation2 + $0x70] sm:$0xff] %v210
    %227 = vst [vmem:[#allocation2 + $0x78] sm:$0xff] %v211
    // Predicated region
    $region26: #{bottleneck_forward.11} parent=1 // pred_check
      _
    $region27: #{bottleneck_forward.11} parent=1 // pred_check_branch
      %229 = sbr.rel (0) target = $region29
    $region28: #{bottleneck_forward.11} parent=1 // pred_region
      %s231 = ssub.s32 2048, 2048
      %232 = vsyncadd [#allocation3], %s231
      %s233 = sshll.u32 [#allocation2], 4
      %s234 = int_to_ptr.vmem [resolvable:$true] %s233
      %239 = dma.vmem_to_hbm [thread:$0]  %s234, 2048, %s6, [#allocation3], 128, 128, 8
    $region29: #{bottleneck_forward.11} parent=1 // pred_fallthru
      _
    // Predicated region
    $region30: #{bottleneck_forward.11} parent=1 // pred_check
      _
    $region31: #{bottleneck_forward.11} parent=1 // pred_check_branch
      %241 = sbr.rel (0) target = $region33
    $region32: #{bottleneck_forward.11} parent=1 // pred_region
      %242 = dma.done [#allocation3], 2048
    $region33: #{bottleneck_forward.11} parent=1 // pred_fallthru
      _
    %243 = vsyncpa [#allocation3], 1

</llo_original>
